<compile_context>
chip_gen: v6e
topology: v6e:2x2x1
jax: 0.10.0
libtpu: 0.0.40
codegen_flags: <defaults>
</compile_context>

<pallas_src>
import numpy as np
import jax
import jax.numpy as jnp
from jax import lax
from jax.experimental import pallas as pl
from jax.experimental.pallas import tpu as pltpu

EPS = 1e-5


# --------------------------- Pallas kernels ---------------------------------

def _pw_conv_bn_relu_kernel(x_ref, w_ref, s_ref, b_ref, o_ref):
    # 1x1 conv == matmul over channels, fused BN (scale/bias) + ReLU.
    y = jnp.dot(x_ref[...], w_ref[...], preferred_element_type=jnp.float32)
    y = y * s_ref[...] + b_ref[...]
    o_ref[...] = jnp.maximum(y, 0.0).astype(o_ref.dtype)


def _pw_conv_bn_add_relu_kernel(x_ref, w_ref, s_ref, b_ref, r_ref, o_ref):
    # 1x1 conv + BN + residual add + ReLU (final stage of the bottleneck).
    y = jnp.dot(x_ref[...], w_ref[...], preferred_element_type=jnp.float32)
    y = y * s_ref[...] + b_ref[...] + r_ref[...].astype(jnp.float32)
    o_ref[...] = jnp.maximum(y, 0.0).astype(o_ref.dtype)


# --------------------------- wrappers ----------------------------------------

def pointwise_conv_bn_relu(x2d, w, scale, bias, residual=None,
                           out_dtype=None, tm=512):
    """1x1 conv (+BN+ReLU, optional residual) on a (M, cin) slab."""
    M, cin = x2d.shape
    cout = w.shape[1]
    out_dtype = out_dtype or x2d.dtype
    tm = min(tm, M)
    if tm < M:
        tm = max(8, (tm // 8) * 8)         # sublane-dim blocks must be /8
    grid = (pl.cdiv(M, tm),)
    # NOTE: when M % tm != 0 the last partial block computes on compiler-padded
    # rows; the garbage lands only in padded output rows, so results are exact.
    in_specs = [
        pl.BlockSpec((tm, cin), lambda i: (i, 0)),
        pl.BlockSpec((cin, cout), lambda i: (0, 0)),   # resident weights
        pl.BlockSpec((1, cout), lambda i: (0, 0)),
        pl.BlockSpec((1, cout), lambda i: (0, 0)),
    ]
    args = [x2d, w, scale, bias]
    kernel = _pw_conv_bn_relu_kernel
    if residual is not None:
        in_specs.append(pl.BlockSpec((tm, cout), lambda i: (i, 0)))
        args.append(residual)
        kernel = _pw_conv_bn_add_relu_kernel
    return pl.pallas_call(
        kernel,
        out_shape=jax.ShapeDtypeStruct((M, cout), out_dtype),
        grid=grid,
        in_specs=in_specs,
        out_specs=pl.BlockSpec((tm, cout), lambda i: (i, 0)),
        compiler_params=pltpu.CompilerParams(dimension_semantics=("parallel",)),
    )(*args)


def conv3x3_bn_relu(xp_flat, w_taps, scale, bias, H, W, out_dtype):
    """3x3 conv (pad=1) + BN + ReLU.

    xp_flat: (N, (H+3)*(W+2), cin) -- each image zero-padded to (H+3, W+2) and
             flattened so every tap is a *contiguous* row-shifted slice.
    Output:  (N, H*(W+2), cout) in the same width-padded row layout; the two
             junk columns per row are dropped by the caller.
    """
    N, L_in, cin = xp_flat.shape
    cout = w_taps.shape[-1]
    row = W + 2
    L_out = H * row

    def kernel(x_ref, w_ref, s_ref, b_ref, o_ref):
        x = x_ref[0]                                   # (L_in, cin)
        acc = None
        # Unrolled 9-tap reduction: keeps the MXU fed and avoids 9 grid steps
        # plus a full-size scratch accumulator.
        for t in range(9):
            ky, kx = divmod(t, 3)
            off = ky * row + kx
            tap = x[off:off + L_out, :]                # contiguous shifted slice
            contrib = jnp.dot(tap, w_ref[t],
                              preferred_element_type=jnp.float32)
            acc = contrib if acc is None else acc + contrib
        y = acc * s_ref[...] + b_ref[...]              # BN/ReLU epilogue in f32
        o_ref[0] = jnp.maximum(y, 0.0).astype(o_ref.dtype)

    return pl.pallas_call(
        kernel,
        out_shape=jax.ShapeDtypeStruct((N, L_out, cout), out_dtype),
        grid=(N,),                                     # parallel -> both TCs on v7x
        in_specs=[
            pl.BlockSpec((1, L_in, cin), lambda n: (n, 0, 0)),
            pl.BlockSpec((9, cin, cout), lambda n: (0, 0, 0)),   # resident taps
            pl.BlockSpec((1, cout), lambda n: (0, 0)),
            pl.BlockSpec((1, cout), lambda n: (0, 0)),
        ],
        out_specs=pl.BlockSpec((1, L_out, cout), lambda n: (n, 0, 0)),
        compiler_params=pltpu.CompilerParams(dimension_semantics=("parallel",)),
    )(xp_flat, w_taps, scale, bias)


def _bn_fold(gamma, beta, mean, var):
    scale = gamma / jnp.sqrt(var + EPS)
    bias = beta - mean * scale
    return scale[None, :], bias[None, :]


def bottleneck_forward(x_nchw, p, compute_dtype=jnp.float32, tm=512):
    """Bottleneck forward (stride=1, downsample=None -> identity shortcut).

    compute_dtype: dtype fed to the MXU (use jnp.bfloat16 on v6e/v7x).
    tm: row tile for the 1x1 convs (512 fits the 32 MiB scoped-VMEM default
        even at the deepest ResNet stage; halve for extra headroom on v7x).
    """
    x = jnp.transpose(x_nchw, (0, 2, 3, 1))            # NCHW -> NHWC
    N, H, W, cin = x.shape
    planes = p["w1"].shape[0]
    if cin != 4 * planes:
        raise ValueError(
            "identity shortcut requires inplanes == planes * 4 "
            f"(got inplanes={cin}, planes={planes})")
    M = N * H * W
    out_dtype = x_nchw.dtype

    # conv1 (1x1) + bn1 + relu
    w1 = jnp.transpose(p["w1"][:, :, 0, 0]).astype(compute_dtype)   # (cin, planes)
    s1, b1 = _bn_fold(p["g1"], p["b1"], p["m1"], p["v1"])
    x2d = x.reshape(M, cin)                                         # residual (f32)
    out1 = pointwise_conv_bn_relu(x2d.astype(compute_dtype), w1, s1, b1,
                                  out_dtype=compute_dtype, tm=tm)

    # conv2 (3x3, pad=1) + bn2 + relu.
    # Pad ONCE (H by (1,2) so every shifted tap slice stays in bounds, W by
    # (1,1)) and flatten the spatial dims; the nine taps are generated inside
    # the kernel as contiguous shifted slices -- no 9x im2col in HBM.
    out1_nhwc = out1.reshape(N, H, W, planes)
    xp = jnp.pad(out1_nhwc, ((0, 0), (1, 2), (1, 1), (0, 0)))
    xp_flat = xp.reshape(N, (H + 3) * (W + 2), planes)
    w2 = jnp.transpose(p["w2"], (2, 3, 1, 0)).reshape(
        9, planes, planes).astype(compute_dtype)                    # (9, cin, cout)
    s2, b2 = _bn_fold(p["g2"], p["b2"], p["m2"], p["v2"])
    out2_wide = conv3x3_bn_relu(xp_flat, w2, s2, b2, H, W, compute_dtype)
    # Drop the two junk columns produced by the width-padded row layout.
    out2 = out2_wide.reshape(N, H, W + 2, planes)[:, :, :W, :].reshape(M, planes)

    # conv3 (1x1) + bn3 + residual add + relu (residual stays f32)
    w3 = jnp.transpose(p["w3"][:, :, 0, 0]).astype(compute_dtype)   # (planes, 4p)
    s3, b3 = _bn_fold(p["g3"], p["b3"], p["m3"], p["v3"])
    out3 = pointwise_conv_bn_relu(out2, w3, s3, b3, residual=x2d,
                                  out_dtype=out_dtype, tm=tm)

    out = out3.reshape(N, H, W, 4 * planes)
    return jnp.transpose(out, (0, 3, 1, 2))            # NHWC -> NCHW


# --------------------------- pure-JAX reference -------------------------------

def ref_bottleneck(x, p):
    def conv(x, w, pad):
        return lax.conv_general_dilated(
            x, w, (1, 1), [(pad, pad), (pad, pad)],
            dimension_numbers=("NCHW", "OIHW", "NCHW"))

    def bn(x, g, b, m, v):
        g, b, m, v = (a[None, :, None, None] for a in (g, b, m, v))
        return (x - m) / jnp.sqrt(v + EPS) * g + b

    out = jax.nn.relu(bn(conv(x, p["w1"], 0), p["g1"], p["b1"], p["m1"], p["v1"]))
    out = jax.nn.relu(bn(conv(out, p["w2"], 1), p["g2"], p["b2"], p["m2"], p["v2"]))
    out = bn(conv(out, p["w3"], 0), p["g3"], p["b3"], p["m3"], p["v3"])
    return jax.nn.relu(out + x)


# --------------------------- main ---------------------------------------------

if __name__ == "__main__":
    # Small deterministic shapes; inplanes == planes * 4 (identity shortcut).
    N, inplanes, planes, H, W = 2, 32, 8, 16, 16
    key = jax.random.PRNGKey(0)
    ks = jax.random.split(key, 8)

    def bn_params(k, c):
        k1, k2, k3, k4 = jax.random.split(k, 4)
        return (1.0 + 0.1 * jax.random.normal(k1, (c,), jnp.float32),
                0.1 * jax.random.normal(k2, (c,), jnp.float32),
                0.1 * jax.random.normal(k3, (c,), jnp.float32),
                0.5 + 0.5 * jax.random.uniform(k4, (c,), jnp.float32))

    p = {}
    p["w1"] = 0.2 * jax.random.normal(ks[0], (planes, inplanes, 1, 1), jnp.float32)
    p["w2"] = 0.2 * jax.random.normal(ks[1], (planes, planes, 3, 3), jnp.float32)
    p["w3"] = 0.2 * jax.random.normal(ks[2], (4 * planes, planes, 1, 1), jnp.float32)
    p["g1"], p["b1"], p["m1"], p["v1"] = bn_params(ks[3], planes)
    p["g2"], p["b2"], p["m2"], p["v2"] = bn_params(ks[4], planes)
    p["g3"], p["b3"], p["m3"], p["v3"] = bn_params(ks[5], 4 * planes)

    x = jax.random.normal(ks[6], (N, inplanes, H, W), jnp.float32)

    fwd = jax.jit(bottleneck_forward, static_argnames=("compute_dtype", "tm"))
    ref = ref_bottleneck(x, p)

    # f32 path, tm=256 so the 1x1 grids actually iterate; strict check.
    out = jax.block_until_ready(fwd(x, p, compute_dtype=jnp.float32, tm=256))
    np.testing.assert_allclose(np.asarray(out), np.asarray(ref),
                               atol=1e-4, rtol=1e-4)

    # bf16 MXU path (production setting on v6e/v7x); loose numerical check.
    out_bf16 = jax.block_until_ready(fwd(x, p, compute_dtype=jnp.bfloat16))
    np.testing.assert_allclose(np.asarray(out_bf16), np.asarray(ref),
                               atol=0.25, rtol=0.25)

    print("KERNEL_OK")
</pallas_src>

<mosaic_0001>
module attributes {stable_mosaic.version = 11 : i64} {
  func.func @_pw_conv_bn_relu_kernel(%arg0: i32, %arg1: memref<256x32xf32, #tpu.memory_space<vmem>>, %arg2: memref<32x8xf32, #tpu.memory_space<vmem>>, %arg3: memref<1x8xf32, #tpu.memory_space<vmem>>, %arg4: memref<1x8xf32, #tpu.memory_space<vmem>>, %arg5: memref<256x8xf32, #tpu.memory_space<vmem>>) attributes {dimension_semantics = [#tpu.dimension_semantics<parallel>], iteration_bounds = array<i64: 2>, scalar_prefetch = 0 : i64, scratch_operands = 0 : i64, tpu.core_type = #tpu.core_type<tc>, window_params = [{transform_indices = @transform_0, window_bounds = array<i64: 256, 32>}, {pipeline_mode = #tpu.pipeline_mode<synchronous>, transform_indices = @transform_1, window_bounds = array<i64: 32, 8>}, {pipeline_mode = #tpu.pipeline_mode<synchronous>, transform_indices = @transform_2, window_bounds = array<i64: 1, 8>}, {pipeline_mode = #tpu.pipeline_mode<synchronous>, transform_indices = @transform_3, window_bounds = array<i64: 1, 8>}, {transform_indices = @transform_4, window_bounds = array<i64: 256, 8>}]} {
    %c0 = arith.constant 0 : index
    %c0_0 = arith.constant 0 : index
    %0 = vector.load %arg1[%c0, %c0_0] : memref<256x32xf32, #tpu.memory_space<vmem>>, vector<256x32xf32>
    %c0_1 = arith.constant 0 : index
    %c0_2 = arith.constant 0 : index
    %1 = vector.load %arg2[%c0_1, %c0_2] : memref<32x8xf32, #tpu.memory_space<vmem>>, vector<32x8xf32>
    %cst = arith.constant dense<0.000000e+00> : vector<256x8xf32>
    %2 = tpu.matmul %0, %1, %cst {dimension_numbers = #tpu.dot_dimension_numbers<[1], [0], [0], [1], [0, 0, 1, 1], [], []>} : vector<256x32xf32>, vector<32x8xf32>, vector<256x8xf32> -> vector<256x8xf32>
    %c0_3 = arith.constant 0 : index
    %c0_4 = arith.constant 0 : index
    %3 = vector.load %arg3[%c0_3, %c0_4] : memref<1x8xf32, #tpu.memory_space<vmem>>, vector<1x8xf32>
    %4 = vector.broadcast %3 : vector<1x8xf32> to vector<256x8xf32>
    %5 = arith.mulf %2, %4 : vector<256x8xf32>
    %c0_5 = arith.constant 0 : index
    %c0_6 = arith.constant 0 : index
    %6 = vector.load %arg4[%c0_5, %c0_6] : memref<1x8xf32, #tpu.memory_space<vmem>>, vector<1x8xf32>
    %7 = vector.broadcast %6 : vector<1x8xf32> to vector<256x8xf32>
    %8 = arith.addf %5, %7 : vector<256x8xf32>
    %cst_7 = arith.constant 0.000000e+00 : f32
    %9 = vector.broadcast %cst_7 : f32 to vector<256x8xf32>
    %10 = arith.maximumf %8, %9 : vector<256x8xf32>
    %c0_8 = arith.constant 0 : index
    %c0_9 = arith.constant 0 : index
    %11 = vector.load %arg5[%c0_8, %c0_9] : memref<256x8xf32, #tpu.memory_space<vmem>>, vector<256x8xf32>
    tpu.vector_store %arg5[%c0_8, %c0_9], %10 {strides = array<i32>} : memref<256x8xf32, #tpu.memory_space<vmem>>, vector<256x8xf32>,
    return
  }
  func.func @transform_0(%arg0: i32) -> (i32, i32) {
    %c0_i32 = arith.constant 0 : i32
    %c0_i32_0 = arith.constant 0 : i32
    return %arg0, %c0_i32 : i32, i32
  }
  func.func @transform_1(%arg0: i32) -> (i32, i32) {
    %c0_i32 = arith.constant 0 : i32
    %c0_i32_0 = arith.constant 0 : i32
    %c0_i32_1 = arith.constant 0 : i32
    return %c0_i32, %c0_i32_0 : i32, i32
  }
  func.func @transform_2(%arg0: i32) -> (i32, i32) {
    %c0_i32 = arith.constant 0 : i32
    %c0_i32_0 = arith.constant 0 : i32
    %c0_i32_1 = arith.constant 0 : i32
    return %c0_i32, %c0_i32_0 : i32, i32
  }
  func.func @transform_3(%arg0: i32) -> (i32, i32) {
    %c0_i32 = arith.constant 0 : i32
    %c0_i32_0 = arith.constant 0 : i32
    %c0_i32_1 = arith.constant 0 : i32
    return %c0_i32, %c0_i32_0 : i32, i32
  }
  func.func @transform_4(%arg0: i32) -> (i32, i32) {
    %c0_i32 = arith.constant 0 : i32
    %c0_i32_0 = arith.constant 0 : i32
    return %arg0, %c0_i32 : i32, i32
  }
}

module attributes {stable_mosaic.version = 11 : i64} {
  func.func @kernel(%arg0: i32, %arg1: memref<1x342x8xf32, #tpu.memory_space<vmem>>, %arg2: memref<9x8x8xf32, #tpu.memory_space<vmem>>, %arg3: memref<1x8xf32, #tpu.memory_space<vmem>>, %arg4: memref<1x8xf32, #tpu.memory_space<vmem>>, %arg5: memref<1x288x8xf32, #tpu.memory_space<vmem>>) attributes {dimension_semantics = [#tpu.dimension_semantics<parallel>], iteration_bounds = array<i64: 2>, scalar_prefetch = 0 : i64, scratch_operands = 0 : i64, tpu.core_type = #tpu.core_type<tc>, window_params = [{transform_indices = @transform_0, window_bounds = array<i64: 1, 342, 8>}, {pipeline_mode = #tpu.pipeline_mode<synchronous>, transform_indices = @transform_1, window_bounds = array<i64: 9, 8, 8>}, {pipeline_mode = #tpu.pipeline_mode<synchronous>, transform_indices = @transform_2, window_bounds = array<i64: 1, 8>}, {pipeline_mode = #tpu.pipeline_mode<synchronous>, transform_indices = @transform_3, window_bounds = array<i64: 1, 8>}, {transform_indices = @transform_4, window_bounds = array<i64: 1, 288, 8>}]} {
    %c0 = arith.constant 0 : index
    %c0_0 = arith.constant 0 : index
    %c0_1 = arith.constant 0 : index
    %0 = vector.load %arg1[%c0, %c0_0, %c0_1] : memref<1x342x8xf32, #tpu.memory_space<vmem>>, vector<1x342x8xf32>
    %1 = vector.shape_cast %0 : vector<1x342x8xf32> to vector<342x8xf32>
    %2 = vector.extract_strided_slice %1 {offsets = [0, 0], sizes = [288, 8], strides = [1, 1]} : vector<342x8xf32> to vector<288x8xf32>
    %c0_2 = arith.constant 0 : index
    %c0_3 = arith.constant 0 : index
    %c0_4 = arith.constant 0 : index
    %3 = vector.load %arg2[%c0_2, %c0_3, %c0_4] : memref<9x8x8xf32, #tpu.memory_space<vmem>>, vector<1x8x8xf32>
    %4 = vector.shape_cast %3 : vector<1x8x8xf32> to vector<8x8xf32>
    %cst = arith.constant dense<0.000000e+00> : vector<288x8xf32>
    %5 = tpu.matmul %2, %4, %cst {dimension_numbers = #tpu.dot_dimension_numbers<[1], [0], [0], [1], [0, 0, 1, 1], [], []>} : vector<288x8xf32>, vector<8x8xf32>, vector<288x8xf32> -> vector<288x8xf32>
    %6 = vector.extract_strided_slice %1 {offsets = [1, 0], sizes = [288, 8], strides = [1, 1]} : vector<342x8xf32> to vector<288x8xf32>
    %c1 = arith.constant 1 : index
    %c0_5 = arith.constant 0 : index
    %c0_6 = arith.constant 0 : index
    %7 = vector.load %arg2[%c1, %c0_5, %c0_6] : memref<9x8x8xf32, #tpu.memory_space<vmem>>, vector<1x8x8xf32>
    %8 = vector.shape_cast %7 : vector<1x8x8xf32> to vector<8x8xf32>
    %cst_7 = arith.constant dense<0.000000e+00> : vector<288x8xf32>
    %9 = tpu.matmul %6, %8, %cst_7 {dimension_numbers = #tpu.dot_dimension_numbers<[1], [0], [0], [1], [0, 0, 1, 1], [], []>} : vector<288x8xf32>, vector<8x8xf32>, vector<288x8xf32> -> vector<288x8xf32>
    %10 = arith.addf %5, %9 : vector<288x8xf32>
    %11 = vector.extract_strided_slice %1 {offsets = [2, 0], sizes = [288, 8], strides = [1, 1]} : vector<342x8xf32> to vector<288x8xf32>
    %c2 = arith.constant 2 : index
    %c0_8 = arith.constant 0 : index
    %c0_9 = arith.constant 0 : index
    %12 = vector.load %arg2[%c2, %c0_8, %c0_9] : memref<9x8x8xf32, #tpu.memory_space<vmem>>, vector<1x8x8xf32>
    %13 = vector.shape_cast %12 : vector<1x8x8xf32> to vector<8x8xf32>
    %cst_10 = arith.constant dense<0.000000e+00> : vector<288x8xf32>
    %14 = tpu.matmul %11, %13, %cst_10 {dimension_numbers = #tpu.dot_dimension_numbers<[1], [0], [0], [1], [0, 0, 1, 1], [], []>} : vector<288x8xf32>, vector<8x8xf32>, vector<288x8xf32> -> vector<288x8xf32>
    %15 = arith.addf %10, %14 : vector<288x8xf32>
    %16 = vector.extract_strided_slice %1 {offsets = [18, 0], sizes = [288, 8], strides = [1, 1]} : vector<342x8xf32> to vector<288x8xf32>
    %c3 = arith.constant 3 : index
    %c0_11 = arith.constant 0 : index
    %c0_12 = arith.constant 0 : index
    %17 = vector.load %arg2[%c3, %c0_11, %c0_12] : memref<9x8x8xf32, #tpu.memory_space<vmem>>, vector<1x8x8xf32>
    %18 = vector.shape_cast %17 : vector<1x8x8xf32> to vector<8x8xf32>
    %cst_13 = arith.constant dense<0.000000e+00> : vector<288x8xf32>
    %19 = tpu.matmul %16, %18, %cst_13 {dimension_numbers = #tpu.dot_dimension_numbers<[1], [0], [0], [1], [0, 0, 1, 1], [], []>} : vector<288x8xf32>, vector<8x8xf32>, vector<288x8xf32> -> vector<288x8xf32>
    %20 = arith.addf %15, %19 : vector<288x8xf32>
    %21 = vector.extract_strided_slice %1 {offsets = [19, 0], sizes = [288, 8], strides = [1, 1]} : vector<342x8xf32> to vector<288x8xf32>
    %c4 = arith.constant 4 : index
    %c0_14 = arith.constant 0 : index
    %c0_15 = arith.constant 0 : index
    %22 = vector.load %arg2[%c4, %c0_14, %c0_15] : memref<9x8x8xf32, #tpu.memory_space<vmem>>, vector<1x8x8xf32>
    %23 = vector.shape_cast %22 : vector<1x8x8xf32> to vector<8x8xf32>
    %cst_16 = arith.constant dense<0.000000e+00> : vector<288x8xf32>
    %24 = tpu.matmul %21, %23, %cst_16 {dimension_numbers = #tpu.dot_dimension_numbers<[1], [0], [0], [1], [0, 0, 1, 1], [], []>} : vector<288x8xf32>, vector<8x8xf32>, vector<288x8xf32> -> vector<288x8xf32>
    %25 = arith.addf %20, %24 : vector<288x8xf32>
    %26 = vector.extract_strided_slice %1 {offsets = [20, 0], sizes = [288, 8], strides = [1, 1]} : vector<342x8xf32> to vector<288x8xf32>
    %c5 = arith.constant 5 : index
    %c0_17 = arith.constant 0 : index
    %c0_18 = arith.constant 0 : index
    %27 = vector.load %arg2[%c5, %c0_17, %c0_18] : memref<9x8x8xf32, #tpu.memory_space<vmem>>, vector<1x8x8xf32>
    %28 = vector.shape_cast %27 : vector<1x8x8xf32> to vector<8x8xf32>
    %cst_19 = arith.constant dense<0.000000e+00> : vector<288x8xf32>
    %29 = tpu.matmul %26, %28, %cst_19 {dimension_numbers = #tpu.dot_dimension_numbers<[1], [0], [0], [1], [0, 0, 1, 1], [], []>} : vector<288x8xf32>, vector<8x8xf32>, vector<288x8xf32> -> vector<288x8xf32>
    %30 = arith.addf %25, %29 : vector<288x8xf32>
    %31 = vector.extract_strided_slice %1 {offsets = [36, 0], sizes = [288, 8], strides = [1, 1]} : vector<342x8xf32> to vector<288x8xf32>
    %c6 = arith.constant 6 : index
    %c0_20 = arith.constant 0 : index
    %c0_21 = arith.constant 0 : index
    %32 = vector.load %arg2[%c6, %c0_20, %c0_21] : memref<9x8x8xf32, #tpu.memory_space<vmem>>, vector<1x8x8xf32>
    %33 = vector.shape_cast %32 : vector<1x8x8xf32> to vector<8x8xf32>
    %cst_22 = arith.constant dense<0.000000e+00> : vector<288x8xf32>
    %34 = tpu.matmul %31, %33, %cst_22 {dimension_numbers = #tpu.dot_dimension_numbers<[1], [0], [0], [1], [0, 0, 1, 1], [], []>} : vector<288x8xf32>, vector<8x8xf32>, vector<288x8xf32> -> vector<288x8xf32>
    %35 = arith.addf %30, %34 : vector<288x8xf32>
    %36 = vector.extract_strided_slice %1 {offsets = [37, 0], sizes = [288, 8], strides = [1, 1]} : vector<342x8xf32> to vector<288x8xf32>
    %c7 = arith.constant 7 : index
    %c0_23 = arith.constant 0 : index
    %c0_24 = arith.constant 0 : index
    %37 = vector.load %arg2[%c7, %c0_23, %c0_24] : memref<9x8x8xf32, #tpu.memory_space<vmem>>, vector<1x8x8xf32>
    %38 = vector.shape_cast %37 : vector<1x8x8xf32> to vector<8x8xf32>
    %cst_25 = arith.constant dense<0.000000e+00> : vector<288x8xf32>
    %39 = tpu.matmul %36, %38, %cst_25 {dimension_numbers = #tpu.dot_dimension_numbers<[1], [0], [0], [1], [0, 0, 1, 1], [], []>} : vector<288x8xf32>, vector<8x8xf32>, vector<288x8xf32> -> vector<288x8xf32>
    %40 = arith.addf %35, %39 : vector<288x8xf32>
    %41 = vector.extract_strided_slice %1 {offsets = [38, 0], sizes = [288, 8], strides = [1, 1]} : vector<342x8xf32> to vector<288x8xf32>
    %c8 = arith.constant 8 : index
    %c0_26 = arith.constant 0 : index
    %c0_27 = arith.constant 0 : index
    %42 = vector.load %arg2[%c8, %c0_26, %c0_27] : memref<9x8x8xf32, #tpu.memory_space<vmem>>, vector<1x8x8xf32>
    %43 = vector.shape_cast %42 : vector<1x8x8xf32> to vector<8x8xf32>
    %cst_28 = arith.constant dense<0.000000e+00> : vector<288x8xf32>
    %44 = tpu.matmul %41, %43, %cst_28 {dimension_numbers = #tpu.dot_dimension_numbers<[1], [0], [0], [1], [0, 0, 1, 1], [], []>} : vector<288x8xf32>, vector<8x8xf32>, vector<288x8xf32> -> vector<288x8xf32>
    %45 = arith.addf %40, %44 : vector<288x8xf32>
    %c0_29 = arith.constant 0 : index
    %c0_30 = arith.constant 0 : index
    %46 = vector.load %arg3[%c0_29, %c0_30] : memref<1x8xf32, #tpu.memory_space<vmem>>, vector<1x8xf32>
    %47 = vector.broadcast %46 : vector<1x8xf32> to vector<288x8xf32>
    %48 = arith.mulf %45, %47 : vector<288x8xf32>
    %c0_31 = arith.constant 0 : index
    %c0_32 = arith.constant 0 : index
    %49 = vector.load %arg4[%c0_31, %c0_32] : memref<1x8xf32, #tpu.memory_space<vmem>>, vector<1x8xf32>
    %50 = vector.broadcast %49 : vector<1x8xf32> to vector<288x8xf32>
    %51 = arith.addf %48, %50 : vector<288x8xf32>
    %cst_33 = arith.constant 0.000000e+00 : f32
    %52 = vector.broadcast %cst_33 : f32 to vector<288x8xf32>
    %53 = arith.maximumf %51, %52 : vector<288x8xf32>
    %c0_34 = arith.constant 0 : index
    %c0_35 = arith.constant 0 : index
    %c0_36 = arith.constant 0 : index
    %54 = vector.load %arg5[%c0_34, %c0_35, %c0_36] : memref<1x288x8xf32, #tpu.memory_space<vmem>>, vector<1x288x8xf32>
    %55 = vector.shape_cast %54 : vector<1x288x8xf32> to vector<288x8xf32>
    %56 = vector.shape_cast %53 : vector<288x8xf32> to vector<1x288x8xf32>
    tpu.vector_store %arg5[%c0_34, %c0_35, %c0_36], %56 {strides = array<i32>} : memref<1x288x8xf32, #tpu.memory_space<vmem>>, vector<1x288x8xf32>,
    return
  }
  func.func @transform_0(%arg0: i32) -> (i32, i32, i32) {
    %c0_i32 = arith.constant 0 : i32
    %c0_i32_0 = arith.constant 0 : i32
    %c0_i32_1 = arith.constant 0 : i32
    return %arg0, %c0_i32, %c0_i32_0 : i32, i32, i32
  }
  func.func @transform_1(%arg0: i32) -> (i32, i32, i32) {
    %c0_i32 = arith.constant 0 : i32
    %c0_i32_0 = arith.constant 0 : i32
    %c0_i32_1 = arith.constant 0 : i32
    %c0_i32_2 = arith.constant 0 : i32
    return %c0_i32, %c0_i32_0, %c0_i32_1 : i32, i32, i32
  }
  func.func @transform_2(%arg0: i32) -> (i32, i32) {
    %c0_i32 = arith.constant 0 : i32
    %c0_i32_0 = arith.constant 0 : i32
    %c0_i32_1 = arith.constant 0 : i32
    return %c0_i32, %c0_i32_0 : i32, i32
  }
  func.func @transform_3(%arg0: i32) -> (i32, i32) {
    %c0_i32 = arith.constant 0 : i32
    %c0_i32_0 = arith.constant 0 : i32
    %c0_i32_1 = arith.constant 0 : i32
    return %c0_i32, %c0_i32_0 : i32, i32
  }
  func.func @transform_4(%arg0: i32) -> (i32, i32, i32) {
    %c0_i32 = arith.constant 0 : i32
    %c0_i32_0 = arith.constant 0 : i32
    %c0_i32_1 = arith.constant 0 : i32
    return %arg0, %c0_i32, %c0_i32_0 : i32, i32, i32
  }
}

module attributes {stable_mosaic.version = 11 : i64} {
  func.func @_pw_conv_bn_add_relu_kernel(%arg0: i32, %arg1: memref<256x8xf32, #tpu.memory_space<vmem>>, %arg2: memref<8x32xf32, #tpu.memory_space<vmem>>, %arg3: memref<1x32xf32, #tpu.memory_space<vmem>>, %arg4: memref<1x32xf32, #tpu.memory_space<vmem>>, %arg5: memref<256x32xf32, #tpu.memory_space<vmem>>, %arg6: memref<256x32xf32, #tpu.memory_space<vmem>>) attributes {dimension_semantics = [#tpu.dimension_semantics<parallel>], iteration_bounds = array<i64: 2>, scalar_prefetch = 0 : i64, scratch_operands = 0 : i64, tpu.core_type = #tpu.core_type<tc>, window_params = [{transform_indices = @transform_0, window_bounds = array<i64: 256, 8>}, {pipeline_mode = #tpu.pipeline_mode<synchronous>, transform_indices = @transform_1, window_bounds = array<i64: 8, 32>}, {pipeline_mode = #tpu.pipeline_mode<synchronous>, transform_indices = @transform_2, window_bounds = array<i64: 1, 32>}, {pipeline_mode = #tpu.pipeline_mode<synchronous>, transform_indices = @transform_3, window_bounds = array<i64: 1, 32>}, {transform_indices = @transform_4, window_bounds = array<i64: 256, 32>}, {transform_indices = @transform_5, window_bounds = array<i64: 256, 32>}]} {
    %c0 = arith.constant 0 : index
    %c0_0 = arith.constant 0 : index
    %0 = vector.load %arg1[%c0, %c0_0] : memref<256x8xf32, #tpu.memory_space<vmem>>, vector<256x8xf32>
    %c0_1 = arith.constant 0 : index
    %c0_2 = arith.constant 0 : index
    %1 = vector.load %arg2[%c0_1, %c0_2] : memref<8x32xf32, #tpu.memory_space<vmem>>, vector<8x32xf32>
    %cst = arith.constant dense<0.000000e+00> : vector<256x32xf32>
    %2 = tpu.matmul %0, %1, %cst {dimension_numbers = #tpu.dot_dimension_numbers<[1], [0], [0], [1], [0, 0, 1, 1], [], []>} : vector<256x8xf32>, vector<8x32xf32>, vector<256x32xf32> -> vector<256x32xf32>
    %c0_3 = arith.constant 0 : index
    %c0_4 = arith.constant 0 : index
    %3 = vector.load %arg3[%c0_3, %c0_4] : memref<1x32xf32, #tpu.memory_space<vmem>>, vector<1x32xf32>
    %4 = vector.broadcast %3 : vector<1x32xf32> to vector<256x32xf32>
    %5 = arith.mulf %2, %4 : vector<256x32xf32>
    %c0_5 = arith.constant 0 : index
    %c0_6 = arith.constant 0 : index
    %6 = vector.load %arg4[%c0_5, %c0_6] : memref<1x32xf32, #tpu.memory_space<vmem>>, vector<1x32xf32>
    %7 = vector.broadcast %6 : vector<1x32xf32> to vector<256x32xf32>
    %8 = arith.addf %5, %7 : vector<256x32xf32>
    %c0_7 = arith.constant 0 : index
    %c0_8 = arith.constant 0 : index
    %9 = vector.load %arg5[%c0_7, %c0_8] : memref<256x32xf32, #tpu.memory_space<vmem>>, vector<256x32xf32>
    %10 = arith.addf %8, %9 : vector<256x32xf32>
    %cst_9 = arith.constant 0.000000e+00 : f32
    %11 = vector.broadcast %cst_9 : f32 to vector<256x32xf32>
    %12 = arith.maximumf %10, %11 : vector<256x32xf32>
    %c0_10 = arith.constant 0 : index
    %c0_11 = arith.constant 0 : index
    %13 = vector.load %arg6[%c0_10, %c0_11] : memref<256x32xf32, #tpu.memory_space<vmem>>, vector<256x32xf32>
    tpu.vector_store %arg6[%c0_10, %c0_11], %12 {strides = array<i32>} : memref<256x32xf32, #tpu.memory_space<vmem>>, vector<256x32xf32>,
    return
  }
  func.func @transform_0(%arg0: i32) -> (i32, i32) {
    %c0_i32 = arith.constant 0 : i32
    %c0_i32_0 = arith.constant 0 : i32
    return %arg0, %c0_i32 : i32, i32
  }
  func.func @transform_1(%arg0: i32) -> (i32, i32) {
    %c0_i32 = arith.constant 0 : i32
    %c0_i32_0 = arith.constant 0 : i32
    %c0_i32_1 = arith.constant 0 : i32
    return %c0_i32, %c0_i32_0 : i32, i32
  }
  func.func @transform_2(%arg0: i32) -> (i32, i32) {
    %c0_i32 = arith.constant 0 : i32
    %c0_i32_0 = arith.constant 0 : i32
    %c0_i32_1 = arith.constant 0 : i32
    return %c0_i32, %c0_i32_0 : i32, i32
  }
  func.func @transform_3(%arg0: i32) -> (i32, i32) {
    %c0_i32 = arith.constant 0 : i32
    %c0_i32_0 = arith.constant 0 : i32
    %c0_i32_1 = arith.constant 0 : i32
    return %c0_i32, %c0_i32_0 : i32, i32
  }
  func.func @transform_4(%arg0: i32) -> (i32, i32) {
    %c0_i32 = arith.constant 0 : i32
    %c0_i32_0 = arith.constant 0 : i32
    return %arg0, %c0_i32 : i32, i32
  }
  func.func @transform_5(%arg0: i32) -> (i32, i32) {
    %c0_i32 = arith.constant 0 : i32
    %c0_i32_0 = arith.constant 0 : i32
    return %arg0, %c0_i32 : i32, i32
  }
}

</mosaic_0001>

<llo_original>
// kernel: bottleneck_forward.3
$region0: #{bottleneck_forward.3}
  #allocation0 [shape = 'u32[]', space=smem, size = 0x4, offset = 0x4, fixed_abs, tag = 'smem constant byte address 0x4 - core index']
  #allocation1 [shape = 'u32[144,128]{1,0:T(1,128)}', space=vmem, size = 0x12000, scoped, tag = 'internal scratch']
  %s0 = inlined_call_operand.hbm [shape: f32[512,32], index: 0, kind: input, shape index: {}]
  %s1 = inlined_call_operand.vmem [shape: f32[32,8], index: 1, kind: input, shape index: {}]
  %s2 = inlined_call_operand.vmem [shape: f32[1,8], index: 2, kind: input, shape index: {}]
  %s3 = inlined_call_operand.vmem [shape: f32[1,8], index: 3, kind: input, shape index: {}]
  %s4 = inlined_call_operand.vmem [shape: f32[512,8], index: 4, kind: output, shape index: {}]
  %s5 = sld [smem:[#allocation0]]
  $region53: #{bottleneck_forward.3} parent=0
    _
  %s7 = ssub.s32 1, %s5
  %s8 = scalar_select 0, %s7, %s5
  $region1: #{bottleneck_forward.3} parent=0
    #allocation2 [shape = 'u8[262144]{0}', space=vmem, size = 0x40000, scoped, tag = 'input window, operand 0']
    #allocation3 [shape = 's32[2]{0}', space=sflag, size = 0x8, scoped, tag = 'scoped memory for bottleneck_forward.3']
    %9 = vsyncpa [#allocation3], 0
    %s10 = scalar_lea.sflag [#allocation3], 1
    %11 = vsyncpa %s10, 0
    loop: start=0, step=1, limit=4
    $region2: #{bottleneck_forward.3} parent=1 // loop_pre_header
      _
    $region3: #{bottleneck_forward.3} parent=1 // loop_header
      %s13 = sphi 0, %s17
      %p14 = scmp.ge.s32.totalorder %s13, 4
      %s23 = sphi 0, %s25
      %s26 = sphi 0, %s23
      %s27 = sphi 0, %s26
      %s43 = sphi 0, %s27
      %s47 = sphi 0, %s47
      %s49 = sphi 0, %s47
      %s50 = sphi 0, %s49
      %s64 = sphi 0, %s50
      %s68 = sphi 0, %s68
      %s70 = sphi 0, %s68
      %s71 = sphi 0, %s70
      %s85 = sphi 0, %s71
      %s89 = sphi 0, %s89
      %s91 = sphi 0, %s89
      %s92 = sphi 0, %s91
      %s106 = sphi 0, %s92
      %s112 = sphi 0, %s114
      %s115 = sphi 0, %s112
      %s116 = sphi 0, %s115
      %s132 = sphi 0, %s116
    $region4: #{bottleneck_forward.3} parent=1 // loop_header_branch
      %16 = sbr.rel (%p14) target = $region8
    $region5: #{bottleneck_forward.3} parent=1 // loop_body
      %s18 = ssub.s32 %s13, 1
      %s19 = ssub.s32 %s13, 2
      %s20 = sadd.s32 %s13, 1
      %s21 = ssub.s32 %s13, %s20
      %p22 = scmp.eq.s32.totalorder %s21, 0
      %s24 = sadd.s32 %s23, 1
      %s25 = scalar_select %p22, %s23, %s24
      %p28 = pneg %p22
      %p29 = scmp.eq.s32.totalorder %s13, 1
      %p30 = por %p28, %p29
      %p31 = scmp.ne.s32.totalorder %s23, %s26
      %p32 = scmp.eq.s32.totalorder %s13, 0
      %p33 = por %p31, %p32
      %p34 = scmp.ne.s32.totalorder %s23, %s26
      %p35 = scmp.eq.s32.totalorder %s18, 1
      %p36 = por %p34, %p35
      %p37 = scmp.ne.s32.totalorder %s26, %s27
      %p38 = scmp.eq.s32.totalorder %s18, 0
      %p39 = por %p37, %p38
      %p40 = scmp.ne.s32.totalorder %s26, %s27
      %p41 = scmp.eq.s32.totalorder %s19, 1
      %p42 = por %p40, %p41
      %p44 = scmp.ne.s32.totalorder %s27, %s43
      %p45 = scmp.eq.s32.totalorder %s19, 0
      %p46 = por %p44, %p45
      %s48 = sadd.s32 %s47, 1
      %p51 = scmp.eq.s32.totalorder %s13, 1
      %p52 = scmp.ne.s32.totalorder %s47, %s49
      %p53 = scmp.eq.s32.totalorder %s13, 0
      %p54 = por %p52, %p53
      %p55 = scmp.ne.s32.totalorder %s47, %s49
      %p56 = scmp.eq.s32.totalorder %s18, 1
      %p57 = por %p55, %p56
      %p58 = scmp.ne.s32.totalorder %s49, %s50
      %p59 = scmp.eq.s32.totalorder %s18, 0
      %p60 = por %p58, %p59
      %p61 = scmp.ne.s32.totalorder %s49, %s50
      %p62 = scmp.eq.s32.totalorder %s19, 1
      %p63 = por %p61, %p62
      %p65 = scmp.ne.s32.totalorder %s50, %s64
      %p66 = scmp.eq.s32.totalorder %s19, 0
      %p67 = por %p65, %p66
      %s69 = sadd.s32 %s68, 1
      %p72 = scmp.eq.s32.totalorder %s13, 1
      %p73 = scmp.ne.s32.totalorder %s68, %s70
      %p74 = scmp.eq.s32.totalorder %s13, 0
      %p75 = por %p73, %p74
      %p76 = scmp.ne.s32.totalorder %s68, %s70
      %p77 = scmp.eq.s32.totalorder %s18, 1
      %p78 = por %p76, %p77
      %p79 = scmp.ne.s32.totalorder %s70, %s71
      %p80 = scmp.eq.s32.totalorder %s18, 0
      %p81 = por %p79, %p80
      %p82 = scmp.ne.s32.totalorder %s70, %s71
      %p83 = scmp.eq.s32.totalorder %s19, 1
      %p84 = por %p82, %p83
      %p86 = scmp.ne.s32.totalorder %s71, %s85
      %p87 = scmp.eq.s32.totalorder %s19, 0
      %p88 = por %p86, %p87
      %s90 = sadd.s32 %s89, 1
      %p93 = scmp.eq.s32.totalorder %s13, 1
      %p94 = scmp.ne.s32.totalorder %s89, %s91
      %p95 = scmp.eq.s32.totalorder %s13, 0
      %p96 = por %p94, %p95
      %p97 = scmp.ne.s32.totalorder %s89, %s91
      %p98 = scmp.eq.s32.totalorder %s18, 1
      %p99 = por %p97, %p98
      %p100 = scmp.ne.s32.totalorder %s91, %s92
      %p101 = scmp.eq.s32.totalorder %s18, 0
      %p102 = por %p100, %p101
      %p103 = scmp.ne.s32.totalorder %s91, %s92
      %p104 = scmp.eq.s32.totalorder %s19, 1
      %p105 = por %p103, %p104
      %p107 = scmp.ne.s32.totalorder %s92, %s106
      %p108 = scmp.eq.s32.totalorder %s19, 0
      %p109 = por %p107, %p108
      %s110 = ssub.s32 %s13, %s20
      %p111 = scmp.eq.s32.totalorder %s110, 0
      %s113 = sadd.s32 %s112, 1
      %s114 = scalar_select %p111, %s112, %s113
      %p117 = pneg %p111
      %p118 = scmp.eq.s32.totalorder %s13, 1
      %p119 = por %p117, %p118
      %p120 = scmp.ne.s32.totalorder %s112, %s115
      %p121 = scmp.eq.s32.totalorder %s13, 0
      %p122 = por %p120, %p121
      %p123 = scmp.ne.s32.totalorder %s112, %s115
      %p124 = scmp.eq.s32.totalorder %s18, 1
      %p125 = por %p123, %p124
      %p126 = scmp.ne.s32.totalorder %s115, %s116
      %p127 = scmp.eq.s32.totalorder %s18, 0
      %p128 = por %p126, %p127
      %p129 = scmp.ne.s32.totalorder %s115, %s116
      %p130 = scmp.eq.s32.totalorder %s19, 1
      %p131 = por %p129, %p130
      %p133 = scmp.ne.s32.totalorder %s116, %s132
      %p134 = scmp.eq.s32.totalorder %s19, 0
      %p135 = por %p133, %p134
      %p136 = scmp.le.s32.totalorder 1, %s13
      %p137 = scmp.lt.s32.totalorder %s13, 3
      %p138 = pnand %p136, %p137
      %p139 = pneg %p138
      // Predicated region
      $region9: #{bottleneck_forward.3} parent=5 // pred_check
        _
      $region10: #{bottleneck_forward.3} parent=5 // pred_check_branch
        %141 = sbr.rel (%p138) target = $region12
      $region11: #{bottleneck_forward.3} parent=5 // pred_region
        %s142 = ssub.s32 %s13, 1
        // Predicated region
        $region13: #{bottleneck_forward.3} parent=11 // pred_check
          %p143 = pneg %p60
        $region14: #{bottleneck_forward.3} parent=11 // pred_check_branch
          %145 = sbr.rel (%p143) target = $region16
        $region15: #{bottleneck_forward.3} parent=11 // pred_region
          _
        $region16: #{bottleneck_forward.3} parent=11 // pred_fallthru
          _
        // Predicated region
        $region17: #{bottleneck_forward.3} parent=11 // pred_check
          %p146 = pneg %p81
        $region18: #{bottleneck_forward.3} parent=11 // pred_check_branch
          %148 = sbr.rel (%p146) target = $region20
        $region19: #{bottleneck_forward.3} parent=11 // pred_region
          _
        $region20: #{bottleneck_forward.3} parent=11 // pred_fallthru
          _
        // Predicated region
        $region21: #{bottleneck_forward.3} parent=11 // pred_check
          %p149 = pneg %p102
        $region22: #{bottleneck_forward.3} parent=11 // pred_check_branch
          %151 = sbr.rel (%p149) target = $region24
        $region23: #{bottleneck_forward.3} parent=11 // pred_region
          _
        $region24: #{bottleneck_forward.3} parent=11 // pred_fallthru
          _
      $region12: #{bottleneck_forward.3} parent=5 // pred_fallthru
        _
      %p152 = scmp.lt.s32.totalorder %s13, 2
      // Predicated region
      $region25: #{bottleneck_forward.3} parent=5 // pred_check
        %p153 = pneg %p152
      $region26: #{bottleneck_forward.3} parent=5 // pred_check_branch
        %155 = sbr.rel (%p153) target = $region28
      $region27: #{bottleneck_forward.3} parent=5 // pred_region
        // Predicated region
        $region29: #{bottleneck_forward.3} parent=27 // pred_check
          %p156 = pneg %p33
        $region30: #{bottleneck_forward.3} parent=27 // pred_check_branch
          %158 = sbr.rel (%p156) target = $region32
        $region31: #{bottleneck_forward.3} parent=27 // pred_region
          %s159 = sand.u32 %s23, 1
          %s160 = scalar_lea.sflag [#allocation3], %s159
          %s161 = sand.u32 %s23, 1
          %s162 = smul.addr %s161, 256
          %s163 = scalar_lea.vmem [#allocation2], %s162
          %s164 = smul.u32 32, %s13
          %s166 = ssub.s32 4096, 4096
          %167 = vsyncadd %s160, %s166
          %s168 = smul.addr %s164, 128
          %s169 = scalar_lea.hbm %s0, %s168
          %s170 = sshll.u32 %s163, 4
          %s171 = int_to_ptr.vmem [resolvable:$true] %s170
          %176 = dma.hbm_to_vmem [thread:$0]  %s169, 4096, %s171, %s160, 128, 128, 8
        $region32: #{bottleneck_forward.3} parent=27 // pred_fallthru
          _
      $region28: #{bottleneck_forward.3} parent=5 // pred_fallthru
        _
      %p177 = scmp.le.s32.totalorder 1, %s13
      %p178 = scmp.lt.s32.totalorder %s13, 3
      %p179 = pnand %p177, %p178
      %p180 = pneg %p179
      // Predicated region
      $region33: #{bottleneck_forward.3} parent=5 // pred_check
        _
      $region34: #{bottleneck_forward.3} parent=5 // pred_check_branch
        %182 = sbr.rel (%p179) target = $region36
      $region35: #{bottleneck_forward.3} parent=5 // pred_region
        %s183 = ssub.s32 %s13, 1
        %s184 = sand.u32 %s26, 1
        %s185 = scalar_lea.sflag [#allocation3], %s184
        %s186 = sand.u32 %s26, 1
        %s187 = smul.addr %s186, 256
        %s188 = scalar_lea.vmem [#allocation2], %s187
        // Predicated region
        $region37: #{bottleneck_forward.3} parent=35 // pred_check
          %p189 = pneg %p39
        $region38: #{bottleneck_forward.3} parent=35 // pred_check_branch
          %191 = sbr.rel (%p189) target = $region40
        $region39: #{bottleneck_forward.3} parent=35 // pred_region
          %192 = dma.done %s185, 4096
        $region40: #{bottleneck_forward.3} parent=35 // pred_fallthru
          _
        %s193 = sand.u32 %s26, 1
        %s194 = scalar_lea.sflag [#allocation3], %s193
        %s195 = sand.u32 %s26, 1
        %s196 = smul.addr %s195, 256
        %s197 = scalar_lea.vmem [#allocation2], %s196
        %p198 = pneg %p39
        %p199 = pneg %p36
        %p200 = pneg %p60
        %p201 = pneg %p57
        %p202 = pneg %p81
        %p203 = pneg %p78
        %p204 = pneg %p102
        %p205 = pneg %p99
        %p206 = pneg %p128
        %p207 = pneg %p125
        %s208 = smul.u32 32, %s18
        %p209 = scmp.lt.s32.totalorder %s208, 63
        %s210 = scalar_select %p209, %s208, 63
        %s211 = smul.addr %s210, 8
        %s212 = scalar_lea.vmem %s4, %s211
        %s213 = smul.u32 32, %s18
        %s214 = smul.u32 32, %s18
        %p215 = scmp.lt.s32.totalorder %s214, 63
        %s216 = scalar_select %p215, %s214, 63
        %s217 = smul.addr %s216, 8
        %s218 = scalar_lea.vmem %s4, %s217
        %s219 = smul.u32 32, %s18
        %v220 = vld [vmem:[%s188] sm:$0xff]
        %v221 = vld [vmem:[%s188 + $0x8] sm:$0xff]
        %v222 = vld [vmem:[%s188 + $0x10] sm:$0xff]
        %v223 = vld [vmem:[%s188 + $0x18] sm:$0xff]
        %v224 = vld [vmem:[%s188 + $0x20] sm:$0xff]
        %v225 = vld [vmem:[%s188 + $0x28] sm:$0xff]
        %v226 = vld [vmem:[%s188 + $0x30] sm:$0xff]
        %v227 = vld [vmem:[%s188 + $0x38] sm:$0xff]
        %v228 = vld [vmem:[%s188 + $0x40] sm:$0xff]
        %v229 = vld [vmem:[%s188 + $0x48] sm:$0xff]
        %v230 = vld [vmem:[%s188 + $0x50] sm:$0xff]
        %v231 = vld [vmem:[%s188 + $0x58] sm:$0xff]
        %v232 = vld [vmem:[%s188 + $0x60] sm:$0xff]
        %v233 = vld [vmem:[%s188 + $0x68] sm:$0xff]
        %v234 = vld [vmem:[%s188 + $0x70] sm:$0xff]
        %v235 = vld [vmem:[%s188 + $0x78] sm:$0xff]
        %v236 = vld [vmem:[%s188 + $0x80] sm:$0xff]
        %v237 = vld [vmem:[%s188 + $0x88] sm:$0xff]
        %v238 = vld [vmem:[%s188 + $0x90] sm:$0xff]
        %v239 = vld [vmem:[%s188 + $0x98] sm:$0xff]
        %v240 = vld [vmem:[%s188 + $0xa0] sm:$0xff]
        %v241 = vld [vmem:[%s188 + $0xa8] sm:$0xff]
        %v242 = vld [vmem:[%s188 + $0xb0] sm:$0xff]
        %v243 = vld [vmem:[%s188 + $0xb8] sm:$0xff]
        %v244 = vld [vmem:[%s188 + $0xc0] sm:$0xff]
        %v245 = vld [vmem:[%s188 + $0xc8] sm:$0xff]
        %v246 = vld [vmem:[%s188 + $0xd0] sm:$0xff]
        %v247 = vld [vmem:[%s188 + $0xd8] sm:$0xff]
        %v248 = vld [vmem:[%s188 + $0xe0] sm:$0xff]
        %v249 = vld [vmem:[%s188 + $0xe8] sm:$0xff]
        %v250 = vld [vmem:[%s188 + $0xf0] sm:$0xff]
        %v251 = vld [vmem:[%s188 + $0xf8] sm:$0xff]
        %v252 = vld [vmem:[%s1] sm:$0xff]
        %v253 = vld [vmem:[%s1 + $0x8] sm:$0xff]
        %v254 = vld [vmem:[%s1 + $0x10] sm:$0xff]
        %v255 = vld [vmem:[%s1 + $0x18] sm:$0xff]
        %vm256 = vcmask 261120
        %v258 = vsel %vm256, %v220, 0
        %v261 = vsel %vm256, %v221, 0
        %v264 = vsel %vm256, %v222, 0
        %v267 = vsel %vm256, %v223, 0
        %v270 = vsel %vm256, %v224, 0
        %v273 = vsel %vm256, %v225, 0
        %v276 = vsel %vm256, %v226, 0
        %v279 = vsel %vm256, %v227, 0
        %v282 = vsel %vm256, %v228, 0
        %v285 = vsel %vm256, %v229, 0
        %v288 = vsel %vm256, %v230, 0
        %v291 = vsel %vm256, %v231, 0
        %v294 = vsel %vm256, %v232, 0
        %v297 = vsel %vm256, %v233, 0
        %v300 = vsel %vm256, %v234, 0
        %v303 = vsel %vm256, %v235, 0
        %v306 = vsel %vm256, %v236, 0
        %v309 = vsel %vm256, %v237, 0
        %v312 = vsel %vm256, %v238, 0
        %v315 = vsel %vm256, %v239, 0
        %v318 = vsel %vm256, %v240, 0
        %v321 = vsel %vm256, %v241, 0
        %v324 = vsel %vm256, %v242, 0
        %v327 = vsel %vm256, %v243, 0
        %v330 = vsel %vm256, %v244, 0
        %v333 = vsel %vm256, %v245, 0
        %v336 = vsel %vm256, %v246, 0
        %v339 = vsel %vm256, %v247, 0
        %v342 = vsel %vm256, %v248, 0
        %v345 = vsel %vm256, %v249, 0
        %v348 = vsel %vm256, %v250, 0
        %v351 = vsel %vm256, %v251, 0
        %353 = vmatprep.subr.mxu0 0.0
        %354 = vmatpush1.msra.mxu0 0.0
        %355 = vmatprep.subr.mxu0 0.0
        %356 = vmatpush1.msra.mxu0 0.0
        %357 = vmatprep.subr.mxu0 0.0
        %358 = vmatpush1.msra.mxu0 0.0
        %359 = vmatprep.subr.mxu0 0.0
        %360 = vmatpush1.msra.mxu0 0.0
        %361 = vmatprep.subr.mxu0 0.0
        %362 = vmatpush1.msra.mxu0 0.0
        %363 = vmatprep.subr.mxu0 0.0
        %364 = vmatpush1.msra.mxu0 0.0
        %365 = vmatprep.subr.mxu0 0.0
        %366 = vmatpush1.msra.mxu0 0.0
        %367 = vmatprep.subr.mxu0 0.0
        %368 = vmatpush1.msra.mxu0 0.0
        %369 = vmatprep.subr.mxu0 0.0
        %370 = vmatpush1.msra.mxu0 0.0
        %371 = vmatprep.subr.mxu0 0.0
        %372 = vmatpush1.msra.mxu0 0.0
        %373 = vmatprep.subr.mxu0 0.0
        %374 = vmatpush1.msra.mxu0 0.0
        %375 = vmatprep.subr.mxu0 0.0
        %376 = vmatpush1.msra.mxu0 0.0
        %377 = vmatprep.subr.mxu0 0.0
        %378 = vmatpush1.msra.mxu0 %v255
        %379 = vmatprep.subr.mxu0 0.0
        %380 = vmatpush1.msra.mxu0 %v254
        %381 = vmatprep.subr.mxu0 0.0
        %382 = vmatpush1.msra.mxu0 %v253
        %383 = vmatprep.subr.mxu0 0.0
        %384 = vmatpush1.msra.mxu0 %v252
        %385 = vmatprep.subr.mxu0 0.0
        %386 = vmatpush2.msra.mxu0 0.0
        %387 = vmatprep.subr.mxu0 0.0
        %388 = vmatpush2.msra.mxu0 0.0
        %389 = vmatprep.subr.mxu0 0.0
        %390 = vmatpush2.msra.mxu0 0.0
        %391 = vmatprep.subr.mxu0 0.0
        %392 = vmatpush2.msra.mxu0 0.0
        %393 = vmatprep.subr.mxu0 0.0
        %394 = vmatpush2.msra.mxu0 0.0
        %395 = vmatprep.subr.mxu0 0.0
        %396 = vmatpush2.msra.mxu0 0.0
        %397 = vmatprep.subr.mxu0 0.0
        %398 = vmatpush2.msra.mxu0 0.0
        %399 = vmatprep.subr.mxu0 0.0
        %400 = vmatpush2.msra.mxu0 0.0
        %401 = vmatprep.subr.mxu0 0.0
        %402 = vmatpush2.msra.mxu0 0.0
        %403 = vmatprep.subr.mxu0 0.0
        %404 = vmatpush2.msra.mxu0 0.0
        %405 = vmatprep.subr.mxu0 0.0
        %406 = vmatpush2.msra.mxu0 0.0
        %407 = vmatprep.subr.mxu0 0.0
        %408 = vmatpush2.msra.mxu0 0.0
        %409 = vmatprep.subr.mxu0 0.0
        %410 = vmatpush2.msra.mxu0 0.0
        %411 = vmatprep.subr.mxu0 0.0
        %412 = vmatpush2.msra.mxu0 0.0
        %413 = vmatprep.subr.mxu0 0.0
        %414 = vmatpush2.msra.mxu0 0.0
        %415 = vmatprep.subr.mxu0 0.0
        %416 = vmatpush2.msra.mxu0 0.0
        %417 = vmatprep.mubr.f32.mxu0 0.0
        %418 = vmatmul.mubr.f32.gmra.mxu0 %v258
        %v419 = vpop.f32.mrf.mxu0
        %v420 = vadd.f32 0.0, %v419
        %v421 = vpop.f32.mrf.mxu0
        %422 = vmatprep.mubr.f32.mxu0 0.0
        %423 = vmatmul.mubr.f32.gmra.mxu0 %v261
        %v424 = vpop.f32.mrf.mxu0
        %v425 = vadd.f32 0.0, %v424
        %v426 = vpop.f32.mrf.mxu0
        %427 = vmatprep.mubr.f32.mxu0 0.0
        %428 = vmatmul.mubr.f32.gmra.mxu0 %v264
        %v429 = vpop.f32.mrf.mxu0
        %v430 = vadd.f32 0.0, %v429
        %v431 = vpop.f32.mrf.mxu0
        %432 = vmatprep.mubr.f32.mxu0 0.0
        %433 = vmatmul.mubr.f32.gmra.mxu0 %v267
        %v434 = vpop.f32.mrf.mxu0
        %v435 = vadd.f32 0.0, %v434
        %v436 = vpop.f32.mrf.mxu0
        %437 = vmatprep.mubr.f32.mxu0 0.0
        %438 = vmatmul.mubr.f32.gmra.mxu0 %v270
        %v439 = vpop.f32.mrf.mxu0
        %v440 = vadd.f32 0.0, %v439
        %v441 = vpop.f32.mrf.mxu0
        %442 = vmatprep.mubr.f32.mxu0 0.0
        %443 = vmatmul.mubr.f32.gmra.mxu0 %v273
        %v444 = vpop.f32.mrf.mxu0
        %v445 = vadd.f32 0.0, %v444
        %v446 = vpop.f32.mrf.mxu0
        %447 = vmatprep.mubr.f32.mxu0 0.0
        %448 = vmatmul.mubr.f32.gmra.mxu0 %v276
        %v449 = vpop.f32.mrf.mxu0
        %v450 = vadd.f32 0.0, %v449
        %v451 = vpop.f32.mrf.mxu0
        %452 = vmatprep.mubr.f32.mxu0 0.0
        %453 = vmatmul.mubr.f32.gmra.mxu0 %v279
        %v454 = vpop.f32.mrf.mxu0
        %v455 = vadd.f32 0.0, %v454
        %v456 = vpop.f32.mrf.mxu0
        %457 = vmatprep.mubr.f32.mxu0 0.0
        %458 = vmatmul.mubr.f32.gmra.mxu0 %v282
        %v459 = vpop.f32.mrf.mxu0
        %v460 = vadd.f32 0.0, %v459
        %v461 = vpop.f32.mrf.mxu0
        %462 = vmatprep.mubr.f32.mxu0 0.0
        %463 = vmatmul.mubr.f32.gmra.mxu0 %v285
        %v464 = vpop.f32.mrf.mxu0
        %v465 = vadd.f32 0.0, %v464
        %v466 = vpop.f32.mrf.mxu0
        %467 = vmatprep.mubr.f32.mxu0 0.0
        %468 = vmatmul.mubr.f32.gmra.mxu0 %v288
        %v469 = vpop.f32.mrf.mxu0
        %v470 = vadd.f32 0.0, %v469
        %v471 = vpop.f32.mrf.mxu0
        %472 = vmatprep.mubr.f32.mxu0 0.0
        %473 = vmatmul.mubr.f32.gmra.mxu0 %v291
        %v474 = vpop.f32.mrf.mxu0
        %v475 = vadd.f32 0.0, %v474
        %v476 = vpop.f32.mrf.mxu0
        %477 = vmatprep.mubr.f32.mxu0 0.0
        %478 = vmatmul.mubr.f32.gmra.mxu0 %v294
        %v479 = vpop.f32.mrf.mxu0
        %v480 = vadd.f32 0.0, %v479
        %v481 = vpop.f32.mrf.mxu0
        %482 = vmatprep.mubr.f32.mxu0 0.0
        %483 = vmatmul.mubr.f32.gmra.mxu0 %v297
        %v484 = vpop.f32.mrf.mxu0
        %v485 = vadd.f32 0.0, %v484
        %v486 = vpop.f32.mrf.mxu0
        %487 = vmatprep.mubr.f32.mxu0 0.0
        %488 = vmatmul.mubr.f32.gmra.mxu0 %v300
        %v489 = vpop.f32.mrf.mxu0
        %v490 = vadd.f32 0.0, %v489
        %v491 = vpop.f32.mrf.mxu0
        %492 = vmatprep.mubr.f32.mxu0 0.0
        %493 = vmatmul.mubr.f32.gmra.mxu0 %v303
        %v494 = vpop.f32.mrf.mxu0
        %v495 = vadd.f32 0.0, %v494
        %v496 = vpop.f32.mrf.mxu0
        %497 = vmatprep.mubr.f32.mxu0 0.0
        %498 = vmatmul.mubr.f32.gmra.mxu0 %v306
        %v499 = vpop.f32.mrf.mxu0
        %v500 = vadd.f32 0.0, %v499
        %v501 = vpop.f32.mrf.mxu0
        %502 = vmatprep.mubr.f32.mxu0 0.0
        %503 = vmatmul.mubr.f32.gmra.mxu0 %v309
        %v504 = vpop.f32.mrf.mxu0
        %v505 = vadd.f32 0.0, %v504
        %v506 = vpop.f32.mrf.mxu0
        %507 = vmatprep.mubr.f32.mxu0 0.0
        %508 = vmatmul.mubr.f32.gmra.mxu0 %v312
        %v509 = vpop.f32.mrf.mxu0
        %v510 = vadd.f32 0.0, %v509
        %v511 = vpop.f32.mrf.mxu0
        %512 = vmatprep.mubr.f32.mxu0 0.0
        %513 = vmatmul.mubr.f32.gmra.mxu0 %v315
        %v514 = vpop.f32.mrf.mxu0
        %v515 = vadd.f32 0.0, %v514
        %v516 = vpop.f32.mrf.mxu0
        %517 = vmatprep.mubr.f32.mxu0 0.0
        %518 = vmatmul.mubr.f32.gmra.mxu0 %v318
        %v519 = vpop.f32.mrf.mxu0
        %v520 = vadd.f32 0.0, %v519
        %v521 = vpop.f32.mrf.mxu0
        %522 = vmatprep.mubr.f32.mxu0 0.0
        %523 = vmatmul.mubr.f32.gmra.mxu0 %v321
        %v524 = vpop.f32.mrf.mxu0
        %v525 = vadd.f32 0.0, %v524
        %v526 = vpop.f32.mrf.mxu0
        %527 = vmatprep.mubr.f32.mxu0 0.0
        %528 = vmatmul.mubr.f32.gmra.mxu0 %v324
        %v529 = vpop.f32.mrf.mxu0
        %v530 = vadd.f32 0.0, %v529
        %v531 = vpop.f32.mrf.mxu0
        %532 = vmatprep.mubr.f32.mxu0 0.0
        %533 = vmatmul.mubr.f32.gmra.mxu0 %v327
        %v534 = vpop.f32.mrf.mxu0
        %v535 = vadd.f32 0.0, %v534
        %v536 = vpop.f32.mrf.mxu0
        %537 = vmatprep.mubr.f32.mxu0 0.0
        %538 = vmatmul.mubr.f32.gmra.mxu0 %v330
        %v539 = vpop.f32.mrf.mxu0
        %v540 = vadd.f32 0.0, %v539
        %v541 = vpop.f32.mrf.mxu0
        %542 = vmatprep.mubr.f32.mxu0 0.0
        %543 = vmatmul.mubr.f32.gmra.mxu0 %v333
        %v544 = vpop.f32.mrf.mxu0
        %v545 = vadd.f32 0.0, %v544
        %v546 = vpop.f32.mrf.mxu0
        %547 = vmatprep.mubr.f32.mxu0 0.0
        %548 = vmatmul.mubr.f32.gmra.mxu0 %v336
        %v549 = vpop.f32.mrf.mxu0
        %v550 = vadd.f32 0.0, %v549
        %v551 = vpop.f32.mrf.mxu0
        %552 = vmatprep.mubr.f32.mxu0 0.0
        %553 = vmatmul.mubr.f32.gmra.mxu0 %v339
        %v554 = vpop.f32.mrf.mxu0
        %v555 = vadd.f32 0.0, %v554
        %v556 = vpop.f32.mrf.mxu0
        %557 = vmatprep.mubr.f32.mxu0 0.0
        %558 = vmatmul.mubr.f32.gmra.mxu0 %v342
        %v559 = vpop.f32.mrf.mxu0
        %v560 = vadd.f32 0.0, %v559
        %v561 = vpop.f32.mrf.mxu0
        %562 = vmatprep.mubr.f32.mxu0 0.0
        %563 = vmatmul.mubr.f32.gmra.mxu0 %v345
        %v564 = vpop.f32.mrf.mxu0
        %v565 = vadd.f32 0.0, %v564
        %v566 = vpop.f32.mrf.mxu0
        %567 = vmatprep.mubr.f32.mxu0 0.0
        %568 = vmatmul.mubr.f32.gmra.mxu0 %v348
        %v569 = vpop.f32.mrf.mxu0
        %v570 = vadd.f32 0.0, %v569
        %v571 = vpop.f32.mrf.mxu0
        %572 = vmatprep.mubr.f32.mxu0 0.0
        %573 = vmatmul.mubr.f32.gmra.mxu0 %v351
        %v574 = vpop.f32.mrf.mxu0
        %v575 = vadd.f32 0.0, %v574
        %v576 = vpop.f32.mrf.mxu0
        %577 = vdwg.mxu0
        %v578 = vld [vmem:[%s2] sm:$0x1]
        %v580 = vlaneseq
        %v581 = vshrl.u32 %v580, 7
        %v582 = vsub.s32 0, %v581
        %v583 = vrot.slane %v578, %v582
        %v585 = vmul.f32 %v420, %v583
        %v586 = vmul.f32 %v425, %v583
        %v587 = vmul.f32 %v430, %v583
        %v588 = vmul.f32 %v435, %v583
        %v589 = vmul.f32 %v440, %v583
        %v590 = vmul.f32 %v445, %v583
        %v591 = vmul.f32 %v450, %v583
        %v592 = vmul.f32 %v455, %v583
        %v593 = vmul.f32 %v460, %v583
        %v594 = vmul.f32 %v465, %v583
        %v595 = vmul.f32 %v470, %v583
        %v596 = vmul.f32 %v475, %v583
        %v597 = vmul.f32 %v480, %v583
        %v598 = vmul.f32 %v485, %v583
        %v599 = vmul.f32 %v490, %v583
        %v600 = vmul.f32 %v495, %v583
        %v601 = vmul.f32 %v500, %v583
        %v602 = vmul.f32 %v505, %v583
        %v603 = vmul.f32 %v510, %v583
        %v604 = vmul.f32 %v515, %v583
        %v605 = vmul.f32 %v520, %v583
        %v606 = vmul.f32 %v525, %v583
        %v607 = vmul.f32 %v530, %v583
        %v608 = vmul.f32 %v535, %v583
        %v609 = vmul.f32 %v540, %v583
        %v610 = vmul.f32 %v545, %v583
        %v611 = vmul.f32 %v550, %v583
        %v612 = vmul.f32 %v555, %v583
        %v613 = vmul.f32 %v560, %v583
        %v614 = vmul.f32 %v565, %v583
        %v615 = vmul.f32 %v570, %v583
        %v616 = vmul.f32 %v575, %v583
        %v617 = vld [vmem:[%s3] sm:$0x1]
        %v619 = vlaneseq
        %v620 = vshrl.u32 %v619, 7
        %v621 = vsub.s32 0, %v620
        %v622 = vrot.slane %v617, %v621
        %v624 = vadd.f32 %v585, %v622
        %v625 = vadd.f32 %v586, %v622
        %v626 = vadd.f32 %v587, %v622
        %v627 = vadd.f32 %v588, %v622
        %v628 = vadd.f32 %v589, %v622
        %v629 = vadd.f32 %v590, %v622
        %v630 = vadd.f32 %v591, %v622
        %v631 = vadd.f32 %v592, %v622
        %v632 = vadd.f32 %v593, %v622
        %v633 = vadd.f32 %v594, %v622
        %v634 = vadd.f32 %v595, %v622
        %v635 = vadd.f32 %v596, %v622
        %v636 = vadd.f32 %v597, %v622
        %v637 = vadd.f32 %v598, %v622
        %v638 = vadd.f32 %v599, %v622
        %v639 = vadd.f32 %v600, %v622
        %v640 = vadd.f32 %v601, %v622
        %v641 = vadd.f32 %v602, %v622
        %v642 = vadd.f32 %v603, %v622
        %v643 = vadd.f32 %v604, %v622
        %v644 = vadd.f32 %v605, %v622
        %v645 = vadd.f32 %v606, %v622
        %v646 = vadd.f32 %v607, %v622
        %v647 = vadd.f32 %v608, %v622
        %v648 = vadd.f32 %v609, %v622
        %v649 = vadd.f32 %v610, %v622
        %v650 = vadd.f32 %v611, %v622
        %v651 = vadd.f32 %v612, %v622
        %v652 = vadd.f32 %v613, %v622
        %v653 = vadd.f32 %v614, %v622
        %v654 = vadd.f32 %v615, %v622
        %v655 = vadd.f32 %v616, %v622
        %v656 = vmax.f32 %v624, 0.0
        %v657 = vmax.f32 %v625, 0.0
        %v658 = vmax.f32 %v626, 0.0
        %v659 = vmax.f32 %v627, 0.0
        %v660 = vmax.f32 %v628, 0.0
        %v661 = vmax.f32 %v629, 0.0
        %v662 = vmax.f32 %v630, 0.0
        %v663 = vmax.f32 %v631, 0.0
        %v664 = vmax.f32 %v632, 0.0
        %v665 = vmax.f32 %v633, 0.0
        %v666 = vmax.f32 %v634, 0.0
        %v667 = vmax.f32 %v635, 0.0
        %v668 = vmax.f32 %v636, 0.0
        %v669 = vmax.f32 %v637, 0.0
        %v670 = vmax.f32 %v638, 0.0
        %v671 = vmax.f32 %v639, 0.0
        %v672 = vmax.f32 %v640, 0.0
        %v673 = vmax.f32 %v641, 0.0
        %v674 = vmax.f32 %v642, 0.0
        %v675 = vmax.f32 %v643, 0.0
        %v676 = vmax.f32 %v644, 0.0
        %v677 = vmax.f32 %v645, 0.0
        %v678 = vmax.f32 %v646, 0.0
        %v679 = vmax.f32 %v647, 0.0
        %v680 = vmax.f32 %v648, 0.0
        %v681 = vmax.f32 %v649, 0.0
        %v682 = vmax.f32 %v650, 0.0
        %v683 = vmax.f32 %v651, 0.0
        %v684 = vmax.f32 %v652, 0.0
        %v685 = vmax.f32 %v653, 0.0
        %v686 = vmax.f32 %v654, 0.0
        %v687 = vmax.f32 %v655, 0.0
        %vm688 = vcmask 64512
        %689 = vst.msk [vmem:[%s218] sm:$0xff] %vm688, %v656
        %690 = vst.msk [vmem:[%s218 + $0x8] sm:$0xff] %vm688, %v657
        %691 = vst.msk [vmem:[%s218 + $0x10] sm:$0xff] %vm688, %v658
        %692 = vst.msk [vmem:[%s218 + $0x18] sm:$0xff] %vm688, %v659
        %693 = vst.msk [vmem:[%s218 + $0x20] sm:$0xff] %vm688, %v660
        %694 = vst.msk [vmem:[%s218 + $0x28] sm:$0xff] %vm688, %v661
        %695 = vst.msk [vmem:[%s218 + $0x30] sm:$0xff] %vm688, %v662
        %696 = vst.msk [vmem:[%s218 + $0x38] sm:$0xff] %vm688, %v663
        %697 = vst.msk [vmem:[%s218 + $0x40] sm:$0xff] %vm688, %v664
        %698 = vst.msk [vmem:[%s218 + $0x48] sm:$0xff] %vm688, %v665
        %699 = vst.msk [vmem:[%s218 + $0x50] sm:$0xff] %vm688, %v666
        %700 = vst.msk [vmem:[%s218 + $0x58] sm:$0xff] %vm688, %v667
        %701 = vst.msk [vmem:[%s218 + $0x60] sm:$0xff] %vm688, %v668
        %702 = vst.msk [vmem:[%s218 + $0x68] sm:$0xff] %vm688, %v669
        %703 = vst.msk [vmem:[%s218 + $0x70] sm:$0xff] %vm688, %v670
        %704 = vst.msk [vmem:[%s218 + $0x78] sm:$0xff] %vm688, %v671
        %705 = vst.msk [vmem:[%s218 + $0x80] sm:$0xff] %vm688, %v672
        %706 = vst.msk [vmem:[%s218 + $0x88] sm:$0xff] %vm688, %v673
        %707 = vst.msk [vmem:[%s218 + $0x90] sm:$0xff] %vm688, %v674
        %708 = vst.msk [vmem:[%s218 + $0x98] sm:$0xff] %vm688, %v675
        %709 = vst.msk [vmem:[%s218 + $0xa0] sm:$0xff] %vm688, %v676
        %710 = vst.msk [vmem:[%s218 + $0xa8] sm:$0xff] %vm688, %v677
        %711 = vst.msk [vmem:[%s218 + $0xb0] sm:$0xff] %vm688, %v678
        %712 = vst.msk [vmem:[%s218 + $0xb8] sm:$0xff] %vm688, %v679
        %713 = vst.msk [vmem:[%s218 + $0xc0] sm:$0xff] %vm688, %v680
        %714 = vst.msk [vmem:[%s218 + $0xc8] sm:$0xff] %vm688, %v681
        %715 = vst.msk [vmem:[%s218 + $0xd0] sm:$0xff] %vm688, %v682
        %716 = vst.msk [vmem:[%s218 + $0xd8] sm:$0xff] %vm688, %v683
        %717 = vst.msk [vmem:[%s218 + $0xe0] sm:$0xff] %vm688, %v684
        %718 = vst.msk [vmem:[%s218 + $0xe8] sm:$0xff] %vm688, %v685
        %719 = vst.msk [vmem:[%s218 + $0xf0] sm:$0xff] %vm688, %v686
        %720 = vst.msk [vmem:[%s218 + $0xf8] sm:$0xff] %vm688, %v687
        %s721 = smul.u32 32, %s18
        %p722 = scmp.lt.s32.totalorder %s721, 63
        %s723 = scalar_select %p722, %s721, 63
        %s724 = smul.addr %s723, 8
        %s725 = scalar_lea.vmem %s4, %s724
        // Predicated region
        $region41: #{bottleneck_forward.3} parent=35 // pred_check
          %p726 = pneg %p125
        $region42: #{bottleneck_forward.3} parent=35 // pred_check_branch
          %728 = sbr.rel (%p726) target = $region44
        $region43: #{bottleneck_forward.3} parent=35 // pred_region
          %s729 = smul.u32 32, %s18
        $region44: #{bottleneck_forward.3} parent=35 // pred_fallthru
          _
      $region36: #{bottleneck_forward.3} parent=5 // pred_fallthru
        _
      %p730 = scmp.le.s32.totalorder 2, %s13
      // Predicated region
      $region45: #{bottleneck_forward.3} parent=5 // pred_check
        %p731 = pneg %p730
      $region46: #{bottleneck_forward.3} parent=5 // pred_check_branch
        %733 = sbr.rel (%p731) target = $region48
      $region47: #{bottleneck_forward.3} parent=5 // pred_region
        %s734 = ssub.s32 %s13, 2
        // Predicated region
        $region49: #{bottleneck_forward.3} parent=47 // pred_check
          %p735 = pneg %p131
        $region50: #{bottleneck_forward.3} parent=47 // pred_check_branch
          %737 = sbr.rel (%p735) target = $region52
        $region51: #{bottleneck_forward.3} parent=47 // pred_region
          %s738 = smul.u32 32, %s19
          %p739 = scmp.lt.s32.totalorder %s738, 63
          %s740 = scalar_select %p739, %s738, 63
          %s741 = smul.addr %s740, 8
          %s742 = scalar_lea.vmem %s4, %s741
        $region52: #{bottleneck_forward.3} parent=47 // pred_fallthru
          _
      $region48: #{bottleneck_forward.3} parent=5 // pred_fallthru
        _
    $region6: #{bottleneck_forward.3} parent=1 // loop_footer
      %s17 = sadd.s32 1, %s13
    $region7: #{bottleneck_forward.3} parent=1 // loop_footer_branch
      %12 = sbr.rel target = $region3
    $region8: #{bottleneck_forward.3} parent=1 // loop_exit
      _
    %743 = vsyncpa [#allocation3], 1
    %s744 = scalar_lea.sflag [#allocation3], 1
    %745 = vsyncpa %s744, 1

// kernel: bottleneck_forward.5
$region0: #{bottleneck_forward.5}
  #allocation0 [shape = 'u32[]', space=smem, size = 0x4, offset = 0x4, fixed_abs, tag = 'smem constant byte address 0x4 - core index']
  #allocation1 [shape = 'u32[144,128]{1,0:T(1,128)}', space=vmem, size = 0x12000, scoped, tag = 'internal scratch']
  %s0 = inlined_call_operand.vmem [shape: f32[512,8], index: 0, kind: input, shape index: {}]
  %s1 = inlined_call_operand.vmem [shape: f32[8,32], index: 1, kind: input, shape index: {}]
  %s2 = inlined_call_operand.vmem [shape: f32[1,32], index: 2, kind: input, shape index: {}]
  %s3 = inlined_call_operand.vmem [shape: f32[1,32], index: 3, kind: input, shape index: {}]
  %s4 = inlined_call_operand.vmem [shape: f32[512,32], index: 4, kind: input, shape index: {}]
  %s5 = inlined_call_operand.hbm [shape: f32[512,32], index: 5, kind: output, shape index: {}]
  %s6 = sld [smem:[#allocation0]]
  $region53: #{bottleneck_forward.5} parent=0
    _
  %s8 = ssub.s32 1, %s6
  %s9 = scalar_select 0, %s8, %s6
  $region1: #{bottleneck_forward.5} parent=0
    #allocation2 [shape = 'u8[262144]{0}', space=vmem, size = 0x40000, scoped, tag = 'output window, operand 0']
    #allocation3 [shape = 's32[2]{0}', space=sflag, size = 0x8, scoped, tag = 'scoped memory for bottleneck_forward.5']
    %10 = vsyncpa [#allocation3], 0
    %s11 = scalar_lea.sflag [#allocation3], 1
    %12 = vsyncpa %s11, 0
    loop: start=0, step=1, limit=4
    $region2: #{bottleneck_forward.5} parent=1 // loop_pre_header
      _
    $region3: #{bottleneck_forward.5} parent=1 // loop_header
      %s14 = sphi 0, %s18
      %p15 = scmp.ge.s32.totalorder %s14, 4
      %s24 = sphi 0, %s26
      %s27 = sphi 0, %s24
      %s28 = sphi 0, %s27
      %s44 = sphi 0, %s28
      %s48 = sphi 0, %s48
      %s50 = sphi 0, %s48
      %s51 = sphi 0, %s50
      %s65 = sphi 0, %s51
      %s69 = sphi 0, %s69
      %s71 = sphi 0, %s69
      %s72 = sphi 0, %s71
      %s86 = sphi 0, %s72
      %s90 = sphi 0, %s90
      %s92 = sphi 0, %s90
      %s93 = sphi 0, %s92
      %s107 = sphi 0, %s93
      %s113 = sphi 0, %s115
      %s116 = sphi 0, %s113
      %s117 = sphi 0, %s116
      %s133 = sphi 0, %s117
      %s139 = sphi 0, %s141
      %s142 = sphi 0, %s139
      %s143 = sphi 0, %s142
      %s159 = sphi 0, %s143
    $region4: #{bottleneck_forward.5} parent=1 // loop_header_branch
      %17 = sbr.rel (%p15) target = $region8
    $region5: #{bottleneck_forward.5} parent=1 // loop_body
      %s19 = ssub.s32 %s14, 1
      %s20 = ssub.s32 %s14, 2
      %s21 = sadd.s32 %s14, 1
      %s22 = ssub.s32 %s14, %s21
      %p23 = scmp.eq.s32.totalorder %s22, 0
      %s25 = sadd.s32 %s24, 1
      %s26 = scalar_select %p23, %s24, %s25
      %p29 = pneg %p23
      %p30 = scmp.eq.s32.totalorder %s14, 1
      %p31 = por %p29, %p30
      %p32 = scmp.ne.s32.totalorder %s24, %s27
      %p33 = scmp.eq.s32.totalorder %s14, 0
      %p34 = por %p32, %p33
      %p35 = scmp.ne.s32.totalorder %s24, %s27
      %p36 = scmp.eq.s32.totalorder %s19, 1
      %p37 = por %p35, %p36
      %p38 = scmp.ne.s32.totalorder %s27, %s28
      %p39 = scmp.eq.s32.totalorder %s19, 0
      %p40 = por %p38, %p39
      %p41 = scmp.ne.s32.totalorder %s27, %s28
      %p42 = scmp.eq.s32.totalorder %s20, 1
      %p43 = por %p41, %p42
      %p45 = scmp.ne.s32.totalorder %s28, %s44
      %p46 = scmp.eq.s32.totalorder %s20, 0
      %p47 = por %p45, %p46
      %s49 = sadd.s32 %s48, 1
      %p52 = scmp.eq.s32.totalorder %s14, 1
      %p53 = scmp.ne.s32.totalorder %s48, %s50
      %p54 = scmp.eq.s32.totalorder %s14, 0
      %p55 = por %p53, %p54
      %p56 = scmp.ne.s32.totalorder %s48, %s50
      %p57 = scmp.eq.s32.totalorder %s19, 1
      %p58 = por %p56, %p57
      %p59 = scmp.ne.s32.totalorder %s50, %s51
      %p60 = scmp.eq.s32.totalorder %s19, 0
      %p61 = por %p59, %p60
      %p62 = scmp.ne.s32.totalorder %s50, %s51
      %p63 = scmp.eq.s32.totalorder %s20, 1
      %p64 = por %p62, %p63
      %p66 = scmp.ne.s32.totalorder %s51, %s65
      %p67 = scmp.eq.s32.totalorder %s20, 0
      %p68 = por %p66, %p67
      %s70 = sadd.s32 %s69, 1
      %p73 = scmp.eq.s32.totalorder %s14, 1
      %p74 = scmp.ne.s32.totalorder %s69, %s71
      %p75 = scmp.eq.s32.totalorder %s14, 0
      %p76 = por %p74, %p75
      %p77 = scmp.ne.s32.totalorder %s69, %s71
      %p78 = scmp.eq.s32.totalorder %s19, 1
      %p79 = por %p77, %p78
      %p80 = scmp.ne.s32.totalorder %s71, %s72
      %p81 = scmp.eq.s32.totalorder %s19, 0
      %p82 = por %p80, %p81
      %p83 = scmp.ne.s32.totalorder %s71, %s72
      %p84 = scmp.eq.s32.totalorder %s20, 1
      %p85 = por %p83, %p84
      %p87 = scmp.ne.s32.totalorder %s72, %s86
      %p88 = scmp.eq.s32.totalorder %s20, 0
      %p89 = por %p87, %p88
      %s91 = sadd.s32 %s90, 1
      %p94 = scmp.eq.s32.totalorder %s14, 1
      %p95 = scmp.ne.s32.totalorder %s90, %s92
      %p96 = scmp.eq.s32.totalorder %s14, 0
      %p97 = por %p95, %p96
      %p98 = scmp.ne.s32.totalorder %s90, %s92
      %p99 = scmp.eq.s32.totalorder %s19, 1
      %p100 = por %p98, %p99
      %p101 = scmp.ne.s32.totalorder %s92, %s93
      %p102 = scmp.eq.s32.totalorder %s19, 0
      %p103 = por %p101, %p102
      %p104 = scmp.ne.s32.totalorder %s92, %s93
      %p105 = scmp.eq.s32.totalorder %s20, 1
      %p106 = por %p104, %p105
      %p108 = scmp.ne.s32.totalorder %s93, %s107
      %p109 = scmp.eq.s32.totalorder %s20, 0
      %p110 = por %p108, %p109
      %s111 = ssub.s32 %s14, %s21
      %p112 = scmp.eq.s32.totalorder %s111, 0
      %s114 = sadd.s32 %s113, 1
      %s115 = scalar_select %p112, %s113, %s114
      %p118 = pneg %p112
      %p119 = scmp.eq.s32.totalorder %s14, 1
      %p120 = por %p118, %p119
      %p121 = scmp.ne.s32.totalorder %s113, %s116
      %p122 = scmp.eq.s32.totalorder %s14, 0
      %p123 = por %p121, %p122
      %p124 = scmp.ne.s32.totalorder %s113, %s116
      %p125 = scmp.eq.s32.totalorder %s19, 1
      %p126 = por %p124, %p125
      %p127 = scmp.ne.s32.totalorder %s116, %s117
      %p128 = scmp.eq.s32.totalorder %s19, 0
      %p129 = por %p127, %p128
      %p130 = scmp.ne.s32.totalorder %s116, %s117
      %p131 = scmp.eq.s32.totalorder %s20, 1
      %p132 = por %p130, %p131
      %p134 = scmp.ne.s32.totalorder %s117, %s133
      %p135 = scmp.eq.s32.totalorder %s20, 0
      %p136 = por %p134, %p135
      %s137 = ssub.s32 %s14, %s21
      %p138 = scmp.eq.s32.totalorder %s137, 0
      %s140 = sadd.s32 %s139, 1
      %s141 = scalar_select %p138, %s139, %s140
      %p144 = pneg %p138
      %p145 = scmp.eq.s32.totalorder %s14, 1
      %p146 = por %p144, %p145
      %p147 = scmp.ne.s32.totalorder %s139, %s142
      %p148 = scmp.eq.s32.totalorder %s14, 0
      %p149 = por %p147, %p148
      %p150 = scmp.ne.s32.totalorder %s139, %s142
      %p151 = scmp.eq.s32.totalorder %s19, 1
      %p152 = por %p150, %p151
      %p153 = scmp.ne.s32.totalorder %s142, %s143
      %p154 = scmp.eq.s32.totalorder %s19, 0
      %p155 = por %p153, %p154
      %p156 = scmp.ne.s32.totalorder %s142, %s143
      %p157 = scmp.eq.s32.totalorder %s20, 1
      %p158 = por %p156, %p157
      %p160 = scmp.ne.s32.totalorder %s143, %s159
      %p161 = scmp.eq.s32.totalorder %s20, 0
      %p162 = por %p160, %p161
      %p163 = scmp.le.s32.totalorder 1, %s14
      %p164 = scmp.lt.s32.totalorder %s14, 3
      %p165 = pnand %p163, %p164
      %p166 = pneg %p165
      // Predicated region
      $region9: #{bottleneck_forward.5} parent=5 // pred_check
        _
      $region10: #{bottleneck_forward.5} parent=5 // pred_check_branch
        %168 = sbr.rel (%p165) target = $region12
      $region11: #{bottleneck_forward.5} parent=5 // pred_region
        %s169 = ssub.s32 %s14, 1
        // Predicated region
        $region13: #{bottleneck_forward.5} parent=11 // pred_check
          %p170 = pneg %p61
        $region14: #{bottleneck_forward.5} parent=11 // pred_check_branch
          %172 = sbr.rel (%p170) target = $region16
        $region15: #{bottleneck_forward.5} parent=11 // pred_region
          _
        $region16: #{bottleneck_forward.5} parent=11 // pred_fallthru
          _
        // Predicated region
        $region17: #{bottleneck_forward.5} parent=11 // pred_check
          %p173 = pneg %p82
        $region18: #{bottleneck_forward.5} parent=11 // pred_check_branch
          %175 = sbr.rel (%p173) target = $region20
        $region19: #{bottleneck_forward.5} parent=11 // pred_region
          _
        $region20: #{bottleneck_forward.5} parent=11 // pred_fallthru
          _
        // Predicated region
        $region21: #{bottleneck_forward.5} parent=11 // pred_check
          %p176 = pneg %p103
        $region22: #{bottleneck_forward.5} parent=11 // pred_check_branch
          %178 = sbr.rel (%p176) target = $region24
        $region23: #{bottleneck_forward.5} parent=11 // pred_region
          _
        $region24: #{bottleneck_forward.5} parent=11 // pred_fallthru
          _
      $region12: #{bottleneck_forward.5} parent=5 // pred_fallthru
        _
      %p179 = scmp.lt.s32.totalorder %s14, 2
      // Predicated region
      $region25: #{bottleneck_forward.5} parent=5 // pred_check
        %p180 = pneg %p179
      $region26: #{bottleneck_forward.5} parent=5 // pred_check_branch
        %182 = sbr.rel (%p180) target = $region28
      $region27: #{bottleneck_forward.5} parent=5 // pred_region
        // Predicated region
        $region29: #{bottleneck_forward.5} parent=27 // pred_check
          %p183 = pneg %p34
        $region30: #{bottleneck_forward.5} parent=27 // pred_check_branch
          %185 = sbr.rel (%p183) target = $region32
        $region31: #{bottleneck_forward.5} parent=27 // pred_region
          %s186 = smul.u32 32, %s14
          %p187 = scmp.lt.s32.totalorder %s186, 63
          %s188 = scalar_select %p187, %s186, 63
          %s189 = smul.addr %s188, 8
          %s190 = scalar_lea.vmem %s0, %s189
          %s191 = smul.u32 32, %s14
        $region32: #{bottleneck_forward.5} parent=27 // pred_fallthru
          _
        // Predicated region
        $region33: #{bottleneck_forward.5} parent=27 // pred_check
          %p192 = pneg %p123
        $region34: #{bottleneck_forward.5} parent=27 // pred_check_branch
          %194 = sbr.rel (%p192) target = $region36
        $region35: #{bottleneck_forward.5} parent=27 // pred_region
          %s195 = smul.u32 32, %s14
          %p196 = scmp.lt.s32.totalorder %s195, 63
          %s197 = scalar_select %p196, %s195, 63
          %s198 = smul.addr %s197, 8
          %s199 = scalar_lea.vmem %s4, %s198
          %s200 = smul.u32 32, %s14
        $region36: #{bottleneck_forward.5} parent=27 // pred_fallthru
          _
      $region28: #{bottleneck_forward.5} parent=5 // pred_fallthru
        _
      %p201 = scmp.le.s32.totalorder 1, %s14
      %p202 = scmp.lt.s32.totalorder %s14, 3
      %p203 = pnand %p201, %p202
      %p204 = pneg %p203
      // Predicated region
      $region37: #{bottleneck_forward.5} parent=5 // pred_check
        _
      $region38: #{bottleneck_forward.5} parent=5 // pred_check_branch
        %206 = sbr.rel (%p203) target = $region40
      $region39: #{bottleneck_forward.5} parent=5 // pred_region
        %s207 = ssub.s32 %s14, 1
        %s208 = smul.u32 32, %s19
        %p209 = scmp.lt.s32.totalorder %s208, 63
        %s210 = scalar_select %p209, %s208, 63
        %s211 = smul.addr %s210, 8
        %s212 = scalar_lea.vmem %s0, %s211
        %p213 = pneg %p40
        %p214 = pneg %p37
        %p215 = pneg %p61
        %p216 = pneg %p58
        %p217 = pneg %p82
        %p218 = pneg %p79
        %p219 = pneg %p103
        %p220 = pneg %p100
        %s221 = smul.u32 32, %s19
        %p222 = scmp.lt.s32.totalorder %s221, 63
        %s223 = scalar_select %p222, %s221, 63
        %s224 = smul.addr %s223, 8
        %s225 = scalar_lea.vmem %s4, %s224
        %p226 = pneg %p129
        %p227 = pneg %p126
        %p228 = pneg %p155
        %p229 = pneg %p152
        %s230 = sand.u32 %s142, 1
        %s231 = scalar_lea.sflag [#allocation3], %s230
        %s232 = sand.u32 %s142, 1
        %s233 = smul.addr %s232, 256
        %s234 = scalar_lea.vmem [#allocation2], %s233
        %s235 = smul.u32 32, %s19
        %p236 = scmp.lt.s32.totalorder %s235, 63
        %s237 = scalar_select %p236, %s235, 63
        %s238 = smul.addr %s237, 8
        %s239 = scalar_lea.vmem %s0, %s238
        %s240 = smul.u32 32, %s19
        %s241 = smul.u32 32, %s19
        %p242 = scmp.lt.s32.totalorder %s241, 63
        %s243 = scalar_select %p242, %s241, 63
        %s244 = smul.addr %s243, 8
        %s245 = scalar_lea.vmem %s4, %s244
        %s246 = smul.u32 32, %s19
        %s247 = smul.u32 32, %s19
        %v248 = vld [vmem:[%s239] sm:$0xff]
        %v249 = vld [vmem:[%s239 + $0x8] sm:$0xff]
        %v250 = vld [vmem:[%s239 + $0x10] sm:$0xff]
        %v251 = vld [vmem:[%s239 + $0x18] sm:$0xff]
        %v252 = vld [vmem:[%s239 + $0x20] sm:$0xff]
        %v253 = vld [vmem:[%s239 + $0x28] sm:$0xff]
        %v254 = vld [vmem:[%s239 + $0x30] sm:$0xff]
        %v255 = vld [vmem:[%s239 + $0x38] sm:$0xff]
        %v256 = vld [vmem:[%s239 + $0x40] sm:$0xff]
        %v257 = vld [vmem:[%s239 + $0x48] sm:$0xff]
        %v258 = vld [vmem:[%s239 + $0x50] sm:$0xff]
        %v259 = vld [vmem:[%s239 + $0x58] sm:$0xff]
        %v260 = vld [vmem:[%s239 + $0x60] sm:$0xff]
        %v261 = vld [vmem:[%s239 + $0x68] sm:$0xff]
        %v262 = vld [vmem:[%s239 + $0x70] sm:$0xff]
        %v263 = vld [vmem:[%s239 + $0x78] sm:$0xff]
        %v264 = vld [vmem:[%s239 + $0x80] sm:$0xff]
        %v265 = vld [vmem:[%s239 + $0x88] sm:$0xff]
        %v266 = vld [vmem:[%s239 + $0x90] sm:$0xff]
        %v267 = vld [vmem:[%s239 + $0x98] sm:$0xff]
        %v268 = vld [vmem:[%s239 + $0xa0] sm:$0xff]
        %v269 = vld [vmem:[%s239 + $0xa8] sm:$0xff]
        %v270 = vld [vmem:[%s239 + $0xb0] sm:$0xff]
        %v271 = vld [vmem:[%s239 + $0xb8] sm:$0xff]
        %v272 = vld [vmem:[%s239 + $0xc0] sm:$0xff]
        %v273 = vld [vmem:[%s239 + $0xc8] sm:$0xff]
        %v274 = vld [vmem:[%s239 + $0xd0] sm:$0xff]
        %v275 = vld [vmem:[%s239 + $0xd8] sm:$0xff]
        %v276 = vld [vmem:[%s239 + $0xe0] sm:$0xff]
        %v277 = vld [vmem:[%s239 + $0xe8] sm:$0xff]
        %v278 = vld [vmem:[%s239 + $0xf0] sm:$0xff]
        %v279 = vld [vmem:[%s239 + $0xf8] sm:$0xff]
        %v280 = vld [vmem:[%s1] sm:$0xff]
        %vm281 = vcmask 64512
        %v283 = vsel %vm281, %v248, 0
        %v286 = vsel %vm281, %v249, 0
        %v289 = vsel %vm281, %v250, 0
        %v292 = vsel %vm281, %v251, 0
        %v295 = vsel %vm281, %v252, 0
        %v298 = vsel %vm281, %v253, 0
        %v301 = vsel %vm281, %v254, 0
        %v304 = vsel %vm281, %v255, 0
        %v307 = vsel %vm281, %v256, 0
        %v310 = vsel %vm281, %v257, 0
        %v313 = vsel %vm281, %v258, 0
        %v316 = vsel %vm281, %v259, 0
        %v319 = vsel %vm281, %v260, 0
        %v322 = vsel %vm281, %v261, 0
        %v325 = vsel %vm281, %v262, 0
        %v328 = vsel %vm281, %v263, 0
        %v331 = vsel %vm281, %v264, 0
        %v334 = vsel %vm281, %v265, 0
        %v337 = vsel %vm281, %v266, 0
        %v340 = vsel %vm281, %v267, 0
        %v343 = vsel %vm281, %v268, 0
        %v346 = vsel %vm281, %v269, 0
        %v349 = vsel %vm281, %v270, 0
        %v352 = vsel %vm281, %v271, 0
        %v355 = vsel %vm281, %v272, 0
        %v358 = vsel %vm281, %v273, 0
        %v361 = vsel %vm281, %v274, 0
        %v364 = vsel %vm281, %v275, 0
        %v367 = vsel %vm281, %v276, 0
        %v370 = vsel %vm281, %v277, 0
        %v373 = vsel %vm281, %v278, 0
        %v376 = vsel %vm281, %v279, 0
        %378 = vmatprep.subr.mxu0 0.0
        %379 = vmatpush1.msra.mxu0 0.0
        %380 = vmatprep.subr.mxu0 0.0
        %381 = vmatpush1.msra.mxu0 0.0
        %382 = vmatprep.subr.mxu0 0.0
        %383 = vmatpush1.msra.mxu0 0.0
        %384 = vmatprep.subr.mxu0 0.0
        %385 = vmatpush1.msra.mxu0 0.0
        %386 = vmatprep.subr.mxu0 0.0
        %387 = vmatpush1.msra.mxu0 0.0
        %388 = vmatprep.subr.mxu0 0.0
        %389 = vmatpush1.msra.mxu0 0.0
        %390 = vmatprep.subr.mxu0 0.0
        %391 = vmatpush1.msra.mxu0 0.0
        %392 = vmatprep.subr.mxu0 0.0
        %393 = vmatpush1.msra.mxu0 0.0
        %394 = vmatprep.subr.mxu0 0.0
        %395 = vmatpush1.msra.mxu0 0.0
        %396 = vmatprep.subr.mxu0 0.0
        %397 = vmatpush1.msra.mxu0 0.0
        %398 = vmatprep.subr.mxu0 0.0
        %399 = vmatpush1.msra.mxu0 0.0
        %400 = vmatprep.subr.mxu0 0.0
        %401 = vmatpush1.msra.mxu0 0.0
        %402 = vmatprep.subr.mxu0 0.0
        %403 = vmatpush1.msra.mxu0 0.0
        %404 = vmatprep.subr.mxu0 0.0
        %405 = vmatpush1.msra.mxu0 0.0
        %406 = vmatprep.subr.mxu0 0.0
        %407 = vmatpush1.msra.mxu0 0.0
        %408 = vmatprep.subr.mxu0 0.0
        %409 = vmatpush1.msra.mxu0 %v280
        %410 = vmatprep.subr.mxu0 0.0
        %411 = vmatpush2.msra.mxu0 0.0
        %412 = vmatprep.subr.mxu0 0.0
        %413 = vmatpush2.msra.mxu0 0.0
        %414 = vmatprep.subr.mxu0 0.0
        %415 = vmatpush2.msra.mxu0 0.0
        %416 = vmatprep.subr.mxu0 0.0
        %417 = vmatpush2.msra.mxu0 0.0
        %418 = vmatprep.subr.mxu0 0.0
        %419 = vmatpush2.msra.mxu0 0.0
        %420 = vmatprep.subr.mxu0 0.0
        %421 = vmatpush2.msra.mxu0 0.0
        %422 = vmatprep.subr.mxu0 0.0
        %423 = vmatpush2.msra.mxu0 0.0
        %424 = vmatprep.subr.mxu0 0.0
        %425 = vmatpush2.msra.mxu0 0.0
        %426 = vmatprep.subr.mxu0 0.0
        %427 = vmatpush2.msra.mxu0 0.0
        %428 = vmatprep.subr.mxu0 0.0
        %429 = vmatpush2.msra.mxu0 0.0
        %430 = vmatprep.subr.mxu0 0.0
        %431 = vmatpush2.msra.mxu0 0.0
        %432 = vmatprep.subr.mxu0 0.0
        %433 = vmatpush2.msra.mxu0 0.0
        %434 = vmatprep.subr.mxu0 0.0
        %435 = vmatpush2.msra.mxu0 0.0
        %436 = vmatprep.subr.mxu0 0.0
        %437 = vmatpush2.msra.mxu0 0.0
        %438 = vmatprep.subr.mxu0 0.0
        %439 = vmatpush2.msra.mxu0 0.0
        %440 = vmatprep.subr.mxu0 0.0
        %441 = vmatpush2.msra.mxu0 0.0
        %442 = vmatprep.mubr.f32.mxu0 0.0
        %443 = vmatmul.mubr.f32.gmra.mxu0 %v283
        %v444 = vpop.f32.mrf.mxu0
        %v445 = vadd.f32 0.0, %v444
        %v446 = vpop.f32.mrf.mxu0
        %447 = vmatprep.mubr.f32.mxu0 0.0
        %448 = vmatmul.mubr.f32.gmra.mxu0 %v286
        %v449 = vpop.f32.mrf.mxu0
        %v450 = vadd.f32 0.0, %v449
        %v451 = vpop.f32.mrf.mxu0
        %452 = vmatprep.mubr.f32.mxu0 0.0
        %453 = vmatmul.mubr.f32.gmra.mxu0 %v289
        %v454 = vpop.f32.mrf.mxu0
        %v455 = vadd.f32 0.0, %v454
        %v456 = vpop.f32.mrf.mxu0
        %457 = vmatprep.mubr.f32.mxu0 0.0
        %458 = vmatmul.mubr.f32.gmra.mxu0 %v292
        %v459 = vpop.f32.mrf.mxu0
        %v460 = vadd.f32 0.0, %v459
        %v461 = vpop.f32.mrf.mxu0
        %462 = vmatprep.mubr.f32.mxu0 0.0
        %463 = vmatmul.mubr.f32.gmra.mxu0 %v295
        %v464 = vpop.f32.mrf.mxu0
        %v465 = vadd.f32 0.0, %v464
        %v466 = vpop.f32.mrf.mxu0
        %467 = vmatprep.mubr.f32.mxu0 0.0
        %468 = vmatmul.mubr.f32.gmra.mxu0 %v298
        %v469 = vpop.f32.mrf.mxu0
        %v470 = vadd.f32 0.0, %v469
        %v471 = vpop.f32.mrf.mxu0
        %472 = vmatprep.mubr.f32.mxu0 0.0
        %473 = vmatmul.mubr.f32.gmra.mxu0 %v301
        %v474 = vpop.f32.mrf.mxu0
        %v475 = vadd.f32 0.0, %v474
        %v476 = vpop.f32.mrf.mxu0
        %477 = vmatprep.mubr.f32.mxu0 0.0
        %478 = vmatmul.mubr.f32.gmra.mxu0 %v304
        %v479 = vpop.f32.mrf.mxu0
        %v480 = vadd.f32 0.0, %v479
        %v481 = vpop.f32.mrf.mxu0
        %482 = vmatprep.mubr.f32.mxu0 0.0
        %483 = vmatmul.mubr.f32.gmra.mxu0 %v307
        %v484 = vpop.f32.mrf.mxu0
        %v485 = vadd.f32 0.0, %v484
        %v486 = vpop.f32.mrf.mxu0
        %487 = vmatprep.mubr.f32.mxu0 0.0
        %488 = vmatmul.mubr.f32.gmra.mxu0 %v310
        %v489 = vpop.f32.mrf.mxu0
        %v490 = vadd.f32 0.0, %v489
        %v491 = vpop.f32.mrf.mxu0
        %492 = vmatprep.mubr.f32.mxu0 0.0
        %493 = vmatmul.mubr.f32.gmra.mxu0 %v313
        %v494 = vpop.f32.mrf.mxu0
        %v495 = vadd.f32 0.0, %v494
        %v496 = vpop.f32.mrf.mxu0
        %497 = vmatprep.mubr.f32.mxu0 0.0
        %498 = vmatmul.mubr.f32.gmra.mxu0 %v316
        %v499 = vpop.f32.mrf.mxu0
        %v500 = vadd.f32 0.0, %v499
        %v501 = vpop.f32.mrf.mxu0
        %502 = vmatprep.mubr.f32.mxu0 0.0
        %503 = vmatmul.mubr.f32.gmra.mxu0 %v319
        %v504 = vpop.f32.mrf.mxu0
        %v505 = vadd.f32 0.0, %v504
        %v506 = vpop.f32.mrf.mxu0
        %507 = vmatprep.mubr.f32.mxu0 0.0
        %508 = vmatmul.mubr.f32.gmra.mxu0 %v322
        %v509 = vpop.f32.mrf.mxu0
        %v510 = vadd.f32 0.0, %v509
        %v511 = vpop.f32.mrf.mxu0
        %512 = vmatprep.mubr.f32.mxu0 0.0
        %513 = vmatmul.mubr.f32.gmra.mxu0 %v325
        %v514 = vpop.f32.mrf.mxu0
        %v515 = vadd.f32 0.0, %v514
        %v516 = vpop.f32.mrf.mxu0
        %517 = vmatprep.mubr.f32.mxu0 0.0
        %518 = vmatmul.mubr.f32.gmra.mxu0 %v328
        %v519 = vpop.f32.mrf.mxu0
        %v520 = vadd.f32 0.0, %v519
        %v521 = vpop.f32.mrf.mxu0
        %522 = vmatprep.mubr.f32.mxu0 0.0
        %523 = vmatmul.mubr.f32.gmra.mxu0 %v331
        %v524 = vpop.f32.mrf.mxu0
        %v525 = vadd.f32 0.0, %v524
        %v526 = vpop.f32.mrf.mxu0
        %527 = vmatprep.mubr.f32.mxu0 0.0
        %528 = vmatmul.mubr.f32.gmra.mxu0 %v334
        %v529 = vpop.f32.mrf.mxu0
        %v530 = vadd.f32 0.0, %v529
        %v531 = vpop.f32.mrf.mxu0
        %532 = vmatprep.mubr.f32.mxu0 0.0
        %533 = vmatmul.mubr.f32.gmra.mxu0 %v337
        %v534 = vpop.f32.mrf.mxu0
        %v535 = vadd.f32 0.0, %v534
        %v536 = vpop.f32.mrf.mxu0
        %537 = vmatprep.mubr.f32.mxu0 0.0
        %538 = vmatmul.mubr.f32.gmra.mxu0 %v340
        %v539 = vpop.f32.mrf.mxu0
        %v540 = vadd.f32 0.0, %v539
        %v541 = vpop.f32.mrf.mxu0
        %542 = vmatprep.mubr.f32.mxu0 0.0
        %543 = vmatmul.mubr.f32.gmra.mxu0 %v343
        %v544 = vpop.f32.mrf.mxu0
        %v545 = vadd.f32 0.0, %v544
        %v546 = vpop.f32.mrf.mxu0
        %547 = vmatprep.mubr.f32.mxu0 0.0
        %548 = vmatmul.mubr.f32.gmra.mxu0 %v346
        %v549 = vpop.f32.mrf.mxu0
        %v550 = vadd.f32 0.0, %v549
        %v551 = vpop.f32.mrf.mxu0
        %552 = vmatprep.mubr.f32.mxu0 0.0
        %553 = vmatmul.mubr.f32.gmra.mxu0 %v349
        %v554 = vpop.f32.mrf.mxu0
        %v555 = vadd.f32 0.0, %v554
        %v556 = vpop.f32.mrf.mxu0
        %557 = vmatprep.mubr.f32.mxu0 0.0
        %558 = vmatmul.mubr.f32.gmra.mxu0 %v352
        %v559 = vpop.f32.mrf.mxu0
        %v560 = vadd.f32 0.0, %v559
        %v561 = vpop.f32.mrf.mxu0
        %562 = vmatprep.mubr.f32.mxu0 0.0
        %563 = vmatmul.mubr.f32.gmra.mxu0 %v355
        %v564 = vpop.f32.mrf.mxu0
        %v565 = vadd.f32 0.0, %v564
        %v566 = vpop.f32.mrf.mxu0
        %567 = vmatprep.mubr.f32.mxu0 0.0
        %568 = vmatmul.mubr.f32.gmra.mxu0 %v358
        %v569 = vpop.f32.mrf.mxu0
        %v570 = vadd.f32 0.0, %v569
        %v571 = vpop.f32.mrf.mxu0
        %572 = vmatprep.mubr.f32.mxu0 0.0
        %573 = vmatmul.mubr.f32.gmra.mxu0 %v361
        %v574 = vpop.f32.mrf.mxu0
        %v575 = vadd.f32 0.0, %v574
        %v576 = vpop.f32.mrf.mxu0
        %577 = vmatprep.mubr.f32.mxu0 0.0
        %578 = vmatmul.mubr.f32.gmra.mxu0 %v364
        %v579 = vpop.f32.mrf.mxu0
        %v580 = vadd.f32 0.0, %v579
        %v581 = vpop.f32.mrf.mxu0
        %582 = vmatprep.mubr.f32.mxu0 0.0
        %583 = vmatmul.mubr.f32.gmra.mxu0 %v367
        %v584 = vpop.f32.mrf.mxu0
        %v585 = vadd.f32 0.0, %v584
        %v586 = vpop.f32.mrf.mxu0
        %587 = vmatprep.mubr.f32.mxu0 0.0
        %588 = vmatmul.mubr.f32.gmra.mxu0 %v370
        %v589 = vpop.f32.mrf.mxu0
        %v590 = vadd.f32 0.0, %v589
        %v591 = vpop.f32.mrf.mxu0
        %592 = vmatprep.mubr.f32.mxu0 0.0
        %593 = vmatmul.mubr.f32.gmra.mxu0 %v373
        %v594 = vpop.f32.mrf.mxu0
        %v595 = vadd.f32 0.0, %v594
        %v596 = vpop.f32.mrf.mxu0
        %597 = vmatprep.mubr.f32.mxu0 0.0
        %598 = vmatmul.mubr.f32.gmra.mxu0 %v376
        %v599 = vpop.f32.mrf.mxu0
        %v600 = vadd.f32 0.0, %v599
        %v601 = vpop.f32.mrf.mxu0
        %602 = vdwg.mxu0
        %v603 = vld [vmem:[%s2] sm:$0x1]
        %v605 = vlaneseq
        %v606 = vshrl.u32 %v605, 7
        %v607 = vsub.s32 0, %v606
        %v608 = vrot.slane %v603, %v607
        %v610 = vmul.f32 %v445, %v608
        %v611 = vmul.f32 %v450, %v608
        %v612 = vmul.f32 %v455, %v608
        %v613 = vmul.f32 %v460, %v608
        %v614 = vmul.f32 %v465, %v608
        %v615 = vmul.f32 %v470, %v608
        %v616 = vmul.f32 %v475, %v608
        %v617 = vmul.f32 %v480, %v608
        %v618 = vmul.f32 %v485, %v608
        %v619 = vmul.f32 %v490, %v608
        %v620 = vmul.f32 %v495, %v608
        %v621 = vmul.f32 %v500, %v608
        %v622 = vmul.f32 %v505, %v608
        %v623 = vmul.f32 %v510, %v608
        %v624 = vmul.f32 %v515, %v608
        %v625 = vmul.f32 %v520, %v608
        %v626 = vmul.f32 %v525, %v608
        %v627 = vmul.f32 %v530, %v608
        %v628 = vmul.f32 %v535, %v608
        %v629 = vmul.f32 %v540, %v608
        %v630 = vmul.f32 %v545, %v608
        %v631 = vmul.f32 %v550, %v608
        %v632 = vmul.f32 %v555, %v608
        %v633 = vmul.f32 %v560, %v608
        %v634 = vmul.f32 %v565, %v608
        %v635 = vmul.f32 %v570, %v608
        %v636 = vmul.f32 %v575, %v608
        %v637 = vmul.f32 %v580, %v608
        %v638 = vmul.f32 %v585, %v608
        %v639 = vmul.f32 %v590, %v608
        %v640 = vmul.f32 %v595, %v608
        %v641 = vmul.f32 %v600, %v608
        %v642 = vld [vmem:[%s3] sm:$0x1]
        %v644 = vlaneseq
        %v645 = vshrl.u32 %v644, 7
        %v646 = vsub.s32 0, %v645
        %v647 = vrot.slane %v642, %v646
        %v649 = vadd.f32 %v610, %v647
        %v650 = vadd.f32 %v611, %v647
        %v651 = vadd.f32 %v612, %v647
        %v652 = vadd.f32 %v613, %v647
        %v653 = vadd.f32 %v614, %v647
        %v654 = vadd.f32 %v615, %v647
        %v655 = vadd.f32 %v616, %v647
        %v656 = vadd.f32 %v617, %v647
        %v657 = vadd.f32 %v618, %v647
        %v658 = vadd.f32 %v619, %v647
        %v659 = vadd.f32 %v620, %v647
        %v660 = vadd.f32 %v621, %v647
        %v661 = vadd.f32 %v622, %v647
        %v662 = vadd.f32 %v623, %v647
        %v663 = vadd.f32 %v624, %v647
        %v664 = vadd.f32 %v625, %v647
        %v665 = vadd.f32 %v626, %v647
        %v666 = vadd.f32 %v627, %v647
        %v667 = vadd.f32 %v628, %v647
        %v668 = vadd.f32 %v629, %v647
        %v669 = vadd.f32 %v630, %v647
        %v670 = vadd.f32 %v631, %v647
        %v671 = vadd.f32 %v632, %v647
        %v672 = vadd.f32 %v633, %v647
        %v673 = vadd.f32 %v634, %v647
        %v674 = vadd.f32 %v635, %v647
        %v675 = vadd.f32 %v636, %v647
        %v676 = vadd.f32 %v637, %v647
        %v677 = vadd.f32 %v638, %v647
        %v678 = vadd.f32 %v639, %v647
        %v679 = vadd.f32 %v640, %v647
        %v680 = vadd.f32 %v641, %v647
        %v681 = vld [vmem:[%s245] sm:$0xff]
        %v682 = vld [vmem:[%s245 + $0x8] sm:$0xff]
        %v683 = vld [vmem:[%s245 + $0x10] sm:$0xff]
        %v684 = vld [vmem:[%s245 + $0x18] sm:$0xff]
        %v685 = vld [vmem:[%s245 + $0x20] sm:$0xff]
        %v686 = vld [vmem:[%s245 + $0x28] sm:$0xff]
        %v687 = vld [vmem:[%s245 + $0x30] sm:$0xff]
        %v688 = vld [vmem:[%s245 + $0x38] sm:$0xff]
        %v689 = vld [vmem:[%s245 + $0x40] sm:$0xff]
        %v690 = vld [vmem:[%s245 + $0x48] sm:$0xff]
        %v691 = vld [vmem:[%s245 + $0x50] sm:$0xff]
        %v692 = vld [vmem:[%s245 + $0x58] sm:$0xff]
        %v693 = vld [vmem:[%s245 + $0x60] sm:$0xff]
        %v694 = vld [vmem:[%s245 + $0x68] sm:$0xff]
        %v695 = vld [vmem:[%s245 + $0x70] sm:$0xff]
        %v696 = vld [vmem:[%s245 + $0x78] sm:$0xff]
        %v697 = vld [vmem:[%s245 + $0x80] sm:$0xff]
        %v698 = vld [vmem:[%s245 + $0x88] sm:$0xff]
        %v699 = vld [vmem:[%s245 + $0x90] sm:$0xff]
        %v700 = vld [vmem:[%s245 + $0x98] sm:$0xff]
        %v701 = vld [vmem:[%s245 + $0xa0] sm:$0xff]
        %v702 = vld [vmem:[%s245 + $0xa8] sm:$0xff]
        %v703 = vld [vmem:[%s245 + $0xb0] sm:$0xff]
        %v704 = vld [vmem:[%s245 + $0xb8] sm:$0xff]
        %v705 = vld [vmem:[%s245 + $0xc0] sm:$0xff]
        %v706 = vld [vmem:[%s245 + $0xc8] sm:$0xff]
        %v707 = vld [vmem:[%s245 + $0xd0] sm:$0xff]
        %v708 = vld [vmem:[%s245 + $0xd8] sm:$0xff]
        %v709 = vld [vmem:[%s245 + $0xe0] sm:$0xff]
        %v710 = vld [vmem:[%s245 + $0xe8] sm:$0xff]
        %v711 = vld [vmem:[%s245 + $0xf0] sm:$0xff]
        %v712 = vld [vmem:[%s245 + $0xf8] sm:$0xff]
        %v713 = vadd.f32 %v649, %v681
        %v714 = vadd.f32 %v650, %v682
        %v715 = vadd.f32 %v651, %v683
        %v716 = vadd.f32 %v652, %v684
        %v717 = vadd.f32 %v653, %v685
        %v718 = vadd.f32 %v654, %v686
        %v719 = vadd.f32 %v655, %v687
        %v720 = vadd.f32 %v656, %v688
        %v721 = vadd.f32 %v657, %v689
        %v722 = vadd.f32 %v658, %v690
        %v723 = vadd.f32 %v659, %v691
        %v724 = vadd.f32 %v660, %v692
        %v725 = vadd.f32 %v661, %v693
        %v726 = vadd.f32 %v662, %v694
        %v727 = vadd.f32 %v663, %v695
        %v728 = vadd.f32 %v664, %v696
        %v729 = vadd.f32 %v665, %v697
        %v730 = vadd.f32 %v666, %v698
        %v731 = vadd.f32 %v667, %v699
        %v732 = vadd.f32 %v668, %v700
        %v733 = vadd.f32 %v669, %v701
        %v734 = vadd.f32 %v670, %v702
        %v735 = vadd.f32 %v671, %v703
        %v736 = vadd.f32 %v672, %v704
        %v737 = vadd.f32 %v673, %v705
        %v738 = vadd.f32 %v674, %v706
        %v739 = vadd.f32 %v675, %v707
        %v740 = vadd.f32 %v676, %v708
        %v741 = vadd.f32 %v677, %v709
        %v742 = vadd.f32 %v678, %v710
        %v743 = vadd.f32 %v679, %v711
        %v744 = vadd.f32 %v680, %v712
        %v745 = vmax.f32 %v713, 0.0
        %v746 = vmax.f32 %v714, 0.0
        %v747 = vmax.f32 %v715, 0.0
        %v748 = vmax.f32 %v716, 0.0
        %v749 = vmax.f32 %v717, 0.0
        %v750 = vmax.f32 %v718, 0.0
        %v751 = vmax.f32 %v719, 0.0
        %v752 = vmax.f32 %v720, 0.0
        %v753 = vmax.f32 %v721, 0.0
        %v754 = vmax.f32 %v722, 0.0
        %v755 = vmax.f32 %v723, 0.0
        %v756 = vmax.f32 %v724, 0.0
        %v757 = vmax.f32 %v725, 0.0
        %v758 = vmax.f32 %v726, 0.0
        %v759 = vmax.f32 %v727, 0.0
        %v760 = vmax.f32 %v728, 0.0
        %v761 = vmax.f32 %v729, 0.0
        %v762 = vmax.f32 %v730, 0.0
        %v763 = vmax.f32 %v731, 0.0
        %v764 = vmax.f32 %v732, 0.0
        %v765 = vmax.f32 %v733, 0.0
        %v766 = vmax.f32 %v734, 0.0
        %v767 = vmax.f32 %v735, 0.0
        %v768 = vmax.f32 %v736, 0.0
        %v769 = vmax.f32 %v737, 0.0
        %v770 = vmax.f32 %v738, 0.0
        %v771 = vmax.f32 %v739, 0.0
        %v772 = vmax.f32 %v740, 0.0
        %v773 = vmax.f32 %v741, 0.0
        %v774 = vmax.f32 %v742, 0.0
        %v775 = vmax.f32 %v743, 0.0
        %v776 = vmax.f32 %v744, 0.0
        %vm777 = vcmask 261120
        %778 = vst.msk [vmem:[%s234] sm:$0xff] %vm777, %v745
        %779 = vst.msk [vmem:[%s234 + $0x8] sm:$0xff] %vm777, %v746
        %780 = vst.msk [vmem:[%s234 + $0x10] sm:$0xff] %vm777, %v747
        %781 = vst.msk [vmem:[%s234 + $0x18] sm:$0xff] %vm777, %v748
        %782 = vst.msk [vmem:[%s234 + $0x20] sm:$0xff] %vm777, %v749
        %783 = vst.msk [vmem:[%s234 + $0x28] sm:$0xff] %vm777, %v750
        %784 = vst.msk [vmem:[%s234 + $0x30] sm:$0xff] %vm777, %v751
        %785 = vst.msk [vmem:[%s234 + $0x38] sm:$0xff] %vm777, %v752
        %786 = vst.msk [vmem:[%s234 + $0x40] sm:$0xff] %vm777, %v753
        %787 = vst.msk [vmem:[%s234 + $0x48] sm:$0xff] %vm777, %v754
        %788 = vst.msk [vmem:[%s234 + $0x50] sm:$0xff] %vm777, %v755
        %789 = vst.msk [vmem:[%s234 + $0x58] sm:$0xff] %vm777, %v756
        %790 = vst.msk [vmem:[%s234 + $0x60] sm:$0xff] %vm777, %v757
        %791 = vst.msk [vmem:[%s234 + $0x68] sm:$0xff] %vm777, %v758
        %792 = vst.msk [vmem:[%s234 + $0x70] sm:$0xff] %vm777, %v759
        %793 = vst.msk [vmem:[%s234 + $0x78] sm:$0xff] %vm777, %v760
        %794 = vst.msk [vmem:[%s234 + $0x80] sm:$0xff] %vm777, %v761
        %795 = vst.msk [vmem:[%s234 + $0x88] sm:$0xff] %vm777, %v762
        %796 = vst.msk [vmem:[%s234 + $0x90] sm:$0xff] %vm777, %v763
        %797 = vst.msk [vmem:[%s234 + $0x98] sm:$0xff] %vm777, %v764
        %798 = vst.msk [vmem:[%s234 + $0xa0] sm:$0xff] %vm777, %v765
        %799 = vst.msk [vmem:[%s234 + $0xa8] sm:$0xff] %vm777, %v766
        %800 = vst.msk [vmem:[%s234 + $0xb0] sm:$0xff] %vm777, %v767
        %801 = vst.msk [vmem:[%s234 + $0xb8] sm:$0xff] %vm777, %v768
        %802 = vst.msk [vmem:[%s234 + $0xc0] sm:$0xff] %vm777, %v769
        %803 = vst.msk [vmem:[%s234 + $0xc8] sm:$0xff] %vm777, %v770
        %804 = vst.msk [vmem:[%s234 + $0xd0] sm:$0xff] %vm777, %v771
        %805 = vst.msk [vmem:[%s234 + $0xd8] sm:$0xff] %vm777, %v772
        %806 = vst.msk [vmem:[%s234 + $0xe0] sm:$0xff] %vm777, %v773
        %807 = vst.msk [vmem:[%s234 + $0xe8] sm:$0xff] %vm777, %v774
        %808 = vst.msk [vmem:[%s234 + $0xf0] sm:$0xff] %vm777, %v775
        %809 = vst.msk [vmem:[%s234 + $0xf8] sm:$0xff] %vm777, %v776
        %s810 = sand.u32 %s142, 1
        %s811 = scalar_lea.sflag [#allocation3], %s810
        %s812 = sand.u32 %s142, 1
        %s813 = smul.addr %s812, 256
        %s814 = scalar_lea.vmem [#allocation2], %s813
        // Predicated region
        $region41: #{bottleneck_forward.5} parent=39 // pred_check
          %p815 = pneg %p152
        $region42: #{bottleneck_forward.5} parent=39 // pred_check_branch
          %817 = sbr.rel (%p815) target = $region44
        $region43: #{bottleneck_forward.5} parent=39 // pred_region
          %s818 = smul.u32 32, %s19
          %s820 = ssub.s32 4096, 4096
          %821 = vsyncadd %s811, %s820
          %s822 = smul.addr %s818, 128
          %s823 = scalar_lea.hbm %s5, %s822
          %s824 = sshll.u32 %s814, 4
          %s825 = int_to_ptr.vmem [resolvable:$true] %s824
          %830 = dma.vmem_to_hbm [thread:$0]  %s825, 4096, %s823, %s811, 128, 128, 8
        $region44: #{bottleneck_forward.5} parent=39 // pred_fallthru
          _
      $region40: #{bottleneck_forward.5} parent=5 // pred_fallthru
        _
      %p831 = scmp.le.s32.totalorder 2, %s14
      // Predicated region
      $region45: #{bottleneck_forward.5} parent=5 // pred_check
        %p832 = pneg %p831
      $region46: #{bottleneck_forward.5} parent=5 // pred_check_branch
        %834 = sbr.rel (%p832) target = $region48
      $region47: #{bottleneck_forward.5} parent=5 // pred_region
        %s835 = ssub.s32 %s14, 2
        // Predicated region
        $region49: #{bottleneck_forward.5} parent=47 // pred_check
          %p836 = pneg %p158
        $region50: #{bottleneck_forward.5} parent=47 // pred_check_branch
          %838 = sbr.rel (%p836) target = $region52
        $region51: #{bottleneck_forward.5} parent=47 // pred_region
          %s839 = sand.u32 %s143, 1
          %s840 = scalar_lea.sflag [#allocation3], %s839
          %s841 = sand.u32 %s143, 1
          %s842 = smul.addr %s841, 256
          %s843 = scalar_lea.vmem [#allocation2], %s842
          %844 = dma.done %s840, 4096
        $region52: #{bottleneck_forward.5} parent=47 // pred_fallthru
          _
      $region48: #{bottleneck_forward.5} parent=5 // pred_fallthru
        _
    $region6: #{bottleneck_forward.5} parent=1 // loop_footer
      %s18 = sadd.s32 1, %s14
    $region7: #{bottleneck_forward.5} parent=1 // loop_footer_branch
      %13 = sbr.rel target = $region3
    $region8: #{bottleneck_forward.5} parent=1 // loop_exit
      _
    %845 = vsyncpa [#allocation3], 1
    %s846 = scalar_lea.sflag [#allocation3], 1
    %847 = vsyncpa %s846, 1

// kernel: bottleneck_forward.4
$region0: #{bottleneck_forward.4}
  #allocation0 [shape = 'u32[]', space=smem, size = 0x4, offset = 0x4, fixed_abs, tag = 'smem constant byte address 0x4 - core index']
  #allocation1 [shape = 'u32[144,128]{1,0:T(1,128)}', space=vmem, size = 0x12000, scoped, tag = 'internal scratch']
  %s0 = inlined_call_operand.vmem [shape: f32[2,342,8], index: 0, kind: input, shape index: {}]
  %s1 = inlined_call_operand.vmem [shape: f32[9,8,8], index: 1, kind: input, shape index: {}]
  %s2 = inlined_call_operand.vmem [shape: f32[1,8], index: 2, kind: input, shape index: {}]
  %s3 = inlined_call_operand.vmem [shape: f32[1,8], index: 3, kind: input, shape index: {}]
  %s4 = inlined_call_operand.vmem [shape: f32[2,288,8], index: 4, kind: output, shape index: {}]
  %s5 = sld [smem:[#allocation0]]
  $region49: #{bottleneck_forward.4} parent=0
    _
  %s7 = ssub.s32 1, %s5
  %s8 = scalar_select 0, %s7, %s5
  loop: start=0, step=1, limit=4
  $region2: #{bottleneck_forward.4} parent=0 // loop_pre_header
    _
  $region3: #{bottleneck_forward.4} parent=0 // loop_header
    %s10 = sphi 0, %s14
    %p11 = scmp.ge.s32.totalorder %s10, 4
    %s20 = sphi 0, %s22
    %s23 = sphi 0, %s20
    %s24 = sphi 0, %s23
    %s40 = sphi 0, %s24
    %s44 = sphi 0, %s44
    %s46 = sphi 0, %s44
    %s47 = sphi 0, %s46
    %s61 = sphi 0, %s47
    %s65 = sphi 0, %s65
    %s67 = sphi 0, %s65
    %s68 = sphi 0, %s67
    %s82 = sphi 0, %s68
    %s86 = sphi 0, %s86
    %s88 = sphi 0, %s86
    %s89 = sphi 0, %s88
    %s103 = sphi 0, %s89
    %s109 = sphi 0, %s111
    %s112 = sphi 0, %s109
    %s113 = sphi 0, %s112
    %s129 = sphi 0, %s113
  $region4: #{bottleneck_forward.4} parent=0 // loop_header_branch
    %13 = sbr.rel (%p11) target = $region8
  $region5: #{bottleneck_forward.4} parent=0 // loop_body
    %s15 = ssub.s32 %s10, 1
    %s16 = ssub.s32 %s10, 2
    %s17 = sadd.s32 %s10, 1
    %s18 = ssub.s32 %s10, %s17
    %p19 = scmp.eq.s32.totalorder %s18, 0
    %s21 = sadd.s32 %s20, 1
    %s22 = scalar_select %p19, %s20, %s21
    %p25 = pneg %p19
    %p26 = scmp.eq.s32.totalorder %s10, 1
    %p27 = por %p25, %p26
    %p28 = scmp.ne.s32.totalorder %s20, %s23
    %p29 = scmp.eq.s32.totalorder %s10, 0
    %p30 = por %p28, %p29
    %p31 = scmp.ne.s32.totalorder %s20, %s23
    %p32 = scmp.eq.s32.totalorder %s15, 1
    %p33 = por %p31, %p32
    %p34 = scmp.ne.s32.totalorder %s23, %s24
    %p35 = scmp.eq.s32.totalorder %s15, 0
    %p36 = por %p34, %p35
    %p37 = scmp.ne.s32.totalorder %s23, %s24
    %p38 = scmp.eq.s32.totalorder %s16, 1
    %p39 = por %p37, %p38
    %p41 = scmp.ne.s32.totalorder %s24, %s40
    %p42 = scmp.eq.s32.totalorder %s16, 0
    %p43 = por %p41, %p42
    %s45 = sadd.s32 %s44, 1
    %p48 = scmp.eq.s32.totalorder %s10, 1
    %p49 = scmp.ne.s32.totalorder %s44, %s46
    %p50 = scmp.eq.s32.totalorder %s10, 0
    %p51 = por %p49, %p50
    %p52 = scmp.ne.s32.totalorder %s44, %s46
    %p53 = scmp.eq.s32.totalorder %s15, 1
    %p54 = por %p52, %p53
    %p55 = scmp.ne.s32.totalorder %s46, %s47
    %p56 = scmp.eq.s32.totalorder %s15, 0
    %p57 = por %p55, %p56
    %p58 = scmp.ne.s32.totalorder %s46, %s47
    %p59 = scmp.eq.s32.totalorder %s16, 1
    %p60 = por %p58, %p59
    %p62 = scmp.ne.s32.totalorder %s47, %s61
    %p63 = scmp.eq.s32.totalorder %s16, 0
    %p64 = por %p62, %p63
    %s66 = sadd.s32 %s65, 1
    %p69 = scmp.eq.s32.totalorder %s10, 1
    %p70 = scmp.ne.s32.totalorder %s65, %s67
    %p71 = scmp.eq.s32.totalorder %s10, 0
    %p72 = por %p70, %p71
    %p73 = scmp.ne.s32.totalorder %s65, %s67
    %p74 = scmp.eq.s32.totalorder %s15, 1
    %p75 = por %p73, %p74
    %p76 = scmp.ne.s32.totalorder %s67, %s68
    %p77 = scmp.eq.s32.totalorder %s15, 0
    %p78 = por %p76, %p77
    %p79 = scmp.ne.s32.totalorder %s67, %s68
    %p80 = scmp.eq.s32.totalorder %s16, 1
    %p81 = por %p79, %p80
    %p83 = scmp.ne.s32.totalorder %s68, %s82
    %p84 = scmp.eq.s32.totalorder %s16, 0
    %p85 = por %p83, %p84
    %s87 = sadd.s32 %s86, 1
    %p90 = scmp.eq.s32.totalorder %s10, 1
    %p91 = scmp.ne.s32.totalorder %s86, %s88
    %p92 = scmp.eq.s32.totalorder %s10, 0
    %p93 = por %p91, %p92
    %p94 = scmp.ne.s32.totalorder %s86, %s88
    %p95 = scmp.eq.s32.totalorder %s15, 1
    %p96 = por %p94, %p95
    %p97 = scmp.ne.s32.totalorder %s88, %s89
    %p98 = scmp.eq.s32.totalorder %s15, 0
    %p99 = por %p97, %p98
    %p100 = scmp.ne.s32.totalorder %s88, %s89
    %p101 = scmp.eq.s32.totalorder %s16, 1
    %p102 = por %p100, %p101
    %p104 = scmp.ne.s32.totalorder %s89, %s103
    %p105 = scmp.eq.s32.totalorder %s16, 0
    %p106 = por %p104, %p105
    %s107 = ssub.s32 %s10, %s17
    %p108 = scmp.eq.s32.totalorder %s107, 0
    %s110 = sadd.s32 %s109, 1
    %s111 = scalar_select %p108, %s109, %s110
    %p114 = pneg %p108
    %p115 = scmp.eq.s32.totalorder %s10, 1
    %p116 = por %p114, %p115
    %p117 = scmp.ne.s32.totalorder %s109, %s112
    %p118 = scmp.eq.s32.totalorder %s10, 0
    %p119 = por %p117, %p118
    %p120 = scmp.ne.s32.totalorder %s109, %s112
    %p121 = scmp.eq.s32.totalorder %s15, 1
    %p122 = por %p120, %p121
    %p123 = scmp.ne.s32.totalorder %s112, %s113
    %p124 = scmp.eq.s32.totalorder %s15, 0
    %p125 = por %p123, %p124
    %p126 = scmp.ne.s32.totalorder %s112, %s113
    %p127 = scmp.eq.s32.totalorder %s16, 1
    %p128 = por %p126, %p127
    %p130 = scmp.ne.s32.totalorder %s113, %s129
    %p131 = scmp.eq.s32.totalorder %s16, 0
    %p132 = por %p130, %p131
    %p133 = scmp.le.s32.totalorder 1, %s10
    %p134 = scmp.lt.s32.totalorder %s10, 3
    %p135 = pnand %p133, %p134
    %p136 = pneg %p135
    // Predicated region
    $region9: #{bottleneck_forward.4} parent=5 // pred_check
      _
    $region10: #{bottleneck_forward.4} parent=5 // pred_check_branch
      %138 = sbr.rel (%p135) target = $region12
    $region11: #{bottleneck_forward.4} parent=5 // pred_region
      %s139 = ssub.s32 %s10, 1
      // Predicated region
      $region13: #{bottleneck_forward.4} parent=11 // pred_check
        %p140 = pneg %p57
      $region14: #{bottleneck_forward.4} parent=11 // pred_check_branch
        %142 = sbr.rel (%p140) target = $region16
      $region15: #{bottleneck_forward.4} parent=11 // pred_region
        _
      $region16: #{bottleneck_forward.4} parent=11 // pred_fallthru
        _
      // Predicated region
      $region17: #{bottleneck_forward.4} parent=11 // pred_check
        %p143 = pneg %p78
      $region18: #{bottleneck_forward.4} parent=11 // pred_check_branch
        %145 = sbr.rel (%p143) target = $region20
      $region19: #{bottleneck_forward.4} parent=11 // pred_region
        _
      $region20: #{bottleneck_forward.4} parent=11 // pred_fallthru
        _
      // Predicated region
      $region21: #{bottleneck_forward.4} parent=11 // pred_check
        %p146 = pneg %p99
      $region22: #{bottleneck_forward.4} parent=11 // pred_check_branch
        %148 = sbr.rel (%p146) target = $region24
      $region23: #{bottleneck_forward.4} parent=11 // pred_region
        _
      $region24: #{bottleneck_forward.4} parent=11 // pred_fallthru
        _
    $region12: #{bottleneck_forward.4} parent=5 // pred_fallthru
      _
    %p149 = scmp.lt.s32.totalorder %s10, 2
    // Predicated region
    $region25: #{bottleneck_forward.4} parent=5 // pred_check
      %p150 = pneg %p149
    $region26: #{bottleneck_forward.4} parent=5 // pred_check_branch
      %152 = sbr.rel (%p150) target = $region28
    $region27: #{bottleneck_forward.4} parent=5 // pred_region
      // Predicated region
      $region29: #{bottleneck_forward.4} parent=27 // pred_check
        %p153 = pneg %p30
      $region30: #{bottleneck_forward.4} parent=27 // pred_check_branch
        %155 = sbr.rel (%p153) target = $region32
      $region31: #{bottleneck_forward.4} parent=27 // pred_region
        %p156 = scmp.lt.s32.totalorder %s10, 1
        %s157 = scalar_select %p156, %s10, 1
        %s158 = smul.addr %s157, 43
        %s159 = smul.addr %s158, 8
        %s160 = scalar_lea.vmem %s0, %s159
      $region32: #{bottleneck_forward.4} parent=27 // pred_fallthru
        _
    $region28: #{bottleneck_forward.4} parent=5 // pred_fallthru
      _
    %p161 = scmp.le.s32.totalorder 1, %s10
    %p162 = scmp.lt.s32.totalorder %s10, 3
    %p163 = pnand %p161, %p162
    %p164 = pneg %p163
    // Predicated region
    $region33: #{bottleneck_forward.4} parent=5 // pred_check
      _
    $region34: #{bottleneck_forward.4} parent=5 // pred_check_branch
      %166 = sbr.rel (%p163) target = $region36
    $region35: #{bottleneck_forward.4} parent=5 // pred_region
      %s167 = ssub.s32 %s10, 1
      %p168 = scmp.lt.s32.totalorder %s15, 1
      %s169 = scalar_select %p168, %s15, 1
      %s170 = smul.addr %s169, 43
      %s171 = smul.addr %s170, 8
      %s172 = scalar_lea.vmem %s0, %s171
      %p173 = pneg %p36
      %p174 = pneg %p33
      %p175 = pneg %p57
      %p176 = pneg %p54
      %p177 = pneg %p78
      %p178 = pneg %p75
      %p179 = pneg %p99
      %p180 = pneg %p96
      %p181 = pneg %p125
      %p182 = pneg %p122
      %p183 = scmp.lt.s32.totalorder %s15, 1
      %s184 = scalar_select %p183, %s15, 1
      %s185 = smul.addr %s184, 36
      %s186 = smul.addr %s185, 8
      %s187 = scalar_lea.vmem %s4, %s186
      %p188 = scmp.lt.s32.totalorder %s15, 1
      %s189 = scalar_select %p188, %s15, 1
      %s190 = smul.addr %s189, 43
      %s191 = smul.addr %s190, 8
      %s192 = scalar_lea.vmem %s0, %s191
      %p193 = scmp.lt.s32.totalorder %s15, 1
      %s194 = scalar_select %p193, %s15, 1
      %s195 = smul.addr %s194, 36
      %s196 = smul.addr %s195, 8
      %s197 = scalar_lea.vmem %s4, %s196
      %v198 = vld [vmem:[%s192] sm:$0xff]
      %v199 = vld [vmem:[%s192 + $0x8] sm:$0xff]
      %v200 = vld [vmem:[%s192 + $0x10] sm:$0xff]
      %v201 = vld [vmem:[%s192 + $0x18] sm:$0xff]
      %v202 = vld [vmem:[%s192 + $0x20] sm:$0xff]
      %v203 = vld [vmem:[%s192 + $0x28] sm:$0xff]
      %v204 = vld [vmem:[%s192 + $0x30] sm:$0xff]
      %v205 = vld [vmem:[%s192 + $0x38] sm:$0xff]
      %v206 = vld [vmem:[%s192 + $0x40] sm:$0xff]
      %v207 = vld [vmem:[%s192 + $0x48] sm:$0xff]
      %v208 = vld [vmem:[%s192 + $0x50] sm:$0xff]
      %v209 = vld [vmem:[%s192 + $0x58] sm:$0xff]
      %v210 = vld [vmem:[%s192 + $0x60] sm:$0xff]
      %v211 = vld [vmem:[%s192 + $0x68] sm:$0xff]
      %v212 = vld [vmem:[%s192 + $0x70] sm:$0xff]
      %v213 = vld [vmem:[%s192 + $0x78] sm:$0xff]
      %v214 = vld [vmem:[%s192 + $0x80] sm:$0xff]
      %v215 = vld [vmem:[%s192 + $0x88] sm:$0xff]
      %v216 = vld [vmem:[%s192 + $0x90] sm:$0xff]
      %v217 = vld [vmem:[%s192 + $0x98] sm:$0xff]
      %v218 = vld [vmem:[%s192 + $0xa0] sm:$0xff]
      %v219 = vld [vmem:[%s192 + $0xa8] sm:$0xff]
      %v220 = vld [vmem:[%s192 + $0xb0] sm:$0xff]
      %v221 = vld [vmem:[%s192 + $0xb8] sm:$0xff]
      %v222 = vld [vmem:[%s192 + $0xc0] sm:$0xff]
      %v223 = vld [vmem:[%s192 + $0xc8] sm:$0xff]
      %v224 = vld [vmem:[%s192 + $0xd0] sm:$0xff]
      %v225 = vld [vmem:[%s192 + $0xd8] sm:$0xff]
      %v226 = vld [vmem:[%s192 + $0xe0] sm:$0xff]
      %v227 = vld [vmem:[%s192 + $0xe8] sm:$0xff]
      %v228 = vld [vmem:[%s192 + $0xf0] sm:$0xff]
      %v229 = vld [vmem:[%s192 + $0xf8] sm:$0xff]
      %v230 = vld [vmem:[%s192 + $0x100] sm:$0xff]
      %v231 = vld [vmem:[%s192 + $0x108] sm:$0xff]
      %v232 = vld [vmem:[%s192 + $0x110] sm:$0xff]
      %v233 = vld [vmem:[%s192 + $0x118] sm:$0xff]
      %v234 = vld [vmem:[%s192 + $0x120] sm:$0xff]
      %v235 = vld [vmem:[%s192 + $0x128] sm:$0xff]
      %v236 = vld [vmem:[%s192 + $0x130] sm:$0xff]
      %v237 = vld [vmem:[%s192 + $0x138] sm:$0xff]
      %v238 = vld [vmem:[%s192 + $0x140] sm:$0xff]
      %v239 = vld [vmem:[%s1] sm:$0xff]
      %s240 = scalar_lea.vmem %s1, 8
      %v241 = vld [vmem:[%s240] sm:$0xff]
      %vm279 = vcmask 1046528
      %v280 = vrot.slane %v198, 1
      %v281 = vrot.slane %v199, 1
      %v282 = vsel %vm279, %v280, %v281
      %v283 = vrot.slane %v200, 1
      %v284 = vsel %vm279, %v281, %v283
      %v285 = vrot.slane %v201, 1
      %v286 = vsel %vm279, %v283, %v285
      %v287 = vrot.slane %v202, 1
      %v288 = vsel %vm279, %v285, %v287
      %v289 = vrot.slane %v203, 1
      %v290 = vsel %vm279, %v287, %v289
      %v291 = vrot.slane %v204, 1
      %v292 = vsel %vm279, %v289, %v291
      %v293 = vrot.slane %v205, 1
      %v294 = vsel %vm279, %v291, %v293
      %v295 = vrot.slane %v206, 1
      %v296 = vsel %vm279, %v293, %v295
      %v297 = vrot.slane %v207, 1
      %v298 = vsel %vm279, %v295, %v297
      %v299 = vrot.slane %v208, 1
      %v300 = vsel %vm279, %v297, %v299
      %v301 = vrot.slane %v209, 1
      %v302 = vsel %vm279, %v299, %v301
      %v303 = vrot.slane %v210, 1
      %v304 = vsel %vm279, %v301, %v303
      %v305 = vrot.slane %v211, 1
      %v306 = vsel %vm279, %v303, %v305
      %v307 = vrot.slane %v212, 1
      %v308 = vsel %vm279, %v305, %v307
      %v309 = vrot.slane %v213, 1
      %v310 = vsel %vm279, %v307, %v309
      %v311 = vrot.slane %v214, 1
      %v312 = vsel %vm279, %v309, %v311
      %v313 = vrot.slane %v215, 1
      %v314 = vsel %vm279, %v311, %v313
      %v315 = vrot.slane %v216, 1
      %v316 = vsel %vm279, %v313, %v315
      %v317 = vrot.slane %v217, 1
      %v318 = vsel %vm279, %v315, %v317
      %v319 = vrot.slane %v218, 1
      %v320 = vsel %vm279, %v317, %v319
      %v321 = vrot.slane %v219, 1
      %v322 = vsel %vm279, %v319, %v321
      %v323 = vrot.slane %v220, 1
      %v324 = vsel %vm279, %v321, %v323
      %v325 = vrot.slane %v221, 1
      %v326 = vsel %vm279, %v323, %v325
      %v327 = vrot.slane %v222, 1
      %v328 = vsel %vm279, %v325, %v327
      %v329 = vrot.slane %v223, 1
      %v330 = vsel %vm279, %v327, %v329
      %v331 = vrot.slane %v224, 1
      %v332 = vsel %vm279, %v329, %v331
      %v333 = vrot.slane %v225, 1
      %v334 = vsel %vm279, %v331, %v333
      %v335 = vrot.slane %v226, 1
      %v336 = vsel %vm279, %v333, %v335
      %v337 = vrot.slane %v227, 1
      %v338 = vsel %vm279, %v335, %v337
      %v339 = vrot.slane %v228, 1
      %v340 = vsel %vm279, %v337, %v339
      %v341 = vrot.slane %v229, 1
      %v342 = vsel %vm279, %v339, %v341
      %v343 = vrot.slane %v230, 1
      %v344 = vsel %vm279, %v341, %v343
      %v345 = vrot.slane %v231, 1
      %v346 = vsel %vm279, %v343, %v345
      %v347 = vrot.slane %v232, 1
      %v348 = vsel %vm279, %v345, %v347
      %v349 = vrot.slane %v233, 1
      %v350 = vsel %vm279, %v347, %v349
      %v351 = vrot.slane %v234, 1
      %v352 = vsel %vm279, %v349, %v351
      %vm353 = vcmask 64512
      %v354 = vsel %vm353, %v282, 0
      %v356 = vsel %vm353, %v284, 0
      %v358 = vsel %vm353, %v286, 0
      %v360 = vsel %vm353, %v288, 0
      %v362 = vsel %vm353, %v290, 0
      %v364 = vsel %vm353, %v292, 0
      %v366 = vsel %vm353, %v294, 0
      %v368 = vsel %vm353, %v296, 0
      %v370 = vsel %vm353, %v298, 0
      %v372 = vsel %vm353, %v300, 0
      %v374 = vsel %vm353, %v302, 0
      %v376 = vsel %vm353, %v304, 0
      %v378 = vsel %vm353, %v306, 0
      %v380 = vsel %vm353, %v308, 0
      %v382 = vsel %vm353, %v310, 0
      %v384 = vsel %vm353, %v312, 0
      %v386 = vsel %vm353, %v314, 0
      %v388 = vsel %vm353, %v316, 0
      %v390 = vsel %vm353, %v318, 0
      %v392 = vsel %vm353, %v320, 0
      %v394 = vsel %vm353, %v322, 0
      %v396 = vsel %vm353, %v324, 0
      %v398 = vsel %vm353, %v326, 0
      %v400 = vsel %vm353, %v328, 0
      %v402 = vsel %vm353, %v330, 0
      %v404 = vsel %vm353, %v332, 0
      %v406 = vsel %vm353, %v334, 0
      %v408 = vsel %vm353, %v336, 0
      %v410 = vsel %vm353, %v338, 0
      %v412 = vsel %vm353, %v340, 0
      %v414 = vsel %vm353, %v342, 0
      %v416 = vsel %vm353, %v344, 0
      %v418 = vsel %vm353, %v346, 0
      %v420 = vsel %vm353, %v348, 0
      %v422 = vsel %vm353, %v350, 0
      %v424 = vsel %vm353, %v352, 0
      %426 = vmatprep.subr.mxu0 0.0
      %427 = vmatpush1.msra.mxu0 0.0
      %428 = vmatprep.subr.mxu0 0.0
      %429 = vmatpush1.msra.mxu0 0.0
      %430 = vmatprep.subr.mxu0 0.0
      %431 = vmatpush1.msra.mxu0 0.0
      %432 = vmatprep.subr.mxu0 0.0
      %433 = vmatpush1.msra.mxu0 0.0
      %434 = vmatprep.subr.mxu0 0.0
      %435 = vmatpush1.msra.mxu0 0.0
      %436 = vmatprep.subr.mxu0 0.0
      %437 = vmatpush1.msra.mxu0 0.0
      %438 = vmatprep.subr.mxu0 0.0
      %439 = vmatpush1.msra.mxu0 0.0
      %440 = vmatprep.subr.mxu0 0.0
      %441 = vmatpush1.msra.mxu0 0.0
      %442 = vmatprep.subr.mxu0 0.0
      %443 = vmatpush1.msra.mxu0 0.0
      %444 = vmatprep.subr.mxu0 0.0
      %445 = vmatpush1.msra.mxu0 0.0
      %446 = vmatprep.subr.mxu0 0.0
      %447 = vmatpush1.msra.mxu0 0.0
      %448 = vmatprep.subr.mxu0 0.0
      %449 = vmatpush1.msra.mxu0 0.0
      %450 = vmatprep.subr.mxu0 0.0
      %451 = vmatpush1.msra.mxu0 0.0
      %452 = vmatprep.subr.mxu0 0.0
      %453 = vmatpush1.msra.mxu0 0.0
      %454 = vmatprep.subr.mxu0 0.0
      %455 = vmatpush1.msra.mxu0 0.0
      %456 = vmatprep.subr.mxu0 0.0
      %457 = vmatpush1.msra.mxu0 %v241
      %458 = vmatprep.subr.mxu0 0.0
      %459 = vmatpush2.msra.mxu0 0.0
      %460 = vmatprep.subr.mxu0 0.0
      %461 = vmatpush2.msra.mxu0 0.0
      %462 = vmatprep.subr.mxu0 0.0
      %463 = vmatpush2.msra.mxu0 0.0
      %464 = vmatprep.subr.mxu0 0.0
      %465 = vmatpush2.msra.mxu0 0.0
      %466 = vmatprep.subr.mxu0 0.0
      %467 = vmatpush2.msra.mxu0 0.0
      %468 = vmatprep.subr.mxu0 0.0
      %469 = vmatpush2.msra.mxu0 0.0
      %470 = vmatprep.subr.mxu0 0.0
      %471 = vmatpush2.msra.mxu0 0.0
      %472 = vmatprep.subr.mxu0 0.0
      %473 = vmatpush2.msra.mxu0 0.0
      %474 = vmatprep.subr.mxu0 0.0
      %475 = vmatpush2.msra.mxu0 0.0
      %476 = vmatprep.subr.mxu0 0.0
      %477 = vmatpush2.msra.mxu0 0.0
      %478 = vmatprep.subr.mxu0 0.0
      %479 = vmatpush2.msra.mxu0 0.0
      %480 = vmatprep.subr.mxu0 0.0
      %481 = vmatpush2.msra.mxu0 0.0
      %482 = vmatprep.subr.mxu0 0.0
      %483 = vmatpush2.msra.mxu0 0.0
      %484 = vmatprep.subr.mxu0 0.0
      %485 = vmatpush2.msra.mxu0 0.0
      %486 = vmatprep.subr.mxu0 0.0
      %487 = vmatpush2.msra.mxu0 0.0
      %488 = vmatprep.subr.mxu0 0.0
      %489 = vmatpush2.msra.mxu0 0.0
      %490 = vmatprep.mubr.f32.mxu0 0.0
      %491 = vmatmul.mubr.f32.gmra.mxu0 %v354
      %v492 = vpop.f32.mrf.mxu0
      %v493 = vadd.f32 0.0, %v492
      %v494 = vpop.f32.mrf.mxu0
      %495 = vmatprep.mubr.f32.mxu0 0.0
      %496 = vmatmul.mubr.f32.gmra.mxu0 %v356
      %v497 = vpop.f32.mrf.mxu0
      %v498 = vadd.f32 0.0, %v497
      %v499 = vpop.f32.mrf.mxu0
      %500 = vmatprep.mubr.f32.mxu0 0.0
      %501 = vmatmul.mubr.f32.gmra.mxu0 %v358
      %v502 = vpop.f32.mrf.mxu0
      %v503 = vadd.f32 0.0, %v502
      %v504 = vpop.f32.mrf.mxu0
      %505 = vmatprep.mubr.f32.mxu0 0.0
      %506 = vmatmul.mubr.f32.gmra.mxu0 %v360
      %v507 = vpop.f32.mrf.mxu0
      %v508 = vadd.f32 0.0, %v507
      %v509 = vpop.f32.mrf.mxu0
      %510 = vmatprep.mubr.f32.mxu0 0.0
      %511 = vmatmul.mubr.f32.gmra.mxu0 %v362
      %v512 = vpop.f32.mrf.mxu0
      %v513 = vadd.f32 0.0, %v512
      %v514 = vpop.f32.mrf.mxu0
      %515 = vmatprep.mubr.f32.mxu0 0.0
      %516 = vmatmul.mubr.f32.gmra.mxu0 %v364
      %v517 = vpop.f32.mrf.mxu0
      %v518 = vadd.f32 0.0, %v517
      %v519 = vpop.f32.mrf.mxu0
      %520 = vmatprep.mubr.f32.mxu0 0.0
      %521 = vmatmul.mubr.f32.gmra.mxu0 %v366
      %v522 = vpop.f32.mrf.mxu0
      %v523 = vadd.f32 0.0, %v522
      %v524 = vpop.f32.mrf.mxu0
      %525 = vmatprep.mubr.f32.mxu0 0.0
      %526 = vmatmul.mubr.f32.gmra.mxu0 %v368
      %v527 = vpop.f32.mrf.mxu0
      %v528 = vadd.f32 0.0, %v527
      %v529 = vpop.f32.mrf.mxu0
      %530 = vmatprep.mubr.f32.mxu0 0.0
      %531 = vmatmul.mubr.f32.gmra.mxu0 %v370
      %v532 = vpop.f32.mrf.mxu0
      %v533 = vadd.f32 0.0, %v532
      %v534 = vpop.f32.mrf.mxu0
      %535 = vmatprep.mubr.f32.mxu0 0.0
      %536 = vmatmul.mubr.f32.gmra.mxu0 %v372
      %v537 = vpop.f32.mrf.mxu0
      %v538 = vadd.f32 0.0, %v537
      %v539 = vpop.f32.mrf.mxu0
      %540 = vmatprep.mubr.f32.mxu0 0.0
      %541 = vmatmul.mubr.f32.gmra.mxu0 %v374
      %v542 = vpop.f32.mrf.mxu0
      %v543 = vadd.f32 0.0, %v542
      %v544 = vpop.f32.mrf.mxu0
      %545 = vmatprep.mubr.f32.mxu0 0.0
      %546 = vmatmul.mubr.f32.gmra.mxu0 %v376
      %v547 = vpop.f32.mrf.mxu0
      %v548 = vadd.f32 0.0, %v547
      %v549 = vpop.f32.mrf.mxu0
      %550 = vmatprep.mubr.f32.mxu0 0.0
      %551 = vmatmul.mubr.f32.gmra.mxu0 %v378
      %v552 = vpop.f32.mrf.mxu0
      %v553 = vadd.f32 0.0, %v552
      %v554 = vpop.f32.mrf.mxu0
      %555 = vmatprep.mubr.f32.mxu0 0.0
      %556 = vmatmul.mubr.f32.gmra.mxu0 %v380
      %v557 = vpop.f32.mrf.mxu0
      %v558 = vadd.f32 0.0, %v557
      %v559 = vpop.f32.mrf.mxu0
      %560 = vmatprep.mubr.f32.mxu0 0.0
      %561 = vmatmul.mubr.f32.gmra.mxu0 %v382
      %v562 = vpop.f32.mrf.mxu0
      %v563 = vadd.f32 0.0, %v562
      %v564 = vpop.f32.mrf.mxu0
      %565 = vmatprep.mubr.f32.mxu0 0.0
      %566 = vmatmul.mubr.f32.gmra.mxu0 %v384
      %v567 = vpop.f32.mrf.mxu0
      %v568 = vadd.f32 0.0, %v567
      %v569 = vpop.f32.mrf.mxu0
      %570 = vmatprep.mubr.f32.mxu0 0.0
      %571 = vmatmul.mubr.f32.gmra.mxu0 %v386
      %v572 = vpop.f32.mrf.mxu0
      %v573 = vadd.f32 0.0, %v572
      %v574 = vpop.f32.mrf.mxu0
      %575 = vmatprep.mubr.f32.mxu0 0.0
      %576 = vmatmul.mubr.f32.gmra.mxu0 %v388
      %v577 = vpop.f32.mrf.mxu0
      %v578 = vadd.f32 0.0, %v577
      %v579 = vpop.f32.mrf.mxu0
      %580 = vmatprep.mubr.f32.mxu0 0.0
      %581 = vmatmul.mubr.f32.gmra.mxu0 %v390
      %v582 = vpop.f32.mrf.mxu0
      %v583 = vadd.f32 0.0, %v582
      %v584 = vpop.f32.mrf.mxu0
      %585 = vmatprep.mubr.f32.mxu0 0.0
      %586 = vmatmul.mubr.f32.gmra.mxu0 %v392
      %v587 = vpop.f32.mrf.mxu0
      %v588 = vadd.f32 0.0, %v587
      %v589 = vpop.f32.mrf.mxu0
      %590 = vmatprep.mubr.f32.mxu0 0.0
      %591 = vmatmul.mubr.f32.gmra.mxu0 %v394
      %v592 = vpop.f32.mrf.mxu0
      %v593 = vadd.f32 0.0, %v592
      %v594 = vpop.f32.mrf.mxu0
      %595 = vmatprep.mubr.f32.mxu0 0.0
      %596 = vmatmul.mubr.f32.gmra.mxu0 %v396
      %v597 = vpop.f32.mrf.mxu0
      %v598 = vadd.f32 0.0, %v597
      %v599 = vpop.f32.mrf.mxu0
      %600 = vmatprep.mubr.f32.mxu0 0.0
      %601 = vmatmul.mubr.f32.gmra.mxu0 %v398
      %v602 = vpop.f32.mrf.mxu0
      %v603 = vadd.f32 0.0, %v602
      %v604 = vpop.f32.mrf.mxu0
      %605 = vmatprep.mubr.f32.mxu0 0.0
      %606 = vmatmul.mubr.f32.gmra.mxu0 %v400
      %v607 = vpop.f32.mrf.mxu0
      %v608 = vadd.f32 0.0, %v607
      %v609 = vpop.f32.mrf.mxu0
      %610 = vmatprep.mubr.f32.mxu0 0.0
      %611 = vmatmul.mubr.f32.gmra.mxu0 %v402
      %v612 = vpop.f32.mrf.mxu0
      %v613 = vadd.f32 0.0, %v612
      %v614 = vpop.f32.mrf.mxu0
      %615 = vmatprep.mubr.f32.mxu0 0.0
      %616 = vmatmul.mubr.f32.gmra.mxu0 %v404
      %v617 = vpop.f32.mrf.mxu0
      %v618 = vadd.f32 0.0, %v617
      %v619 = vpop.f32.mrf.mxu0
      %620 = vmatprep.mubr.f32.mxu0 0.0
      %621 = vmatmul.mubr.f32.gmra.mxu0 %v406
      %v622 = vpop.f32.mrf.mxu0
      %v623 = vadd.f32 0.0, %v622
      %v624 = vpop.f32.mrf.mxu0
      %625 = vmatprep.mubr.f32.mxu0 0.0
      %626 = vmatmul.mubr.f32.gmra.mxu0 %v408
      %v627 = vpop.f32.mrf.mxu0
      %v628 = vadd.f32 0.0, %v627
      %v629 = vpop.f32.mrf.mxu0
      %630 = vmatprep.mubr.f32.mxu0 0.0
      %631 = vmatmul.mubr.f32.gmra.mxu0 %v410
      %v632 = vpop.f32.mrf.mxu0
      %v633 = vadd.f32 0.0, %v632
      %v634 = vpop.f32.mrf.mxu0
      %635 = vmatprep.mubr.f32.mxu0 0.0
      %636 = vmatmul.mubr.f32.gmra.mxu0 %v412
      %v637 = vpop.f32.mrf.mxu0
      %v638 = vadd.f32 0.0, %v637
      %v639 = vpop.f32.mrf.mxu0
      %640 = vmatprep.mubr.f32.mxu0 0.0
      %641 = vmatmul.mubr.f32.gmra.mxu0 %v414
      %v642 = vpop.f32.mrf.mxu0
      %v643 = vadd.f32 0.0, %v642
      %v644 = vpop.f32.mrf.mxu0
      %645 = vmatprep.mubr.f32.mxu0 0.0
      %646 = vmatmul.mubr.f32.gmra.mxu0 %v416
      %v647 = vpop.f32.mrf.mxu0
      %v648 = vadd.f32 0.0, %v647
      %v649 = vpop.f32.mrf.mxu0
      %650 = vmatprep.mubr.f32.mxu0 0.0
      %651 = vmatmul.mubr.f32.gmra.mxu0 %v418
      %v652 = vpop.f32.mrf.mxu0
      %v653 = vadd.f32 0.0, %v652
      %v654 = vpop.f32.mrf.mxu0
      %655 = vmatprep.mubr.f32.mxu0 0.0
      %656 = vmatmul.mubr.f32.gmra.mxu0 %v420
      %v657 = vpop.f32.mrf.mxu0
      %v658 = vadd.f32 0.0, %v657
      %v659 = vpop.f32.mrf.mxu0
      %660 = vmatprep.mubr.f32.mxu0 0.0
      %661 = vmatmul.mubr.f32.gmra.mxu0 %v422
      %v662 = vpop.f32.mrf.mxu0
      %v663 = vadd.f32 0.0, %v662
      %v664 = vpop.f32.mrf.mxu0
      %665 = vmatprep.mubr.f32.mxu0 0.0
      %666 = vmatmul.mubr.f32.gmra.mxu0 %v424
      %v667 = vpop.f32.mrf.mxu0
      %v668 = vadd.f32 0.0, %v667
      %v669 = vpop.f32.mrf.mxu0
      %670 = vdwg.mxu0
      %v671 = vsel %vm353, %v198, 0
      %v673 = vsel %vm353, %v199, 0
      %v675 = vsel %vm353, %v200, 0
      %v677 = vsel %vm353, %v201, 0
      %v679 = vsel %vm353, %v202, 0
      %v681 = vsel %vm353, %v203, 0
      %v683 = vsel %vm353, %v204, 0
      %v685 = vsel %vm353, %v205, 0
      %v687 = vsel %vm353, %v206, 0
      %v689 = vsel %vm353, %v207, 0
      %v691 = vsel %vm353, %v208, 0
      %v693 = vsel %vm353, %v209, 0
      %v695 = vsel %vm353, %v210, 0
      %v697 = vsel %vm353, %v211, 0
      %v699 = vsel %vm353, %v212, 0
      %v701 = vsel %vm353, %v213, 0
      %v703 = vsel %vm353, %v214, 0
      %v705 = vsel %vm353, %v215, 0
      %v707 = vsel %vm353, %v216, 0
      %v709 = vsel %vm353, %v217, 0
      %v711 = vsel %vm353, %v218, 0
      %v713 = vsel %vm353, %v219, 0
      %v715 = vsel %vm353, %v220, 0
      %v717 = vsel %vm353, %v221, 0
      %v719 = vsel %vm353, %v222, 0
      %v721 = vsel %vm353, %v223, 0
      %v723 = vsel %vm353, %v224, 0
      %v725 = vsel %vm353, %v225, 0
      %v727 = vsel %vm353, %v226, 0
      %v729 = vsel %vm353, %v227, 0
      %v731 = vsel %vm353, %v228, 0
      %v733 = vsel %vm353, %v229, 0
      %v735 = vsel %vm353, %v230, 0
      %v737 = vsel %vm353, %v231, 0
      %v739 = vsel %vm353, %v232, 0
      %v741 = vsel %vm353, %v233, 0
      %743 = vmatprep.subr.mxu0 0.0
      %744 = vmatpush1.msra.mxu0 0.0
      %745 = vmatprep.subr.mxu0 0.0
      %746 = vmatpush1.msra.mxu0 0.0
      %747 = vmatprep.subr.mxu0 0.0
      %748 = vmatpush1.msra.mxu0 0.0
      %749 = vmatprep.subr.mxu0 0.0
      %750 = vmatpush1.msra.mxu0 0.0
      %751 = vmatprep.subr.mxu0 0.0
      %752 = vmatpush1.msra.mxu0 0.0
      %753 = vmatprep.subr.mxu0 0.0
      %754 = vmatpush1.msra.mxu0 0.0
      %755 = vmatprep.subr.mxu0 0.0
      %756 = vmatpush1.msra.mxu0 0.0
      %757 = vmatprep.subr.mxu0 0.0
      %758 = vmatpush1.msra.mxu0 0.0
      %759 = vmatprep.subr.mxu0 0.0
      %760 = vmatpush1.msra.mxu0 0.0
      %761 = vmatprep.subr.mxu0 0.0
      %762 = vmatpush1.msra.mxu0 0.0
      %763 = vmatprep.subr.mxu0 0.0
      %764 = vmatpush1.msra.mxu0 0.0
      %765 = vmatprep.subr.mxu0 0.0
      %766 = vmatpush1.msra.mxu0 0.0
      %767 = vmatprep.subr.mxu0 0.0
      %768 = vmatpush1.msra.mxu0 0.0
      %769 = vmatprep.subr.mxu0 0.0
      %770 = vmatpush1.msra.mxu0 0.0
      %771 = vmatprep.subr.mxu0 0.0
      %772 = vmatpush1.msra.mxu0 0.0
      %773 = vmatprep.subr.mxu0 0.0
      %774 = vmatpush1.msra.mxu0 %v239
      %775 = vmatprep.subr.mxu0 0.0
      %776 = vmatpush2.msra.mxu0 0.0
      %777 = vmatprep.subr.mxu0 0.0
      %778 = vmatpush2.msra.mxu0 0.0
      %779 = vmatprep.subr.mxu0 0.0
      %780 = vmatpush2.msra.mxu0 0.0
      %781 = vmatprep.subr.mxu0 0.0
      %782 = vmatpush2.msra.mxu0 0.0
      %783 = vmatprep.subr.mxu0 0.0
      %784 = vmatpush2.msra.mxu0 0.0
      %785 = vmatprep.subr.mxu0 0.0
      %786 = vmatpush2.msra.mxu0 0.0
      %787 = vmatprep.subr.mxu0 0.0
      %788 = vmatpush2.msra.mxu0 0.0
      %789 = vmatprep.subr.mxu0 0.0
      %790 = vmatpush2.msra.mxu0 0.0
      %791 = vmatprep.subr.mxu0 0.0
      %792 = vmatpush2.msra.mxu0 0.0
      %793 = vmatprep.subr.mxu0 0.0
      %794 = vmatpush2.msra.mxu0 0.0
      %795 = vmatprep.subr.mxu0 0.0
      %796 = vmatpush2.msra.mxu0 0.0
      %797 = vmatprep.subr.mxu0 0.0
      %798 = vmatpush2.msra.mxu0 0.0
      %799 = vmatprep.subr.mxu0 0.0
      %800 = vmatpush2.msra.mxu0 0.0
      %801 = vmatprep.subr.mxu0 0.0
      %802 = vmatpush2.msra.mxu0 0.0
      %803 = vmatprep.subr.mxu0 0.0
      %804 = vmatpush2.msra.mxu0 0.0
      %805 = vmatprep.subr.mxu0 0.0
      %806 = vmatpush2.msra.mxu0 0.0
      %807 = vmatprep.mubr.f32.mxu0 0.0
      %808 = vmatmul.mubr.f32.gmra.mxu0 %v671
      %v809 = vpop.f32.mrf.mxu0
      %v810 = vadd.f32 %v493, %v809
      %v811 = vpop.f32.mrf.mxu0
      %812 = vmatprep.mubr.f32.mxu0 0.0
      %813 = vmatmul.mubr.f32.gmra.mxu0 %v673
      %v814 = vpop.f32.mrf.mxu0
      %v815 = vadd.f32 %v498, %v814
      %v816 = vpop.f32.mrf.mxu0
      %817 = vmatprep.mubr.f32.mxu0 0.0
      %818 = vmatmul.mubr.f32.gmra.mxu0 %v675
      %v819 = vpop.f32.mrf.mxu0
      %v820 = vadd.f32 %v503, %v819
      %v821 = vpop.f32.mrf.mxu0
      %822 = vmatprep.mubr.f32.mxu0 0.0
      %823 = vmatmul.mubr.f32.gmra.mxu0 %v677
      %v824 = vpop.f32.mrf.mxu0
      %v825 = vadd.f32 %v508, %v824
      %v826 = vpop.f32.mrf.mxu0
      %827 = vmatprep.mubr.f32.mxu0 0.0
      %828 = vmatmul.mubr.f32.gmra.mxu0 %v679
      %v829 = vpop.f32.mrf.mxu0
      %v830 = vadd.f32 %v513, %v829
      %v831 = vpop.f32.mrf.mxu0
      %832 = vmatprep.mubr.f32.mxu0 0.0
      %833 = vmatmul.mubr.f32.gmra.mxu0 %v681
      %v834 = vpop.f32.mrf.mxu0
      %v835 = vadd.f32 %v518, %v834
      %v836 = vpop.f32.mrf.mxu0
      %837 = vmatprep.mubr.f32.mxu0 0.0
      %838 = vmatmul.mubr.f32.gmra.mxu0 %v683
      %v839 = vpop.f32.mrf.mxu0
      %v840 = vadd.f32 %v523, %v839
      %v841 = vpop.f32.mrf.mxu0
      %842 = vmatprep.mubr.f32.mxu0 0.0
      %843 = vmatmul.mubr.f32.gmra.mxu0 %v685
      %v844 = vpop.f32.mrf.mxu0
      %v845 = vadd.f32 %v528, %v844
      %v846 = vpop.f32.mrf.mxu0
      %847 = vmatprep.mubr.f32.mxu0 0.0
      %848 = vmatmul.mubr.f32.gmra.mxu0 %v687
      %v849 = vpop.f32.mrf.mxu0
      %v850 = vadd.f32 %v533, %v849
      %v851 = vpop.f32.mrf.mxu0
      %852 = vmatprep.mubr.f32.mxu0 0.0
      %853 = vmatmul.mubr.f32.gmra.mxu0 %v689
      %v854 = vpop.f32.mrf.mxu0
      %v855 = vadd.f32 %v538, %v854
      %v856 = vpop.f32.mrf.mxu0
      %857 = vmatprep.mubr.f32.mxu0 0.0
      %858 = vmatmul.mubr.f32.gmra.mxu0 %v691
      %v859 = vpop.f32.mrf.mxu0
      %v860 = vadd.f32 %v543, %v859
      %v861 = vpop.f32.mrf.mxu0
      %862 = vmatprep.mubr.f32.mxu0 0.0
      %863 = vmatmul.mubr.f32.gmra.mxu0 %v693
      %v864 = vpop.f32.mrf.mxu0
      %v865 = vadd.f32 %v548, %v864
      %v866 = vpop.f32.mrf.mxu0
      %867 = vmatprep.mubr.f32.mxu0 0.0
      %868 = vmatmul.mubr.f32.gmra.mxu0 %v695
      %v869 = vpop.f32.mrf.mxu0
      %v870 = vadd.f32 %v553, %v869
      %v871 = vpop.f32.mrf.mxu0
      %872 = vmatprep.mubr.f32.mxu0 0.0
      %873 = vmatmul.mubr.f32.gmra.mxu0 %v697
      %v874 = vpop.f32.mrf.mxu0
      %v875 = vadd.f32 %v558, %v874
      %v876 = vpop.f32.mrf.mxu0
      %877 = vmatprep.mubr.f32.mxu0 0.0
      %878 = vmatmul.mubr.f32.gmra.mxu0 %v699
      %v879 = vpop.f32.mrf.mxu0
      %v880 = vadd.f32 %v563, %v879
      %v881 = vpop.f32.mrf.mxu0
      %882 = vmatprep.mubr.f32.mxu0 0.0
      %883 = vmatmul.mubr.f32.gmra.mxu0 %v701
      %v884 = vpop.f32.mrf.mxu0
      %v885 = vadd.f32 %v568, %v884
      %v886 = vpop.f32.mrf.mxu0
      %887 = vmatprep.mubr.f32.mxu0 0.0
      %888 = vmatmul.mubr.f32.gmra.mxu0 %v703
      %v889 = vpop.f32.mrf.mxu0
      %v890 = vadd.f32 %v573, %v889
      %v891 = vpop.f32.mrf.mxu0
      %892 = vmatprep.mubr.f32.mxu0 0.0
      %893 = vmatmul.mubr.f32.gmra.mxu0 %v705
      %v894 = vpop.f32.mrf.mxu0
      %v895 = vadd.f32 %v578, %v894
      %v896 = vpop.f32.mrf.mxu0
      %897 = vmatprep.mubr.f32.mxu0 0.0
      %898 = vmatmul.mubr.f32.gmra.mxu0 %v707
      %v899 = vpop.f32.mrf.mxu0
      %v900 = vadd.f32 %v583, %v899
      %v901 = vpop.f32.mrf.mxu0
      %902 = vmatprep.mubr.f32.mxu0 0.0
      %903 = vmatmul.mubr.f32.gmra.mxu0 %v709
      %v904 = vpop.f32.mrf.mxu0
      %v905 = vadd.f32 %v588, %v904
      %v906 = vpop.f32.mrf.mxu0
      %907 = vmatprep.mubr.f32.mxu0 0.0
      %908 = vmatmul.mubr.f32.gmra.mxu0 %v711
      %v909 = vpop.f32.mrf.mxu0
      %v910 = vadd.f32 %v593, %v909
      %v911 = vpop.f32.mrf.mxu0
      %912 = vmatprep.mubr.f32.mxu0 0.0
      %913 = vmatmul.mubr.f32.gmra.mxu0 %v713
      %v914 = vpop.f32.mrf.mxu0
      %v915 = vadd.f32 %v598, %v914
      %v916 = vpop.f32.mrf.mxu0
      %917 = vmatprep.mubr.f32.mxu0 0.0
      %918 = vmatmul.mubr.f32.gmra.mxu0 %v715
      %v919 = vpop.f32.mrf.mxu0
      %v920 = vadd.f32 %v603, %v919
      %v921 = vpop.f32.mrf.mxu0
      %922 = vmatprep.mubr.f32.mxu0 0.0
      %923 = vmatmul.mubr.f32.gmra.mxu0 %v717
      %v924 = vpop.f32.mrf.mxu0
      %v925 = vadd.f32 %v608, %v924
      %v926 = vpop.f32.mrf.mxu0
      %927 = vmatprep.mubr.f32.mxu0 0.0
      %928 = vmatmul.mubr.f32.gmra.mxu0 %v719
      %v929 = vpop.f32.mrf.mxu0
      %v930 = vadd.f32 %v613, %v929
      %v931 = vpop.f32.mrf.mxu0
      %932 = vmatprep.mubr.f32.mxu0 0.0
      %933 = vmatmul.mubr.f32.gmra.mxu0 %v721
      %v934 = vpop.f32.mrf.mxu0
      %v935 = vadd.f32 %v618, %v934
      %v936 = vpop.f32.mrf.mxu0
      %937 = vmatprep.mubr.f32.mxu0 0.0
      %938 = vmatmul.mubr.f32.gmra.mxu0 %v723
      %v939 = vpop.f32.mrf.mxu0
      %v940 = vadd.f32 %v623, %v939
      %v941 = vpop.f32.mrf.mxu0
      %942 = vmatprep.mubr.f32.mxu0 0.0
      %943 = vmatmul.mubr.f32.gmra.mxu0 %v725
      %v944 = vpop.f32.mrf.mxu0
      %v945 = vadd.f32 %v628, %v944
      %v946 = vpop.f32.mrf.mxu0
      %947 = vmatprep.mubr.f32.mxu0 0.0
      %948 = vmatmul.mubr.f32.gmra.mxu0 %v727
      %v949 = vpop.f32.mrf.mxu0
      %v950 = vadd.f32 %v633, %v949
      %v951 = vpop.f32.mrf.mxu0
      %952 = vmatprep.mubr.f32.mxu0 0.0
      %953 = vmatmul.mubr.f32.gmra.mxu0 %v729
      %v954 = vpop.f32.mrf.mxu0
      %v955 = vadd.f32 %v638, %v954
      %v956 = vpop.f32.mrf.mxu0
      %957 = vmatprep.mubr.f32.mxu0 0.0
      %958 = vmatmul.mubr.f32.gmra.mxu0 %v731
      %v959 = vpop.f32.mrf.mxu0
      %v960 = vadd.f32 %v643, %v959
      %v961 = vpop.f32.mrf.mxu0
      %962 = vmatprep.mubr.f32.mxu0 0.0
      %963 = vmatmul.mubr.f32.gmra.mxu0 %v733
      %v964 = vpop.f32.mrf.mxu0
      %v965 = vadd.f32 %v648, %v964
      %v966 = vpop.f32.mrf.mxu0
      %967 = vmatprep.mubr.f32.mxu0 0.0
      %968 = vmatmul.mubr.f32.gmra.mxu0 %v735
      %v969 = vpop.f32.mrf.mxu0
      %v970 = vadd.f32 %v653, %v969
      %v971 = vpop.f32.mrf.mxu0
      %972 = vmatprep.mubr.f32.mxu0 0.0
      %973 = vmatmul.mubr.f32.gmra.mxu0 %v737
      %v974 = vpop.f32.mrf.mxu0
      %v975 = vadd.f32 %v658, %v974
      %v976 = vpop.f32.mrf.mxu0
      %977 = vmatprep.mubr.f32.mxu0 0.0
      %978 = vmatmul.mubr.f32.gmra.mxu0 %v739
      %v979 = vpop.f32.mrf.mxu0
      %v980 = vadd.f32 %v663, %v979
      %v981 = vpop.f32.mrf.mxu0
      %982 = vmatprep.mubr.f32.mxu0 0.0
      %983 = vmatmul.mubr.f32.gmra.mxu0 %v741
      %v984 = vpop.f32.mrf.mxu0
      %v985 = vadd.f32 %v668, %v984
      %v986 = vpop.f32.mrf.mxu0
      %987 = vdwg.mxu0
      %s988 = scalar_lea.vmem %s1, 16
      %v989 = vld [vmem:[%s988] sm:$0xff]
      %vm990 = vcmask 1045504
      %v991 = vrot.slane %v198, 2
      %v992 = vrot.slane %v199, 2
      %v993 = vsel %vm990, %v991, %v992
      %v994 = vrot.slane %v200, 2
      %v995 = vsel %vm990, %v992, %v994
      %v996 = vrot.slane %v201, 2
      %v997 = vsel %vm990, %v994, %v996
      %v998 = vrot.slane %v202, 2
      %v999 = vsel %vm990, %v996, %v998
      %v1000 = vrot.slane %v203, 2
      %v1001 = vsel %vm990, %v998, %v1000
      %v1002 = vrot.slane %v204, 2
      %v1003 = vsel %vm990, %v1000, %v1002
      %v1004 = vrot.slane %v205, 2
      %v1005 = vsel %vm990, %v1002, %v1004
      %v1006 = vrot.slane %v206, 2
      %v1007 = vsel %vm990, %v1004, %v1006
      %v1008 = vrot.slane %v207, 2
      %v1009 = vsel %vm990, %v1006, %v1008
      %v1010 = vrot.slane %v208, 2
      %v1011 = vsel %vm990, %v1008, %v1010
      %v1012 = vrot.slane %v209, 2
      %v1013 = vsel %vm990, %v1010, %v1012
      %v1014 = vrot.slane %v210, 2
      %v1015 = vsel %vm990, %v1012, %v1014
      %v1016 = vrot.slane %v211, 2
      %v1017 = vsel %vm990, %v1014, %v1016
      %v1018 = vrot.slane %v212, 2
      %v1019 = vsel %vm990, %v1016, %v1018
      %v1020 = vrot.slane %v213, 2
      %v1021 = vsel %vm990, %v1018, %v1020
      %v1022 = vrot.slane %v214, 2
      %v1023 = vsel %vm990, %v1020, %v1022
      %v1024 = vrot.slane %v215, 2
      %v1025 = vsel %vm990, %v1022, %v1024
      %v1026 = vrot.slane %v216, 2
      %v1027 = vsel %vm990, %v1024, %v1026
      %v1028 = vrot.slane %v217, 2
      %v1029 = vsel %vm990, %v1026, %v1028
      %v1030 = vrot.slane %v218, 2
      %v1031 = vsel %vm990, %v1028, %v1030
      %v1032 = vrot.slane %v219, 2
      %v1033 = vsel %vm990, %v1030, %v1032
      %v1034 = vrot.slane %v220, 2
      %v1035 = vsel %vm990, %v1032, %v1034
      %v1036 = vrot.slane %v221, 2
      %v1037 = vsel %vm990, %v1034, %v1036
      %v1038 = vrot.slane %v222, 2
      %v1039 = vsel %vm990, %v1036, %v1038
      %v1040 = vrot.slane %v223, 2
      %v1041 = vsel %vm990, %v1038, %v1040
      %v1042 = vrot.slane %v224, 2
      %v1043 = vsel %vm990, %v1040, %v1042
      %v1044 = vrot.slane %v225, 2
      %v1045 = vsel %vm990, %v1042, %v1044
      %v1046 = vrot.slane %v226, 2
      %v1047 = vsel %vm990, %v1044, %v1046
      %v1048 = vrot.slane %v227, 2
      %v1049 = vsel %vm990, %v1046, %v1048
      %v1050 = vrot.slane %v228, 2
      %v1051 = vsel %vm990, %v1048, %v1050
      %v1052 = vrot.slane %v229, 2
      %v1053 = vsel %vm990, %v1050, %v1052
      %v1054 = vrot.slane %v230, 2
      %v1055 = vsel %vm990, %v1052, %v1054
      %v1056 = vrot.slane %v231, 2
      %v1057 = vsel %vm990, %v1054, %v1056
      %v1058 = vrot.slane %v232, 2
      %v1059 = vsel %vm990, %v1056, %v1058
      %v1060 = vrot.slane %v233, 2
      %v1061 = vsel %vm990, %v1058, %v1060
      %v1062 = vrot.slane %v234, 2
      %v1063 = vsel %vm990, %v1060, %v1062
      %v1064 = vsel %vm353, %v993, 0
      %v1066 = vsel %vm353, %v995, 0
      %v1068 = vsel %vm353, %v997, 0
      %v1070 = vsel %vm353, %v999, 0
      %v1072 = vsel %vm353, %v1001, 0
      %v1074 = vsel %vm353, %v1003, 0
      %v1076 = vsel %vm353, %v1005, 0
      %v1078 = vsel %vm353, %v1007, 0
      %v1080 = vsel %vm353, %v1009, 0
      %v1082 = vsel %vm353, %v1011, 0
      %v1084 = vsel %vm353, %v1013, 0
      %v1086 = vsel %vm353, %v1015, 0
      %v1088 = vsel %vm353, %v1017, 0
      %v1090 = vsel %vm353, %v1019, 0
      %v1092 = vsel %vm353, %v1021, 0
      %v1094 = vsel %vm353, %v1023, 0
      %v1096 = vsel %vm353, %v1025, 0
      %v1098 = vsel %vm353, %v1027, 0
      %v1100 = vsel %vm353, %v1029, 0
      %v1102 = vsel %vm353, %v1031, 0
      %v1104 = vsel %vm353, %v1033, 0
      %v1106 = vsel %vm353, %v1035, 0
      %v1108 = vsel %vm353, %v1037, 0
      %v1110 = vsel %vm353, %v1039, 0
      %v1112 = vsel %vm353, %v1041, 0
      %v1114 = vsel %vm353, %v1043, 0
      %v1116 = vsel %vm353, %v1045, 0
      %v1118 = vsel %vm353, %v1047, 0
      %v1120 = vsel %vm353, %v1049, 0
      %v1122 = vsel %vm353, %v1051, 0
      %v1124 = vsel %vm353, %v1053, 0
      %v1126 = vsel %vm353, %v1055, 0
      %v1128 = vsel %vm353, %v1057, 0
      %v1130 = vsel %vm353, %v1059, 0
      %v1132 = vsel %vm353, %v1061, 0
      %v1134 = vsel %vm353, %v1063, 0
      %1136 = vmatprep.subr.mxu0 0.0
      %1137 = vmatpush1.msra.mxu0 0.0
      %1138 = vmatprep.subr.mxu0 0.0
      %1139 = vmatpush1.msra.mxu0 0.0
      %1140 = vmatprep.subr.mxu0 0.0
      %1141 = vmatpush1.msra.mxu0 0.0
      %1142 = vmatprep.subr.mxu0 0.0
      %1143 = vmatpush1.msra.mxu0 0.0
      %1144 = vmatprep.subr.mxu0 0.0
      %1145 = vmatpush1.msra.mxu0 0.0
      %1146 = vmatprep.subr.mxu0 0.0
      %1147 = vmatpush1.msra.mxu0 0.0
      %1148 = vmatprep.subr.mxu0 0.0
      %1149 = vmatpush1.msra.mxu0 0.0
      %1150 = vmatprep.subr.mxu0 0.0
      %1151 = vmatpush1.msra.mxu0 0.0
      %1152 = vmatprep.subr.mxu0 0.0
      %1153 = vmatpush1.msra.mxu0 0.0
      %1154 = vmatprep.subr.mxu0 0.0
      %1155 = vmatpush1.msra.mxu0 0.0
      %1156 = vmatprep.subr.mxu0 0.0
      %1157 = vmatpush1.msra.mxu0 0.0
      %1158 = vmatprep.subr.mxu0 0.0
      %1159 = vmatpush1.msra.mxu0 0.0
      %1160 = vmatprep.subr.mxu0 0.0
      %1161 = vmatpush1.msra.mxu0 0.0
      %1162 = vmatprep.subr.mxu0 0.0
      %1163 = vmatpush1.msra.mxu0 0.0
      %1164 = vmatprep.subr.mxu0 0.0
      %1165 = vmatpush1.msra.mxu0 0.0
      %1166 = vmatprep.subr.mxu0 0.0
      %1167 = vmatpush1.msra.mxu0 %v989
      %1168 = vmatprep.subr.mxu0 0.0
      %1169 = vmatpush2.msra.mxu0 0.0
      %1170 = vmatprep.subr.mxu0 0.0
      %1171 = vmatpush2.msra.mxu0 0.0
      %1172 = vmatprep.subr.mxu0 0.0
      %1173 = vmatpush2.msra.mxu0 0.0
      %1174 = vmatprep.subr.mxu0 0.0
      %1175 = vmatpush2.msra.mxu0 0.0
      %1176 = vmatprep.subr.mxu0 0.0
      %1177 = vmatpush2.msra.mxu0 0.0
      %1178 = vmatprep.subr.mxu0 0.0
      %1179 = vmatpush2.msra.mxu0 0.0
      %1180 = vmatprep.subr.mxu0 0.0
      %1181 = vmatpush2.msra.mxu0 0.0
      %1182 = vmatprep.subr.mxu0 0.0
      %1183 = vmatpush2.msra.mxu0 0.0
      %1184 = vmatprep.subr.mxu0 0.0
      %1185 = vmatpush2.msra.mxu0 0.0
      %1186 = vmatprep.subr.mxu0 0.0
      %1187 = vmatpush2.msra.mxu0 0.0
      %1188 = vmatprep.subr.mxu0 0.0
      %1189 = vmatpush2.msra.mxu0 0.0
      %1190 = vmatprep.subr.mxu0 0.0
      %1191 = vmatpush2.msra.mxu0 0.0
      %1192 = vmatprep.subr.mxu0 0.0
      %1193 = vmatpush2.msra.mxu0 0.0
      %1194 = vmatprep.subr.mxu0 0.0
      %1195 = vmatpush2.msra.mxu0 0.0
      %1196 = vmatprep.subr.mxu0 0.0
      %1197 = vmatpush2.msra.mxu0 0.0
      %1198 = vmatprep.subr.mxu0 0.0
      %1199 = vmatpush2.msra.mxu0 0.0
      %1200 = vmatprep.mubr.f32.mxu0 0.0
      %1201 = vmatmul.mubr.f32.gmra.mxu0 %v1064
      %v1202 = vpop.f32.mrf.mxu0
      %v1203 = vadd.f32 0.0, %v1202
      %v1204 = vpop.f32.mrf.mxu0
      %1205 = vmatprep.mubr.f32.mxu0 0.0
      %1206 = vmatmul.mubr.f32.gmra.mxu0 %v1066
      %v1207 = vpop.f32.mrf.mxu0
      %v1208 = vadd.f32 0.0, %v1207
      %v1209 = vpop.f32.mrf.mxu0
      %1210 = vmatprep.mubr.f32.mxu0 0.0
      %1211 = vmatmul.mubr.f32.gmra.mxu0 %v1068
      %v1212 = vpop.f32.mrf.mxu0
      %v1213 = vadd.f32 0.0, %v1212
      %v1214 = vpop.f32.mrf.mxu0
      %1215 = vmatprep.mubr.f32.mxu0 0.0
      %1216 = vmatmul.mubr.f32.gmra.mxu0 %v1070
      %v1217 = vpop.f32.mrf.mxu0
      %v1218 = vadd.f32 0.0, %v1217
      %v1219 = vpop.f32.mrf.mxu0
      %1220 = vmatprep.mubr.f32.mxu0 0.0
      %1221 = vmatmul.mubr.f32.gmra.mxu0 %v1072
      %v1222 = vpop.f32.mrf.mxu0
      %v1223 = vadd.f32 0.0, %v1222
      %v1224 = vpop.f32.mrf.mxu0
      %1225 = vmatprep.mubr.f32.mxu0 0.0
      %1226 = vmatmul.mubr.f32.gmra.mxu0 %v1074
      %v1227 = vpop.f32.mrf.mxu0
      %v1228 = vadd.f32 0.0, %v1227
      %v1229 = vpop.f32.mrf.mxu0
      %1230 = vmatprep.mubr.f32.mxu0 0.0
      %1231 = vmatmul.mubr.f32.gmra.mxu0 %v1076
      %v1232 = vpop.f32.mrf.mxu0
      %v1233 = vadd.f32 0.0, %v1232
      %v1234 = vpop.f32.mrf.mxu0
      %1235 = vmatprep.mubr.f32.mxu0 0.0
      %1236 = vmatmul.mubr.f32.gmra.mxu0 %v1078
      %v1237 = vpop.f32.mrf.mxu0
      %v1238 = vadd.f32 0.0, %v1237
      %v1239 = vpop.f32.mrf.mxu0
      %1240 = vmatprep.mubr.f32.mxu0 0.0
      %1241 = vmatmul.mubr.f32.gmra.mxu0 %v1080
      %v1242 = vpop.f32.mrf.mxu0
      %v1243 = vadd.f32 0.0, %v1242
      %v1244 = vpop.f32.mrf.mxu0
      %1245 = vmatprep.mubr.f32.mxu0 0.0
      %1246 = vmatmul.mubr.f32.gmra.mxu0 %v1082
      %v1247 = vpop.f32.mrf.mxu0
      %v1248 = vadd.f32 0.0, %v1247
      %v1249 = vpop.f32.mrf.mxu0
      %1250 = vmatprep.mubr.f32.mxu0 0.0
      %1251 = vmatmul.mubr.f32.gmra.mxu0 %v1084
      %v1252 = vpop.f32.mrf.mxu0
      %v1253 = vadd.f32 0.0, %v1252
      %v1254 = vpop.f32.mrf.mxu0
      %1255 = vmatprep.mubr.f32.mxu0 0.0
      %1256 = vmatmul.mubr.f32.gmra.mxu0 %v1086
      %v1257 = vpop.f32.mrf.mxu0
      %v1258 = vadd.f32 0.0, %v1257
      %v1259 = vpop.f32.mrf.mxu0
      %1260 = vmatprep.mubr.f32.mxu0 0.0
      %1261 = vmatmul.mubr.f32.gmra.mxu0 %v1088
      %v1262 = vpop.f32.mrf.mxu0
      %v1263 = vadd.f32 0.0, %v1262
      %v1264 = vpop.f32.mrf.mxu0
      %1265 = vmatprep.mubr.f32.mxu0 0.0
      %1266 = vmatmul.mubr.f32.gmra.mxu0 %v1090
      %v1267 = vpop.f32.mrf.mxu0
      %v1268 = vadd.f32 0.0, %v1267
      %v1269 = vpop.f32.mrf.mxu0
      %1270 = vmatprep.mubr.f32.mxu0 0.0
      %1271 = vmatmul.mubr.f32.gmra.mxu0 %v1092
      %v1272 = vpop.f32.mrf.mxu0
      %v1273 = vadd.f32 0.0, %v1272
      %v1274 = vpop.f32.mrf.mxu0
      %1275 = vmatprep.mubr.f32.mxu0 0.0
      %1276 = vmatmul.mubr.f32.gmra.mxu0 %v1094
      %v1277 = vpop.f32.mrf.mxu0
      %v1278 = vadd.f32 0.0, %v1277
      %v1279 = vpop.f32.mrf.mxu0
      %1280 = vmatprep.mubr.f32.mxu0 0.0
      %1281 = vmatmul.mubr.f32.gmra.mxu0 %v1096
      %v1282 = vpop.f32.mrf.mxu0
      %v1283 = vadd.f32 0.0, %v1282
      %v1284 = vpop.f32.mrf.mxu0
      %1285 = vmatprep.mubr.f32.mxu0 0.0
      %1286 = vmatmul.mubr.f32.gmra.mxu0 %v1098
      %v1287 = vpop.f32.mrf.mxu0
      %v1288 = vadd.f32 0.0, %v1287
      %v1289 = vpop.f32.mrf.mxu0
      %1290 = vmatprep.mubr.f32.mxu0 0.0
      %1291 = vmatmul.mubr.f32.gmra.mxu0 %v1100
      %v1292 = vpop.f32.mrf.mxu0
      %v1293 = vadd.f32 0.0, %v1292
      %v1294 = vpop.f32.mrf.mxu0
      %1295 = vmatprep.mubr.f32.mxu0 0.0
      %1296 = vmatmul.mubr.f32.gmra.mxu0 %v1102
      %v1297 = vpop.f32.mrf.mxu0
      %v1298 = vadd.f32 0.0, %v1297
      %v1299 = vpop.f32.mrf.mxu0
      %1300 = vmatprep.mubr.f32.mxu0 0.0
      %1301 = vmatmul.mubr.f32.gmra.mxu0 %v1104
      %v1302 = vpop.f32.mrf.mxu0
      %v1303 = vadd.f32 0.0, %v1302
      %v1304 = vpop.f32.mrf.mxu0
      %1305 = vmatprep.mubr.f32.mxu0 0.0
      %1306 = vmatmul.mubr.f32.gmra.mxu0 %v1106
      %v1307 = vpop.f32.mrf.mxu0
      %v1308 = vadd.f32 0.0, %v1307
      %v1309 = vpop.f32.mrf.mxu0
      %1310 = vmatprep.mubr.f32.mxu0 0.0
      %1311 = vmatmul.mubr.f32.gmra.mxu0 %v1108
      %v1312 = vpop.f32.mrf.mxu0
      %v1313 = vadd.f32 0.0, %v1312
      %v1314 = vpop.f32.mrf.mxu0
      %1315 = vmatprep.mubr.f32.mxu0 0.0
      %1316 = vmatmul.mubr.f32.gmra.mxu0 %v1110
      %v1317 = vpop.f32.mrf.mxu0
      %v1318 = vadd.f32 0.0, %v1317
      %v1319 = vpop.f32.mrf.mxu0
      %1320 = vmatprep.mubr.f32.mxu0 0.0
      %1321 = vmatmul.mubr.f32.gmra.mxu0 %v1112
      %v1322 = vpop.f32.mrf.mxu0
      %v1323 = vadd.f32 0.0, %v1322
      %v1324 = vpop.f32.mrf.mxu0
      %1325 = vmatprep.mubr.f32.mxu0 0.0
      %1326 = vmatmul.mubr.f32.gmra.mxu0 %v1114
      %v1327 = vpop.f32.mrf.mxu0
      %v1328 = vadd.f32 0.0, %v1327
      %v1329 = vpop.f32.mrf.mxu0
      %1330 = vmatprep.mubr.f32.mxu0 0.0
      %1331 = vmatmul.mubr.f32.gmra.mxu0 %v1116
      %v1332 = vpop.f32.mrf.mxu0
      %v1333 = vadd.f32 0.0, %v1332
      %v1334 = vpop.f32.mrf.mxu0
      %1335 = vmatprep.mubr.f32.mxu0 0.0
      %1336 = vmatmul.mubr.f32.gmra.mxu0 %v1118
      %v1337 = vpop.f32.mrf.mxu0
      %v1338 = vadd.f32 0.0, %v1337
      %v1339 = vpop.f32.mrf.mxu0
      %1340 = vmatprep.mubr.f32.mxu0 0.0
      %1341 = vmatmul.mubr.f32.gmra.mxu0 %v1120
      %v1342 = vpop.f32.mrf.mxu0
      %v1343 = vadd.f32 0.0, %v1342
      %v1344 = vpop.f32.mrf.mxu0
      %1345 = vmatprep.mubr.f32.mxu0 0.0
      %1346 = vmatmul.mubr.f32.gmra.mxu0 %v1122
      %v1347 = vpop.f32.mrf.mxu0
      %v1348 = vadd.f32 0.0, %v1347
      %v1349 = vpop.f32.mrf.mxu0
      %1350 = vmatprep.mubr.f32.mxu0 0.0
      %1351 = vmatmul.mubr.f32.gmra.mxu0 %v1124
      %v1352 = vpop.f32.mrf.mxu0
      %v1353 = vadd.f32 0.0, %v1352
      %v1354 = vpop.f32.mrf.mxu0
      %1355 = vmatprep.mubr.f32.mxu0 0.0
      %1356 = vmatmul.mubr.f32.gmra.mxu0 %v1126
      %v1357 = vpop.f32.mrf.mxu0
      %v1358 = vadd.f32 0.0, %v1357
      %v1359 = vpop.f32.mrf.mxu0
      %1360 = vmatprep.mubr.f32.mxu0 0.0
      %1361 = vmatmul.mubr.f32.gmra.mxu0 %v1128
      %v1362 = vpop.f32.mrf.mxu0
      %v1363 = vadd.f32 0.0, %v1362
      %v1364 = vpop.f32.mrf.mxu0
      %1365 = vmatprep.mubr.f32.mxu0 0.0
      %1366 = vmatmul.mubr.f32.gmra.mxu0 %v1130
      %v1367 = vpop.f32.mrf.mxu0
      %v1368 = vadd.f32 0.0, %v1367
      %v1369 = vpop.f32.mrf.mxu0
      %1370 = vmatprep.mubr.f32.mxu0 0.0
      %1371 = vmatmul.mubr.f32.gmra.mxu0 %v1132
      %v1372 = vpop.f32.mrf.mxu0
      %v1373 = vadd.f32 0.0, %v1372
      %v1374 = vpop.f32.mrf.mxu0
      %1375 = vmatprep.mubr.f32.mxu0 0.0
      %1376 = vmatmul.mubr.f32.gmra.mxu0 %v1134
      %v1377 = vpop.f32.mrf.mxu0
      %v1378 = vadd.f32 0.0, %v1377
      %v1379 = vpop.f32.mrf.mxu0
      %1380 = vdwg.mxu0
      %v1381 = vadd.f32 %v810, %v1203
      %v1382 = vadd.f32 %v815, %v1208
      %v1383 = vadd.f32 %v820, %v1213
      %v1384 = vadd.f32 %v825, %v1218
      %v1385 = vadd.f32 %v830, %v1223
      %v1386 = vadd.f32 %v835, %v1228
      %v1387 = vadd.f32 %v840, %v1233
      %v1388 = vadd.f32 %v845, %v1238
      %v1389 = vadd.f32 %v850, %v1243
      %v1390 = vadd.f32 %v855, %v1248
      %v1391 = vadd.f32 %v860, %v1253
      %v1392 = vadd.f32 %v865, %v1258
      %v1393 = vadd.f32 %v870, %v1263
      %v1394 = vadd.f32 %v875, %v1268
      %v1395 = vadd.f32 %v880, %v1273
      %v1396 = vadd.f32 %v885, %v1278
      %v1397 = vadd.f32 %v890, %v1283
      %v1398 = vadd.f32 %v895, %v1288
      %v1399 = vadd.f32 %v900, %v1293
      %v1400 = vadd.f32 %v905, %v1298
      %v1401 = vadd.f32 %v910, %v1303
      %v1402 = vadd.f32 %v915, %v1308
      %v1403 = vadd.f32 %v920, %v1313
      %v1404 = vadd.f32 %v925, %v1318
      %v1405 = vadd.f32 %v930, %v1323
      %v1406 = vadd.f32 %v935, %v1328
      %v1407 = vadd.f32 %v940, %v1333
      %v1408 = vadd.f32 %v945, %v1338
      %v1409 = vadd.f32 %v950, %v1343
      %v1410 = vadd.f32 %v955, %v1348
      %v1411 = vadd.f32 %v960, %v1353
      %v1412 = vadd.f32 %v965, %v1358
      %v1413 = vadd.f32 %v970, %v1363
      %v1414 = vadd.f32 %v975, %v1368
      %v1415 = vadd.f32 %v980, %v1373
      %v1416 = vadd.f32 %v985, %v1378
      %s1417 = scalar_lea.vmem %s1, 24
      %v1418 = vld [vmem:[%s1417] sm:$0xff]
      %v1421 = vrot.slane %v235, 2
      %v1422 = vsel %vm990, %v1062, %v1421
      %v1423 = vrot.slane %v236, 2
      %v1424 = vsel %vm990, %v1421, %v1423
      %v1425 = vsel %vm353, %v1422, 0
      %v1427 = vsel %vm353, %v1424, 0
      %1429 = vmatprep.subr.mxu0 0.0
      %1430 = vmatpush1.msra.mxu0 0.0
      %1431 = vmatprep.subr.mxu0 0.0
      %1432 = vmatpush1.msra.mxu0 0.0
      %1433 = vmatprep.subr.mxu0 0.0
      %1434 = vmatpush1.msra.mxu0 0.0
      %1435 = vmatprep.subr.mxu0 0.0
      %1436 = vmatpush1.msra.mxu0 0.0
      %1437 = vmatprep.subr.mxu0 0.0
      %1438 = vmatpush1.msra.mxu0 0.0
      %1439 = vmatprep.subr.mxu0 0.0
      %1440 = vmatpush1.msra.mxu0 0.0
      %1441 = vmatprep.subr.mxu0 0.0
      %1442 = vmatpush1.msra.mxu0 0.0
      %1443 = vmatprep.subr.mxu0 0.0
      %1444 = vmatpush1.msra.mxu0 0.0
      %1445 = vmatprep.subr.mxu0 0.0
      %1446 = vmatpush1.msra.mxu0 0.0
      %1447 = vmatprep.subr.mxu0 0.0
      %1448 = vmatpush1.msra.mxu0 0.0
      %1449 = vmatprep.subr.mxu0 0.0
      %1450 = vmatpush1.msra.mxu0 0.0
      %1451 = vmatprep.subr.mxu0 0.0
      %1452 = vmatpush1.msra.mxu0 0.0
      %1453 = vmatprep.subr.mxu0 0.0
      %1454 = vmatpush1.msra.mxu0 0.0
      %1455 = vmatprep.subr.mxu0 0.0
      %1456 = vmatpush1.msra.mxu0 0.0
      %1457 = vmatprep.subr.mxu0 0.0
      %1458 = vmatpush1.msra.mxu0 0.0
      %1459 = vmatprep.subr.mxu0 0.0
      %1460 = vmatpush1.msra.mxu0 %v1418
      %1461 = vmatprep.subr.mxu0 0.0
      %1462 = vmatpush2.msra.mxu0 0.0
      %1463 = vmatprep.subr.mxu0 0.0
      %1464 = vmatpush2.msra.mxu0 0.0
      %1465 = vmatprep.subr.mxu0 0.0
      %1466 = vmatpush2.msra.mxu0 0.0
      %1467 = vmatprep.subr.mxu0 0.0
      %1468 = vmatpush2.msra.mxu0 0.0
      %1469 = vmatprep.subr.mxu0 0.0
      %1470 = vmatpush2.msra.mxu0 0.0
      %1471 = vmatprep.subr.mxu0 0.0
      %1472 = vmatpush2.msra.mxu0 0.0
      %1473 = vmatprep.subr.mxu0 0.0
      %1474 = vmatpush2.msra.mxu0 0.0
      %1475 = vmatprep.subr.mxu0 0.0
      %1476 = vmatpush2.msra.mxu0 0.0
      %1477 = vmatprep.subr.mxu0 0.0
      %1478 = vmatpush2.msra.mxu0 0.0
      %1479 = vmatprep.subr.mxu0 0.0
      %1480 = vmatpush2.msra.mxu0 0.0
      %1481 = vmatprep.subr.mxu0 0.0
      %1482 = vmatpush2.msra.mxu0 0.0
      %1483 = vmatprep.subr.mxu0 0.0
      %1484 = vmatpush2.msra.mxu0 0.0
      %1485 = vmatprep.subr.mxu0 0.0
      %1486 = vmatpush2.msra.mxu0 0.0
      %1487 = vmatprep.subr.mxu0 0.0
      %1488 = vmatpush2.msra.mxu0 0.0
      %1489 = vmatprep.subr.mxu0 0.0
      %1490 = vmatpush2.msra.mxu0 0.0
      %1491 = vmatprep.subr.mxu0 0.0
      %1492 = vmatpush2.msra.mxu0 0.0
      %1493 = vmatprep.mubr.f32.mxu0 0.0
      %1494 = vmatmul.mubr.f32.gmra.mxu0 %v1068
      %v1495 = vpop.f32.mrf.mxu0
      %v1496 = vadd.f32 0.0, %v1495
      %v1497 = vpop.f32.mrf.mxu0
      %1498 = vmatprep.mubr.f32.mxu0 0.0
      %1499 = vmatmul.mubr.f32.gmra.mxu0 %v1070
      %v1500 = vpop.f32.mrf.mxu0
      %v1501 = vadd.f32 0.0, %v1500
      %v1502 = vpop.f32.mrf.mxu0
      %1503 = vmatprep.mubr.f32.mxu0 0.0
      %1504 = vmatmul.mubr.f32.gmra.mxu0 %v1072
      %v1505 = vpop.f32.mrf.mxu0
      %v1506 = vadd.f32 0.0, %v1505
      %v1507 = vpop.f32.mrf.mxu0
      %1508 = vmatprep.mubr.f32.mxu0 0.0
      %1509 = vmatmul.mubr.f32.gmra.mxu0 %v1074
      %v1510 = vpop.f32.mrf.mxu0
      %v1511 = vadd.f32 0.0, %v1510
      %v1512 = vpop.f32.mrf.mxu0
      %1513 = vmatprep.mubr.f32.mxu0 0.0
      %1514 = vmatmul.mubr.f32.gmra.mxu0 %v1076
      %v1515 = vpop.f32.mrf.mxu0
      %v1516 = vadd.f32 0.0, %v1515
      %v1517 = vpop.f32.mrf.mxu0
      %1518 = vmatprep.mubr.f32.mxu0 0.0
      %1519 = vmatmul.mubr.f32.gmra.mxu0 %v1078
      %v1520 = vpop.f32.mrf.mxu0
      %v1521 = vadd.f32 0.0, %v1520
      %v1522 = vpop.f32.mrf.mxu0
      %1523 = vmatprep.mubr.f32.mxu0 0.0
      %1524 = vmatmul.mubr.f32.gmra.mxu0 %v1080
      %v1525 = vpop.f32.mrf.mxu0
      %v1526 = vadd.f32 0.0, %v1525
      %v1527 = vpop.f32.mrf.mxu0
      %1528 = vmatprep.mubr.f32.mxu0 0.0
      %1529 = vmatmul.mubr.f32.gmra.mxu0 %v1082
      %v1530 = vpop.f32.mrf.mxu0
      %v1531 = vadd.f32 0.0, %v1530
      %v1532 = vpop.f32.mrf.mxu0
      %1533 = vmatprep.mubr.f32.mxu0 0.0
      %1534 = vmatmul.mubr.f32.gmra.mxu0 %v1084
      %v1535 = vpop.f32.mrf.mxu0
      %v1536 = vadd.f32 0.0, %v1535
      %v1537 = vpop.f32.mrf.mxu0
      %1538 = vmatprep.mubr.f32.mxu0 0.0
      %1539 = vmatmul.mubr.f32.gmra.mxu0 %v1086
      %v1540 = vpop.f32.mrf.mxu0
      %v1541 = vadd.f32 0.0, %v1540
      %v1542 = vpop.f32.mrf.mxu0
      %1543 = vmatprep.mubr.f32.mxu0 0.0
      %1544 = vmatmul.mubr.f32.gmra.mxu0 %v1088
      %v1545 = vpop.f32.mrf.mxu0
      %v1546 = vadd.f32 0.0, %v1545
      %v1547 = vpop.f32.mrf.mxu0
      %1548 = vmatprep.mubr.f32.mxu0 0.0
      %1549 = vmatmul.mubr.f32.gmra.mxu0 %v1090
      %v1550 = vpop.f32.mrf.mxu0
      %v1551 = vadd.f32 0.0, %v1550
      %v1552 = vpop.f32.mrf.mxu0
      %1553 = vmatprep.mubr.f32.mxu0 0.0
      %1554 = vmatmul.mubr.f32.gmra.mxu0 %v1092
      %v1555 = vpop.f32.mrf.mxu0
      %v1556 = vadd.f32 0.0, %v1555
      %v1557 = vpop.f32.mrf.mxu0
      %1558 = vmatprep.mubr.f32.mxu0 0.0
      %1559 = vmatmul.mubr.f32.gmra.mxu0 %v1094
      %v1560 = vpop.f32.mrf.mxu0
      %v1561 = vadd.f32 0.0, %v1560
      %v1562 = vpop.f32.mrf.mxu0
      %1563 = vmatprep.mubr.f32.mxu0 0.0
      %1564 = vmatmul.mubr.f32.gmra.mxu0 %v1096
      %v1565 = vpop.f32.mrf.mxu0
      %v1566 = vadd.f32 0.0, %v1565
      %v1567 = vpop.f32.mrf.mxu0
      %1568 = vmatprep.mubr.f32.mxu0 0.0
      %1569 = vmatmul.mubr.f32.gmra.mxu0 %v1098
      %v1570 = vpop.f32.mrf.mxu0
      %v1571 = vadd.f32 0.0, %v1570
      %v1572 = vpop.f32.mrf.mxu0
      %1573 = vmatprep.mubr.f32.mxu0 0.0
      %1574 = vmatmul.mubr.f32.gmra.mxu0 %v1100
      %v1575 = vpop.f32.mrf.mxu0
      %v1576 = vadd.f32 0.0, %v1575
      %v1577 = vpop.f32.mrf.mxu0
      %1578 = vmatprep.mubr.f32.mxu0 0.0
      %1579 = vmatmul.mubr.f32.gmra.mxu0 %v1102
      %v1580 = vpop.f32.mrf.mxu0
      %v1581 = vadd.f32 0.0, %v1580
      %v1582 = vpop.f32.mrf.mxu0
      %1583 = vmatprep.mubr.f32.mxu0 0.0
      %1584 = vmatmul.mubr.f32.gmra.mxu0 %v1104
      %v1585 = vpop.f32.mrf.mxu0
      %v1586 = vadd.f32 0.0, %v1585
      %v1587 = vpop.f32.mrf.mxu0
      %1588 = vmatprep.mubr.f32.mxu0 0.0
      %1589 = vmatmul.mubr.f32.gmra.mxu0 %v1106
      %v1590 = vpop.f32.mrf.mxu0
      %v1591 = vadd.f32 0.0, %v1590
      %v1592 = vpop.f32.mrf.mxu0
      %1593 = vmatprep.mubr.f32.mxu0 0.0
      %1594 = vmatmul.mubr.f32.gmra.mxu0 %v1108
      %v1595 = vpop.f32.mrf.mxu0
      %v1596 = vadd.f32 0.0, %v1595
      %v1597 = vpop.f32.mrf.mxu0
      %1598 = vmatprep.mubr.f32.mxu0 0.0
      %1599 = vmatmul.mubr.f32.gmra.mxu0 %v1110
      %v1600 = vpop.f32.mrf.mxu0
      %v1601 = vadd.f32 0.0, %v1600
      %v1602 = vpop.f32.mrf.mxu0
      %1603 = vmatprep.mubr.f32.mxu0 0.0
      %1604 = vmatmul.mubr.f32.gmra.mxu0 %v1112
      %v1605 = vpop.f32.mrf.mxu0
      %v1606 = vadd.f32 0.0, %v1605
      %v1607 = vpop.f32.mrf.mxu0
      %1608 = vmatprep.mubr.f32.mxu0 0.0
      %1609 = vmatmul.mubr.f32.gmra.mxu0 %v1114
      %v1610 = vpop.f32.mrf.mxu0
      %v1611 = vadd.f32 0.0, %v1610
      %v1612 = vpop.f32.mrf.mxu0
      %1613 = vmatprep.mubr.f32.mxu0 0.0
      %1614 = vmatmul.mubr.f32.gmra.mxu0 %v1116
      %v1615 = vpop.f32.mrf.mxu0
      %v1616 = vadd.f32 0.0, %v1615
      %v1617 = vpop.f32.mrf.mxu0
      %1618 = vmatprep.mubr.f32.mxu0 0.0
      %1619 = vmatmul.mubr.f32.gmra.mxu0 %v1118
      %v1620 = vpop.f32.mrf.mxu0
      %v1621 = vadd.f32 0.0, %v1620
      %v1622 = vpop.f32.mrf.mxu0
      %1623 = vmatprep.mubr.f32.mxu0 0.0
      %1624 = vmatmul.mubr.f32.gmra.mxu0 %v1120
      %v1625 = vpop.f32.mrf.mxu0
      %v1626 = vadd.f32 0.0, %v1625
      %v1627 = vpop.f32.mrf.mxu0
      %1628 = vmatprep.mubr.f32.mxu0 0.0
      %1629 = vmatmul.mubr.f32.gmra.mxu0 %v1122
      %v1630 = vpop.f32.mrf.mxu0
      %v1631 = vadd.f32 0.0, %v1630
      %v1632 = vpop.f32.mrf.mxu0
      %1633 = vmatprep.mubr.f32.mxu0 0.0
      %1634 = vmatmul.mubr.f32.gmra.mxu0 %v1124
      %v1635 = vpop.f32.mrf.mxu0
      %v1636 = vadd.f32 0.0, %v1635
      %v1637 = vpop.f32.mrf.mxu0
      %1638 = vmatprep.mubr.f32.mxu0 0.0
      %1639 = vmatmul.mubr.f32.gmra.mxu0 %v1126
      %v1640 = vpop.f32.mrf.mxu0
      %v1641 = vadd.f32 0.0, %v1640
      %v1642 = vpop.f32.mrf.mxu0
      %1643 = vmatprep.mubr.f32.mxu0 0.0
      %1644 = vmatmul.mubr.f32.gmra.mxu0 %v1128
      %v1645 = vpop.f32.mrf.mxu0
      %v1646 = vadd.f32 0.0, %v1645
      %v1647 = vpop.f32.mrf.mxu0
      %1648 = vmatprep.mubr.f32.mxu0 0.0
      %1649 = vmatmul.mubr.f32.gmra.mxu0 %v1130
      %v1650 = vpop.f32.mrf.mxu0
      %v1651 = vadd.f32 0.0, %v1650
      %v1652 = vpop.f32.mrf.mxu0
      %1653 = vmatprep.mubr.f32.mxu0 0.0
      %1654 = vmatmul.mubr.f32.gmra.mxu0 %v1132
      %v1655 = vpop.f32.mrf.mxu0
      %v1656 = vadd.f32 0.0, %v1655
      %v1657 = vpop.f32.mrf.mxu0
      %1658 = vmatprep.mubr.f32.mxu0 0.0
      %1659 = vmatmul.mubr.f32.gmra.mxu0 %v1134
      %v1660 = vpop.f32.mrf.mxu0
      %v1661 = vadd.f32 0.0, %v1660
      %v1662 = vpop.f32.mrf.mxu0
      %1663 = vmatprep.mubr.f32.mxu0 0.0
      %1664 = vmatmul.mubr.f32.gmra.mxu0 %v1425
      %v1665 = vpop.f32.mrf.mxu0
      %v1666 = vadd.f32 0.0, %v1665
      %v1667 = vpop.f32.mrf.mxu0
      %1668 = vmatprep.mubr.f32.mxu0 0.0
      %1669 = vmatmul.mubr.f32.gmra.mxu0 %v1427
      %v1670 = vpop.f32.mrf.mxu0
      %v1671 = vadd.f32 0.0, %v1670
      %v1672 = vpop.f32.mrf.mxu0
      %1673 = vdwg.mxu0
      %v1674 = vadd.f32 %v1381, %v1496
      %v1675 = vadd.f32 %v1382, %v1501
      %v1676 = vadd.f32 %v1383, %v1506
      %v1677 = vadd.f32 %v1384, %v1511
      %v1678 = vadd.f32 %v1385, %v1516
      %v1679 = vadd.f32 %v1386, %v1521
      %v1680 = vadd.f32 %v1387, %v1526
      %v1681 = vadd.f32 %v1388, %v1531
      %v1682 = vadd.f32 %v1389, %v1536
      %v1683 = vadd.f32 %v1390, %v1541
      %v1684 = vadd.f32 %v1391, %v1546
      %v1685 = vadd.f32 %v1392, %v1551
      %v1686 = vadd.f32 %v1393, %v1556
      %v1687 = vadd.f32 %v1394, %v1561
      %v1688 = vadd.f32 %v1395, %v1566
      %v1689 = vadd.f32 %v1396, %v1571
      %v1690 = vadd.f32 %v1397, %v1576
      %v1691 = vadd.f32 %v1398, %v1581
      %v1692 = vadd.f32 %v1399, %v1586
      %v1693 = vadd.f32 %v1400, %v1591
      %v1694 = vadd.f32 %v1401, %v1596
      %v1695 = vadd.f32 %v1402, %v1601
      %v1696 = vadd.f32 %v1403, %v1606
      %v1697 = vadd.f32 %v1404, %v1611
      %v1698 = vadd.f32 %v1405, %v1616
      %v1699 = vadd.f32 %v1406, %v1621
      %v1700 = vadd.f32 %v1407, %v1626
      %v1701 = vadd.f32 %v1408, %v1631
      %v1702 = vadd.f32 %v1409, %v1636
      %v1703 = vadd.f32 %v1410, %v1641
      %v1704 = vadd.f32 %v1411, %v1646
      %v1705 = vadd.f32 %v1412, %v1651
      %v1706 = vadd.f32 %v1413, %v1656
      %v1707 = vadd.f32 %v1414, %v1661
      %v1708 = vadd.f32 %v1415, %v1666
      %v1709 = vadd.f32 %v1416, %v1671
      %s1710 = scalar_lea.vmem %s1, 32
      %v1711 = vld [vmem:[%s1710] sm:$0xff]
      %vm1712 = vcmask 1044480
      %v1713 = vrot.slane %v200, 3
      %v1714 = vrot.slane %v201, 3
      %v1715 = vsel %vm1712, %v1713, %v1714
      %v1716 = vrot.slane %v202, 3
      %v1717 = vsel %vm1712, %v1714, %v1716
      %v1718 = vrot.slane %v203, 3
      %v1719 = vsel %vm1712, %v1716, %v1718
      %v1720 = vrot.slane %v204, 3
      %v1721 = vsel %vm1712, %v1718, %v1720
      %v1722 = vrot.slane %v205, 3
      %v1723 = vsel %vm1712, %v1720, %v1722
      %v1724 = vrot.slane %v206, 3
      %v1725 = vsel %vm1712, %v1722, %v1724
      %v1726 = vrot.slane %v207, 3
      %v1727 = vsel %vm1712, %v1724, %v1726
      %v1728 = vrot.slane %v208, 3
      %v1729 = vsel %vm1712, %v1726, %v1728
      %v1730 = vrot.slane %v209, 3
      %v1731 = vsel %vm1712, %v1728, %v1730
      %v1732 = vrot.slane %v210, 3
      %v1733 = vsel %vm1712, %v1730, %v1732
      %v1734 = vrot.slane %v211, 3
      %v1735 = vsel %vm1712, %v1732, %v1734
      %v1736 = vrot.slane %v212, 3
      %v1737 = vsel %vm1712, %v1734, %v1736
      %v1738 = vrot.slane %v213, 3
      %v1739 = vsel %vm1712, %v1736, %v1738
      %v1740 = vrot.slane %v214, 3
      %v1741 = vsel %vm1712, %v1738, %v1740
      %v1742 = vrot.slane %v215, 3
      %v1743 = vsel %vm1712, %v1740, %v1742
      %v1744 = vrot.slane %v216, 3
      %v1745 = vsel %vm1712, %v1742, %v1744
      %v1746 = vrot.slane %v217, 3
      %v1747 = vsel %vm1712, %v1744, %v1746
      %v1748 = vrot.slane %v218, 3
      %v1749 = vsel %vm1712, %v1746, %v1748
      %v1750 = vrot.slane %v219, 3
      %v1751 = vsel %vm1712, %v1748, %v1750
      %v1752 = vrot.slane %v220, 3
      %v1753 = vsel %vm1712, %v1750, %v1752
      %v1754 = vrot.slane %v221, 3
      %v1755 = vsel %vm1712, %v1752, %v1754
      %v1756 = vrot.slane %v222, 3
      %v1757 = vsel %vm1712, %v1754, %v1756
      %v1758 = vrot.slane %v223, 3
      %v1759 = vsel %vm1712, %v1756, %v1758
      %v1760 = vrot.slane %v224, 3
      %v1761 = vsel %vm1712, %v1758, %v1760
      %v1762 = vrot.slane %v225, 3
      %v1763 = vsel %vm1712, %v1760, %v1762
      %v1764 = vrot.slane %v226, 3
      %v1765 = vsel %vm1712, %v1762, %v1764
      %v1766 = vrot.slane %v227, 3
      %v1767 = vsel %vm1712, %v1764, %v1766
      %v1768 = vrot.slane %v228, 3
      %v1769 = vsel %vm1712, %v1766, %v1768
      %v1770 = vrot.slane %v229, 3
      %v1771 = vsel %vm1712, %v1768, %v1770
      %v1772 = vrot.slane %v230, 3
      %v1773 = vsel %vm1712, %v1770, %v1772
      %v1774 = vrot.slane %v231, 3
      %v1775 = vsel %vm1712, %v1772, %v1774
      %v1776 = vrot.slane %v232, 3
      %v1777 = vsel %vm1712, %v1774, %v1776
      %v1778 = vrot.slane %v233, 3
      %v1779 = vsel %vm1712, %v1776, %v1778
      %v1780 = vrot.slane %v234, 3
      %v1781 = vsel %vm1712, %v1778, %v1780
      %v1782 = vrot.slane %v235, 3
      %v1783 = vsel %vm1712, %v1780, %v1782
      %v1784 = vrot.slane %v236, 3
      %v1785 = vsel %vm1712, %v1782, %v1784
      %v1786 = vsel %vm353, %v1715, 0
      %v1788 = vsel %vm353, %v1717, 0
      %v1790 = vsel %vm353, %v1719, 0
      %v1792 = vsel %vm353, %v1721, 0
      %v1794 = vsel %vm353, %v1723, 0
      %v1796 = vsel %vm353, %v1725, 0
      %v1798 = vsel %vm353, %v1727, 0
      %v1800 = vsel %vm353, %v1729, 0
      %v1802 = vsel %vm353, %v1731, 0
      %v1804 = vsel %vm353, %v1733, 0
      %v1806 = vsel %vm353, %v1735, 0
      %v1808 = vsel %vm353, %v1737, 0
      %v1810 = vsel %vm353, %v1739, 0
      %v1812 = vsel %vm353, %v1741, 0
      %v1814 = vsel %vm353, %v1743, 0
      %v1816 = vsel %vm353, %v1745, 0
      %v1818 = vsel %vm353, %v1747, 0
      %v1820 = vsel %vm353, %v1749, 0
      %v1822 = vsel %vm353, %v1751, 0
      %v1824 = vsel %vm353, %v1753, 0
      %v1826 = vsel %vm353, %v1755, 0
      %v1828 = vsel %vm353, %v1757, 0
      %v1830 = vsel %vm353, %v1759, 0
      %v1832 = vsel %vm353, %v1761, 0
      %v1834 = vsel %vm353, %v1763, 0
      %v1836 = vsel %vm353, %v1765, 0
      %v1838 = vsel %vm353, %v1767, 0
      %v1840 = vsel %vm353, %v1769, 0
      %v1842 = vsel %vm353, %v1771, 0
      %v1844 = vsel %vm353, %v1773, 0
      %v1846 = vsel %vm353, %v1775, 0
      %v1848 = vsel %vm353, %v1777, 0
      %v1850 = vsel %vm353, %v1779, 0
      %v1852 = vsel %vm353, %v1781, 0
      %v1854 = vsel %vm353, %v1783, 0
      %v1856 = vsel %vm353, %v1785, 0
      %1858 = vmatprep.subr.mxu0 0.0
      %1859 = vmatpush1.msra.mxu0 0.0
      %1860 = vmatprep.subr.mxu0 0.0
      %1861 = vmatpush1.msra.mxu0 0.0
      %1862 = vmatprep.subr.mxu0 0.0
      %1863 = vmatpush1.msra.mxu0 0.0
      %1864 = vmatprep.subr.mxu0 0.0
      %1865 = vmatpush1.msra.mxu0 0.0
      %1866 = vmatprep.subr.mxu0 0.0
      %1867 = vmatpush1.msra.mxu0 0.0
      %1868 = vmatprep.subr.mxu0 0.0
      %1869 = vmatpush1.msra.mxu0 0.0
      %1870 = vmatprep.subr.mxu0 0.0
      %1871 = vmatpush1.msra.mxu0 0.0
      %1872 = vmatprep.subr.mxu0 0.0
      %1873 = vmatpush1.msra.mxu0 0.0
      %1874 = vmatprep.subr.mxu0 0.0
      %1875 = vmatpush1.msra.mxu0 0.0
      %1876 = vmatprep.subr.mxu0 0.0
      %1877 = vmatpush1.msra.mxu0 0.0
      %1878 = vmatprep.subr.mxu0 0.0
      %1879 = vmatpush1.msra.mxu0 0.0
      %1880 = vmatprep.subr.mxu0 0.0
      %1881 = vmatpush1.msra.mxu0 0.0
      %1882 = vmatprep.subr.mxu0 0.0
      %1883 = vmatpush1.msra.mxu0 0.0
      %1884 = vmatprep.subr.mxu0 0.0
      %1885 = vmatpush1.msra.mxu0 0.0
      %1886 = vmatprep.subr.mxu0 0.0
      %1887 = vmatpush1.msra.mxu0 0.0
      %1888 = vmatprep.subr.mxu0 0.0
      %1889 = vmatpush1.msra.mxu0 %v1711
      %1890 = vmatprep.subr.mxu0 0.0
      %1891 = vmatpush2.msra.mxu0 0.0
      %1892 = vmatprep.subr.mxu0 0.0
      %1893 = vmatpush2.msra.mxu0 0.0
      %1894 = vmatprep.subr.mxu0 0.0
      %1895 = vmatpush2.msra.mxu0 0.0
      %1896 = vmatprep.subr.mxu0 0.0
      %1897 = vmatpush2.msra.mxu0 0.0
      %1898 = vmatprep.subr.mxu0 0.0
      %1899 = vmatpush2.msra.mxu0 0.0
      %1900 = vmatprep.subr.mxu0 0.0
      %1901 = vmatpush2.msra.mxu0 0.0
      %1902 = vmatprep.subr.mxu0 0.0
      %1903 = vmatpush2.msra.mxu0 0.0
      %1904 = vmatprep.subr.mxu0 0.0
      %1905 = vmatpush2.msra.mxu0 0.0
      %1906 = vmatprep.subr.mxu0 0.0
      %1907 = vmatpush2.msra.mxu0 0.0
      %1908 = vmatprep.subr.mxu0 0.0
      %1909 = vmatpush2.msra.mxu0 0.0
      %1910 = vmatprep.subr.mxu0 0.0
      %1911 = vmatpush2.msra.mxu0 0.0
      %1912 = vmatprep.subr.mxu0 0.0
      %1913 = vmatpush2.msra.mxu0 0.0
      %1914 = vmatprep.subr.mxu0 0.0
      %1915 = vmatpush2.msra.mxu0 0.0
      %1916 = vmatprep.subr.mxu0 0.0
      %1917 = vmatpush2.msra.mxu0 0.0
      %1918 = vmatprep.subr.mxu0 0.0
      %1919 = vmatpush2.msra.mxu0 0.0
      %1920 = vmatprep.subr.mxu0 0.0
      %1921 = vmatpush2.msra.mxu0 0.0
      %1922 = vmatprep.mubr.f32.mxu0 0.0
      %1923 = vmatmul.mubr.f32.gmra.mxu0 %v1786
      %v1924 = vpop.f32.mrf.mxu0
      %v1925 = vadd.f32 0.0, %v1924
      %v1926 = vpop.f32.mrf.mxu0
      %1927 = vmatprep.mubr.f32.mxu0 0.0
      %1928 = vmatmul.mubr.f32.gmra.mxu0 %v1788
      %v1929 = vpop.f32.mrf.mxu0
      %v1930 = vadd.f32 0.0, %v1929
      %v1931 = vpop.f32.mrf.mxu0
      %1932 = vmatprep.mubr.f32.mxu0 0.0
      %1933 = vmatmul.mubr.f32.gmra.mxu0 %v1790
      %v1934 = vpop.f32.mrf.mxu0
      %v1935 = vadd.f32 0.0, %v1934
      %v1936 = vpop.f32.mrf.mxu0
      %1937 = vmatprep.mubr.f32.mxu0 0.0
      %1938 = vmatmul.mubr.f32.gmra.mxu0 %v1792
      %v1939 = vpop.f32.mrf.mxu0
      %v1940 = vadd.f32 0.0, %v1939
      %v1941 = vpop.f32.mrf.mxu0
      %1942 = vmatprep.mubr.f32.mxu0 0.0
      %1943 = vmatmul.mubr.f32.gmra.mxu0 %v1794
      %v1944 = vpop.f32.mrf.mxu0
      %v1945 = vadd.f32 0.0, %v1944
      %v1946 = vpop.f32.mrf.mxu0
      %1947 = vmatprep.mubr.f32.mxu0 0.0
      %1948 = vmatmul.mubr.f32.gmra.mxu0 %v1796
      %v1949 = vpop.f32.mrf.mxu0
      %v1950 = vadd.f32 0.0, %v1949
      %v1951 = vpop.f32.mrf.mxu0
      %1952 = vmatprep.mubr.f32.mxu0 0.0
      %1953 = vmatmul.mubr.f32.gmra.mxu0 %v1798
      %v1954 = vpop.f32.mrf.mxu0
      %v1955 = vadd.f32 0.0, %v1954
      %v1956 = vpop.f32.mrf.mxu0
      %1957 = vmatprep.mubr.f32.mxu0 0.0
      %1958 = vmatmul.mubr.f32.gmra.mxu0 %v1800
      %v1959 = vpop.f32.mrf.mxu0
      %v1960 = vadd.f32 0.0, %v1959
      %v1961 = vpop.f32.mrf.mxu0
      %1962 = vmatprep.mubr.f32.mxu0 0.0
      %1963 = vmatmul.mubr.f32.gmra.mxu0 %v1802
      %v1964 = vpop.f32.mrf.mxu0
      %v1965 = vadd.f32 0.0, %v1964
      %v1966 = vpop.f32.mrf.mxu0
      %1967 = vmatprep.mubr.f32.mxu0 0.0
      %1968 = vmatmul.mubr.f32.gmra.mxu0 %v1804
      %v1969 = vpop.f32.mrf.mxu0
      %v1970 = vadd.f32 0.0, %v1969
      %v1971 = vpop.f32.mrf.mxu0
      %1972 = vmatprep.mubr.f32.mxu0 0.0
      %1973 = vmatmul.mubr.f32.gmra.mxu0 %v1806
      %v1974 = vpop.f32.mrf.mxu0
      %v1975 = vadd.f32 0.0, %v1974
      %v1976 = vpop.f32.mrf.mxu0
      %1977 = vmatprep.mubr.f32.mxu0 0.0
      %1978 = vmatmul.mubr.f32.gmra.mxu0 %v1808
      %v1979 = vpop.f32.mrf.mxu0
      %v1980 = vadd.f32 0.0, %v1979
      %v1981 = vpop.f32.mrf.mxu0
      %1982 = vmatprep.mubr.f32.mxu0 0.0
      %1983 = vmatmul.mubr.f32.gmra.mxu0 %v1810
      %v1984 = vpop.f32.mrf.mxu0
      %v1985 = vadd.f32 0.0, %v1984
      %v1986 = vpop.f32.mrf.mxu0
      %1987 = vmatprep.mubr.f32.mxu0 0.0
      %1988 = vmatmul.mubr.f32.gmra.mxu0 %v1812
      %v1989 = vpop.f32.mrf.mxu0
      %v1990 = vadd.f32 0.0, %v1989
      %v1991 = vpop.f32.mrf.mxu0
      %1992 = vmatprep.mubr.f32.mxu0 0.0
      %1993 = vmatmul.mubr.f32.gmra.mxu0 %v1814
      %v1994 = vpop.f32.mrf.mxu0
      %v1995 = vadd.f32 0.0, %v1994
      %v1996 = vpop.f32.mrf.mxu0
      %1997 = vmatprep.mubr.f32.mxu0 0.0
      %1998 = vmatmul.mubr.f32.gmra.mxu0 %v1816
      %v1999 = vpop.f32.mrf.mxu0
      %v2000 = vadd.f32 0.0, %v1999
      %v2001 = vpop.f32.mrf.mxu0
      %2002 = vmatprep.mubr.f32.mxu0 0.0
      %2003 = vmatmul.mubr.f32.gmra.mxu0 %v1818
      %v2004 = vpop.f32.mrf.mxu0
      %v2005 = vadd.f32 0.0, %v2004
      %v2006 = vpop.f32.mrf.mxu0
      %2007 = vmatprep.mubr.f32.mxu0 0.0
      %2008 = vmatmul.mubr.f32.gmra.mxu0 %v1820
      %v2009 = vpop.f32.mrf.mxu0
      %v2010 = vadd.f32 0.0, %v2009
      %v2011 = vpop.f32.mrf.mxu0
      %2012 = vmatprep.mubr.f32.mxu0 0.0
      %2013 = vmatmul.mubr.f32.gmra.mxu0 %v1822
      %v2014 = vpop.f32.mrf.mxu0
      %v2015 = vadd.f32 0.0, %v2014
      %v2016 = vpop.f32.mrf.mxu0
      %2017 = vmatprep.mubr.f32.mxu0 0.0
      %2018 = vmatmul.mubr.f32.gmra.mxu0 %v1824
      %v2019 = vpop.f32.mrf.mxu0
      %v2020 = vadd.f32 0.0, %v2019
      %v2021 = vpop.f32.mrf.mxu0
      %2022 = vmatprep.mubr.f32.mxu0 0.0
      %2023 = vmatmul.mubr.f32.gmra.mxu0 %v1826
      %v2024 = vpop.f32.mrf.mxu0
      %v2025 = vadd.f32 0.0, %v2024
      %v2026 = vpop.f32.mrf.mxu0
      %2027 = vmatprep.mubr.f32.mxu0 0.0
      %2028 = vmatmul.mubr.f32.gmra.mxu0 %v1828
      %v2029 = vpop.f32.mrf.mxu0
      %v2030 = vadd.f32 0.0, %v2029
      %v2031 = vpop.f32.mrf.mxu0
      %2032 = vmatprep.mubr.f32.mxu0 0.0
      %2033 = vmatmul.mubr.f32.gmra.mxu0 %v1830
      %v2034 = vpop.f32.mrf.mxu0
      %v2035 = vadd.f32 0.0, %v2034
      %v2036 = vpop.f32.mrf.mxu0
      %2037 = vmatprep.mubr.f32.mxu0 0.0
      %2038 = vmatmul.mubr.f32.gmra.mxu0 %v1832
      %v2039 = vpop.f32.mrf.mxu0
      %v2040 = vadd.f32 0.0, %v2039
      %v2041 = vpop.f32.mrf.mxu0
      %2042 = vmatprep.mubr.f32.mxu0 0.0
      %2043 = vmatmul.mubr.f32.gmra.mxu0 %v1834
      %v2044 = vpop.f32.mrf.mxu0
      %v2045 = vadd.f32 0.0, %v2044
      %v2046 = vpop.f32.mrf.mxu0
      %2047 = vmatprep.mubr.f32.mxu0 0.0
      %2048 = vmatmul.mubr.f32.gmra.mxu0 %v1836
      %v2049 = vpop.f32.mrf.mxu0
      %v2050 = vadd.f32 0.0, %v2049
      %v2051 = vpop.f32.mrf.mxu0
      %2052 = vmatprep.mubr.f32.mxu0 0.0
      %2053 = vmatmul.mubr.f32.gmra.mxu0 %v1838
      %v2054 = vpop.f32.mrf.mxu0
      %v2055 = vadd.f32 0.0, %v2054
      %v2056 = vpop.f32.mrf.mxu0
      %2057 = vmatprep.mubr.f32.mxu0 0.0
      %2058 = vmatmul.mubr.f32.gmra.mxu0 %v1840
      %v2059 = vpop.f32.mrf.mxu0
      %v2060 = vadd.f32 0.0, %v2059
      %v2061 = vpop.f32.mrf.mxu0
      %2062 = vmatprep.mubr.f32.mxu0 0.0
      %2063 = vmatmul.mubr.f32.gmra.mxu0 %v1842
      %v2064 = vpop.f32.mrf.mxu0
      %v2065 = vadd.f32 0.0, %v2064
      %v2066 = vpop.f32.mrf.mxu0
      %2067 = vmatprep.mubr.f32.mxu0 0.0
      %2068 = vmatmul.mubr.f32.gmra.mxu0 %v1844
      %v2069 = vpop.f32.mrf.mxu0
      %v2070 = vadd.f32 0.0, %v2069
      %v2071 = vpop.f32.mrf.mxu0
      %2072 = vmatprep.mubr.f32.mxu0 0.0
      %2073 = vmatmul.mubr.f32.gmra.mxu0 %v1846
      %v2074 = vpop.f32.mrf.mxu0
      %v2075 = vadd.f32 0.0, %v2074
      %v2076 = vpop.f32.mrf.mxu0
      %2077 = vmatprep.mubr.f32.mxu0 0.0
      %2078 = vmatmul.mubr.f32.gmra.mxu0 %v1848
      %v2079 = vpop.f32.mrf.mxu0
      %v2080 = vadd.f32 0.0, %v2079
      %v2081 = vpop.f32.mrf.mxu0
      %2082 = vmatprep.mubr.f32.mxu0 0.0
      %2083 = vmatmul.mubr.f32.gmra.mxu0 %v1850
      %v2084 = vpop.f32.mrf.mxu0
      %v2085 = vadd.f32 0.0, %v2084
      %v2086 = vpop.f32.mrf.mxu0
      %2087 = vmatprep.mubr.f32.mxu0 0.0
      %2088 = vmatmul.mubr.f32.gmra.mxu0 %v1852
      %v2089 = vpop.f32.mrf.mxu0
      %v2090 = vadd.f32 0.0, %v2089
      %v2091 = vpop.f32.mrf.mxu0
      %2092 = vmatprep.mubr.f32.mxu0 0.0
      %2093 = vmatmul.mubr.f32.gmra.mxu0 %v1854
      %v2094 = vpop.f32.mrf.mxu0
      %v2095 = vadd.f32 0.0, %v2094
      %v2096 = vpop.f32.mrf.mxu0
      %2097 = vmatprep.mubr.f32.mxu0 0.0
      %2098 = vmatmul.mubr.f32.gmra.mxu0 %v1856
      %v2099 = vpop.f32.mrf.mxu0
      %v2100 = vadd.f32 0.0, %v2099
      %v2101 = vpop.f32.mrf.mxu0
      %2102 = vdwg.mxu0
      %v2103 = vadd.f32 %v1674, %v1925
      %v2104 = vadd.f32 %v1675, %v1930
      %v2105 = vadd.f32 %v1676, %v1935
      %v2106 = vadd.f32 %v1677, %v1940
      %v2107 = vadd.f32 %v1678, %v1945
      %v2108 = vadd.f32 %v1679, %v1950
      %v2109 = vadd.f32 %v1680, %v1955
      %v2110 = vadd.f32 %v1681, %v1960
      %v2111 = vadd.f32 %v1682, %v1965
      %v2112 = vadd.f32 %v1683, %v1970
      %v2113 = vadd.f32 %v1684, %v1975
      %v2114 = vadd.f32 %v1685, %v1980
      %v2115 = vadd.f32 %v1686, %v1985
      %v2116 = vadd.f32 %v1687, %v1990
      %v2117 = vadd.f32 %v1688, %v1995
      %v2118 = vadd.f32 %v1689, %v2000
      %v2119 = vadd.f32 %v1690, %v2005
      %v2120 = vadd.f32 %v1691, %v2010
      %v2121 = vadd.f32 %v1692, %v2015
      %v2122 = vadd.f32 %v1693, %v2020
      %v2123 = vadd.f32 %v1694, %v2025
      %v2124 = vadd.f32 %v1695, %v2030
      %v2125 = vadd.f32 %v1696, %v2035
      %v2126 = vadd.f32 %v1697, %v2040
      %v2127 = vadd.f32 %v1698, %v2045
      %v2128 = vadd.f32 %v1699, %v2050
      %v2129 = vadd.f32 %v1700, %v2055
      %v2130 = vadd.f32 %v1701, %v2060
      %v2131 = vadd.f32 %v1702, %v2065
      %v2132 = vadd.f32 %v1703, %v2070
      %v2133 = vadd.f32 %v1704, %v2075
      %v2134 = vadd.f32 %v1705, %v2080
      %v2135 = vadd.f32 %v1706, %v2085
      %v2136 = vadd.f32 %v1707, %v2090
      %v2137 = vadd.f32 %v1708, %v2095
      %v2138 = vadd.f32 %v1709, %v2100
      %s2139 = scalar_lea.vmem %s1, 40
      %v2140 = vld [vmem:[%s2139] sm:$0xff]
      %vm2141 = vcmask 1043456
      %v2142 = vrot.slane %v200, 4
      %v2143 = vrot.slane %v201, 4
      %v2144 = vsel %vm2141, %v2142, %v2143
      %v2145 = vrot.slane %v202, 4
      %v2146 = vsel %vm2141, %v2143, %v2145
      %v2147 = vrot.slane %v203, 4
      %v2148 = vsel %vm2141, %v2145, %v2147
      %v2149 = vrot.slane %v204, 4
      %v2150 = vsel %vm2141, %v2147, %v2149
      %v2151 = vrot.slane %v205, 4
      %v2152 = vsel %vm2141, %v2149, %v2151
      %v2153 = vrot.slane %v206, 4
      %v2154 = vsel %vm2141, %v2151, %v2153
      %v2155 = vrot.slane %v207, 4
      %v2156 = vsel %vm2141, %v2153, %v2155
      %v2157 = vrot.slane %v208, 4
      %v2158 = vsel %vm2141, %v2155, %v2157
      %v2159 = vrot.slane %v209, 4
      %v2160 = vsel %vm2141, %v2157, %v2159
      %v2161 = vrot.slane %v210, 4
      %v2162 = vsel %vm2141, %v2159, %v2161
      %v2163 = vrot.slane %v211, 4
      %v2164 = vsel %vm2141, %v2161, %v2163
      %v2165 = vrot.slane %v212, 4
      %v2166 = vsel %vm2141, %v2163, %v2165
      %v2167 = vrot.slane %v213, 4
      %v2168 = vsel %vm2141, %v2165, %v2167
      %v2169 = vrot.slane %v214, 4
      %v2170 = vsel %vm2141, %v2167, %v2169
      %v2171 = vrot.slane %v215, 4
      %v2172 = vsel %vm2141, %v2169, %v2171
      %v2173 = vrot.slane %v216, 4
      %v2174 = vsel %vm2141, %v2171, %v2173
      %v2175 = vrot.slane %v217, 4
      %v2176 = vsel %vm2141, %v2173, %v2175
      %v2177 = vrot.slane %v218, 4
      %v2178 = vsel %vm2141, %v2175, %v2177
      %v2179 = vrot.slane %v219, 4
      %v2180 = vsel %vm2141, %v2177, %v2179
      %v2181 = vrot.slane %v220, 4
      %v2182 = vsel %vm2141, %v2179, %v2181
      %v2183 = vrot.slane %v221, 4
      %v2184 = vsel %vm2141, %v2181, %v2183
      %v2185 = vrot.slane %v222, 4
      %v2186 = vsel %vm2141, %v2183, %v2185
      %v2187 = vrot.slane %v223, 4
      %v2188 = vsel %vm2141, %v2185, %v2187
      %v2189 = vrot.slane %v224, 4
      %v2190 = vsel %vm2141, %v2187, %v2189
      %v2191 = vrot.slane %v225, 4
      %v2192 = vsel %vm2141, %v2189, %v2191
      %v2193 = vrot.slane %v226, 4
      %v2194 = vsel %vm2141, %v2191, %v2193
      %v2195 = vrot.slane %v227, 4
      %v2196 = vsel %vm2141, %v2193, %v2195
      %v2197 = vrot.slane %v228, 4
      %v2198 = vsel %vm2141, %v2195, %v2197
      %v2199 = vrot.slane %v229, 4
      %v2200 = vsel %vm2141, %v2197, %v2199
      %v2201 = vrot.slane %v230, 4
      %v2202 = vsel %vm2141, %v2199, %v2201
      %v2203 = vrot.slane %v231, 4
      %v2204 = vsel %vm2141, %v2201, %v2203
      %v2205 = vrot.slane %v232, 4
      %v2206 = vsel %vm2141, %v2203, %v2205
      %v2207 = vrot.slane %v233, 4
      %v2208 = vsel %vm2141, %v2205, %v2207
      %v2209 = vrot.slane %v234, 4
      %v2210 = vsel %vm2141, %v2207, %v2209
      %v2211 = vrot.slane %v235, 4
      %v2212 = vsel %vm2141, %v2209, %v2211
      %v2213 = vrot.slane %v236, 4
      %v2214 = vsel %vm2141, %v2211, %v2213
      %v2215 = vsel %vm353, %v2144, 0
      %v2217 = vsel %vm353, %v2146, 0
      %v2219 = vsel %vm353, %v2148, 0
      %v2221 = vsel %vm353, %v2150, 0
      %v2223 = vsel %vm353, %v2152, 0
      %v2225 = vsel %vm353, %v2154, 0
      %v2227 = vsel %vm353, %v2156, 0
      %v2229 = vsel %vm353, %v2158, 0
      %v2231 = vsel %vm353, %v2160, 0
      %v2233 = vsel %vm353, %v2162, 0
      %v2235 = vsel %vm353, %v2164, 0
      %v2237 = vsel %vm353, %v2166, 0
      %v2239 = vsel %vm353, %v2168, 0
      %v2241 = vsel %vm353, %v2170, 0
      %v2243 = vsel %vm353, %v2172, 0
      %v2245 = vsel %vm353, %v2174, 0
      %v2247 = vsel %vm353, %v2176, 0
      %v2249 = vsel %vm353, %v2178, 0
      %v2251 = vsel %vm353, %v2180, 0
      %v2253 = vsel %vm353, %v2182, 0
      %v2255 = vsel %vm353, %v2184, 0
      %v2257 = vsel %vm353, %v2186, 0
      %v2259 = vsel %vm353, %v2188, 0
      %v2261 = vsel %vm353, %v2190, 0
      %v2263 = vsel %vm353, %v2192, 0
      %v2265 = vsel %vm353, %v2194, 0
      %v2267 = vsel %vm353, %v2196, 0
      %v2269 = vsel %vm353, %v2198, 0
      %v2271 = vsel %vm353, %v2200, 0
      %v2273 = vsel %vm353, %v2202, 0
      %v2275 = vsel %vm353, %v2204, 0
      %v2277 = vsel %vm353, %v2206, 0
      %v2279 = vsel %vm353, %v2208, 0
      %v2281 = vsel %vm353, %v2210, 0
      %v2283 = vsel %vm353, %v2212, 0
      %v2285 = vsel %vm353, %v2214, 0
      %2287 = vmatprep.subr.mxu0 0.0
      %2288 = vmatpush1.msra.mxu0 0.0
      %2289 = vmatprep.subr.mxu0 0.0
      %2290 = vmatpush1.msra.mxu0 0.0
      %2291 = vmatprep.subr.mxu0 0.0
      %2292 = vmatpush1.msra.mxu0 0.0
      %2293 = vmatprep.subr.mxu0 0.0
      %2294 = vmatpush1.msra.mxu0 0.0
      %2295 = vmatprep.subr.mxu0 0.0
      %2296 = vmatpush1.msra.mxu0 0.0
      %2297 = vmatprep.subr.mxu0 0.0
      %2298 = vmatpush1.msra.mxu0 0.0
      %2299 = vmatprep.subr.mxu0 0.0
      %2300 = vmatpush1.msra.mxu0 0.0
      %2301 = vmatprep.subr.mxu0 0.0
      %2302 = vmatpush1.msra.mxu0 0.0
      %2303 = vmatprep.subr.mxu0 0.0
      %2304 = vmatpush1.msra.mxu0 0.0
      %2305 = vmatprep.subr.mxu0 0.0
      %2306 = vmatpush1.msra.mxu0 0.0
      %2307 = vmatprep.subr.mxu0 0.0
      %2308 = vmatpush1.msra.mxu0 0.0
      %2309 = vmatprep.subr.mxu0 0.0
      %2310 = vmatpush1.msra.mxu0 0.0
      %2311 = vmatprep.subr.mxu0 0.0
      %2312 = vmatpush1.msra.mxu0 0.0
      %2313 = vmatprep.subr.mxu0 0.0
      %2314 = vmatpush1.msra.mxu0 0.0
      %2315 = vmatprep.subr.mxu0 0.0
      %2316 = vmatpush1.msra.mxu0 0.0
      %2317 = vmatprep.subr.mxu0 0.0
      %2318 = vmatpush1.msra.mxu0 %v2140
      %2319 = vmatprep.subr.mxu0 0.0
      %2320 = vmatpush2.msra.mxu0 0.0
      %2321 = vmatprep.subr.mxu0 0.0
      %2322 = vmatpush2.msra.mxu0 0.0
      %2323 = vmatprep.subr.mxu0 0.0
      %2324 = vmatpush2.msra.mxu0 0.0
      %2325 = vmatprep.subr.mxu0 0.0
      %2326 = vmatpush2.msra.mxu0 0.0
      %2327 = vmatprep.subr.mxu0 0.0
      %2328 = vmatpush2.msra.mxu0 0.0
      %2329 = vmatprep.subr.mxu0 0.0
      %2330 = vmatpush2.msra.mxu0 0.0
      %2331 = vmatprep.subr.mxu0 0.0
      %2332 = vmatpush2.msra.mxu0 0.0
      %2333 = vmatprep.subr.mxu0 0.0
      %2334 = vmatpush2.msra.mxu0 0.0
      %2335 = vmatprep.subr.mxu0 0.0
      %2336 = vmatpush2.msra.mxu0 0.0
      %2337 = vmatprep.subr.mxu0 0.0
      %2338 = vmatpush2.msra.mxu0 0.0
      %2339 = vmatprep.subr.mxu0 0.0
      %2340 = vmatpush2.msra.mxu0 0.0
      %2341 = vmatprep.subr.mxu0 0.0
      %2342 = vmatpush2.msra.mxu0 0.0
      %2343 = vmatprep.subr.mxu0 0.0
      %2344 = vmatpush2.msra.mxu0 0.0
      %2345 = vmatprep.subr.mxu0 0.0
      %2346 = vmatpush2.msra.mxu0 0.0
      %2347 = vmatprep.subr.mxu0 0.0
      %2348 = vmatpush2.msra.mxu0 0.0
      %2349 = vmatprep.subr.mxu0 0.0
      %2350 = vmatpush2.msra.mxu0 0.0
      %2351 = vmatprep.mubr.f32.mxu0 0.0
      %2352 = vmatmul.mubr.f32.gmra.mxu0 %v2215
      %v2353 = vpop.f32.mrf.mxu0
      %v2354 = vadd.f32 0.0, %v2353
      %v2355 = vpop.f32.mrf.mxu0
      %2356 = vmatprep.mubr.f32.mxu0 0.0
      %2357 = vmatmul.mubr.f32.gmra.mxu0 %v2217
      %v2358 = vpop.f32.mrf.mxu0
      %v2359 = vadd.f32 0.0, %v2358
      %v2360 = vpop.f32.mrf.mxu0
      %2361 = vmatprep.mubr.f32.mxu0 0.0
      %2362 = vmatmul.mubr.f32.gmra.mxu0 %v2219
      %v2363 = vpop.f32.mrf.mxu0
      %v2364 = vadd.f32 0.0, %v2363
      %v2365 = vpop.f32.mrf.mxu0
      %2366 = vmatprep.mubr.f32.mxu0 0.0
      %2367 = vmatmul.mubr.f32.gmra.mxu0 %v2221
      %v2368 = vpop.f32.mrf.mxu0
      %v2369 = vadd.f32 0.0, %v2368
      %v2370 = vpop.f32.mrf.mxu0
      %2371 = vmatprep.mubr.f32.mxu0 0.0
      %2372 = vmatmul.mubr.f32.gmra.mxu0 %v2223
      %v2373 = vpop.f32.mrf.mxu0
      %v2374 = vadd.f32 0.0, %v2373
      %v2375 = vpop.f32.mrf.mxu0
      %2376 = vmatprep.mubr.f32.mxu0 0.0
      %2377 = vmatmul.mubr.f32.gmra.mxu0 %v2225
      %v2378 = vpop.f32.mrf.mxu0
      %v2379 = vadd.f32 0.0, %v2378
      %v2380 = vpop.f32.mrf.mxu0
      %2381 = vmatprep.mubr.f32.mxu0 0.0
      %2382 = vmatmul.mubr.f32.gmra.mxu0 %v2227
      %v2383 = vpop.f32.mrf.mxu0
      %v2384 = vadd.f32 0.0, %v2383
      %v2385 = vpop.f32.mrf.mxu0
      %2386 = vmatprep.mubr.f32.mxu0 0.0
      %2387 = vmatmul.mubr.f32.gmra.mxu0 %v2229
      %v2388 = vpop.f32.mrf.mxu0
      %v2389 = vadd.f32 0.0, %v2388
      %v2390 = vpop.f32.mrf.mxu0
      %2391 = vmatprep.mubr.f32.mxu0 0.0
      %2392 = vmatmul.mubr.f32.gmra.mxu0 %v2231
      %v2393 = vpop.f32.mrf.mxu0
      %v2394 = vadd.f32 0.0, %v2393
      %v2395 = vpop.f32.mrf.mxu0
      %2396 = vmatprep.mubr.f32.mxu0 0.0
      %2397 = vmatmul.mubr.f32.gmra.mxu0 %v2233
      %v2398 = vpop.f32.mrf.mxu0
      %v2399 = vadd.f32 0.0, %v2398
      %v2400 = vpop.f32.mrf.mxu0
      %2401 = vmatprep.mubr.f32.mxu0 0.0
      %2402 = vmatmul.mubr.f32.gmra.mxu0 %v2235
      %v2403 = vpop.f32.mrf.mxu0
      %v2404 = vadd.f32 0.0, %v2403
      %v2405 = vpop.f32.mrf.mxu0
      %2406 = vmatprep.mubr.f32.mxu0 0.0
      %2407 = vmatmul.mubr.f32.gmra.mxu0 %v2237
      %v2408 = vpop.f32.mrf.mxu0
      %v2409 = vadd.f32 0.0, %v2408
      %v2410 = vpop.f32.mrf.mxu0
      %2411 = vmatprep.mubr.f32.mxu0 0.0
      %2412 = vmatmul.mubr.f32.gmra.mxu0 %v2239
      %v2413 = vpop.f32.mrf.mxu0
      %v2414 = vadd.f32 0.0, %v2413
      %v2415 = vpop.f32.mrf.mxu0
      %2416 = vmatprep.mubr.f32.mxu0 0.0
      %2417 = vmatmul.mubr.f32.gmra.mxu0 %v2241
      %v2418 = vpop.f32.mrf.mxu0
      %v2419 = vadd.f32 0.0, %v2418
      %v2420 = vpop.f32.mrf.mxu0
      %2421 = vmatprep.mubr.f32.mxu0 0.0
      %2422 = vmatmul.mubr.f32.gmra.mxu0 %v2243
      %v2423 = vpop.f32.mrf.mxu0
      %v2424 = vadd.f32 0.0, %v2423
      %v2425 = vpop.f32.mrf.mxu0
      %2426 = vmatprep.mubr.f32.mxu0 0.0
      %2427 = vmatmul.mubr.f32.gmra.mxu0 %v2245
      %v2428 = vpop.f32.mrf.mxu0
      %v2429 = vadd.f32 0.0, %v2428
      %v2430 = vpop.f32.mrf.mxu0
      %2431 = vmatprep.mubr.f32.mxu0 0.0
      %2432 = vmatmul.mubr.f32.gmra.mxu0 %v2247
      %v2433 = vpop.f32.mrf.mxu0
      %v2434 = vadd.f32 0.0, %v2433
      %v2435 = vpop.f32.mrf.mxu0
      %2436 = vmatprep.mubr.f32.mxu0 0.0
      %2437 = vmatmul.mubr.f32.gmra.mxu0 %v2249
      %v2438 = vpop.f32.mrf.mxu0
      %v2439 = vadd.f32 0.0, %v2438
      %v2440 = vpop.f32.mrf.mxu0
      %2441 = vmatprep.mubr.f32.mxu0 0.0
      %2442 = vmatmul.mubr.f32.gmra.mxu0 %v2251
      %v2443 = vpop.f32.mrf.mxu0
      %v2444 = vadd.f32 0.0, %v2443
      %v2445 = vpop.f32.mrf.mxu0
      %2446 = vmatprep.mubr.f32.mxu0 0.0
      %2447 = vmatmul.mubr.f32.gmra.mxu0 %v2253
      %v2448 = vpop.f32.mrf.mxu0
      %v2449 = vadd.f32 0.0, %v2448
      %v2450 = vpop.f32.mrf.mxu0
      %2451 = vmatprep.mubr.f32.mxu0 0.0
      %2452 = vmatmul.mubr.f32.gmra.mxu0 %v2255
      %v2453 = vpop.f32.mrf.mxu0
      %v2454 = vadd.f32 0.0, %v2453
      %v2455 = vpop.f32.mrf.mxu0
      %2456 = vmatprep.mubr.f32.mxu0 0.0
      %2457 = vmatmul.mubr.f32.gmra.mxu0 %v2257
      %v2458 = vpop.f32.mrf.mxu0
      %v2459 = vadd.f32 0.0, %v2458
      %v2460 = vpop.f32.mrf.mxu0
      %2461 = vmatprep.mubr.f32.mxu0 0.0
      %2462 = vmatmul.mubr.f32.gmra.mxu0 %v2259
      %v2463 = vpop.f32.mrf.mxu0
      %v2464 = vadd.f32 0.0, %v2463
      %v2465 = vpop.f32.mrf.mxu0
      %2466 = vmatprep.mubr.f32.mxu0 0.0
      %2467 = vmatmul.mubr.f32.gmra.mxu0 %v2261
      %v2468 = vpop.f32.mrf.mxu0
      %v2469 = vadd.f32 0.0, %v2468
      %v2470 = vpop.f32.mrf.mxu0
      %2471 = vmatprep.mubr.f32.mxu0 0.0
      %2472 = vmatmul.mubr.f32.gmra.mxu0 %v2263
      %v2473 = vpop.f32.mrf.mxu0
      %v2474 = vadd.f32 0.0, %v2473
      %v2475 = vpop.f32.mrf.mxu0
      %2476 = vmatprep.mubr.f32.mxu0 0.0
      %2477 = vmatmul.mubr.f32.gmra.mxu0 %v2265
      %v2478 = vpop.f32.mrf.mxu0
      %v2479 = vadd.f32 0.0, %v2478
      %v2480 = vpop.f32.mrf.mxu0
      %2481 = vmatprep.mubr.f32.mxu0 0.0
      %2482 = vmatmul.mubr.f32.gmra.mxu0 %v2267
      %v2483 = vpop.f32.mrf.mxu0
      %v2484 = vadd.f32 0.0, %v2483
      %v2485 = vpop.f32.mrf.mxu0
      %2486 = vmatprep.mubr.f32.mxu0 0.0
      %2487 = vmatmul.mubr.f32.gmra.mxu0 %v2269
      %v2488 = vpop.f32.mrf.mxu0
      %v2489 = vadd.f32 0.0, %v2488
      %v2490 = vpop.f32.mrf.mxu0
      %2491 = vmatprep.mubr.f32.mxu0 0.0
      %2492 = vmatmul.mubr.f32.gmra.mxu0 %v2271
      %v2493 = vpop.f32.mrf.mxu0
      %v2494 = vadd.f32 0.0, %v2493
      %v2495 = vpop.f32.mrf.mxu0
      %2496 = vmatprep.mubr.f32.mxu0 0.0
      %2497 = vmatmul.mubr.f32.gmra.mxu0 %v2273
      %v2498 = vpop.f32.mrf.mxu0
      %v2499 = vadd.f32 0.0, %v2498
      %v2500 = vpop.f32.mrf.mxu0
      %2501 = vmatprep.mubr.f32.mxu0 0.0
      %2502 = vmatmul.mubr.f32.gmra.mxu0 %v2275
      %v2503 = vpop.f32.mrf.mxu0
      %v2504 = vadd.f32 0.0, %v2503
      %v2505 = vpop.f32.mrf.mxu0
      %2506 = vmatprep.mubr.f32.mxu0 0.0
      %2507 = vmatmul.mubr.f32.gmra.mxu0 %v2277
      %v2508 = vpop.f32.mrf.mxu0
      %v2509 = vadd.f32 0.0, %v2508
      %v2510 = vpop.f32.mrf.mxu0
      %2511 = vmatprep.mubr.f32.mxu0 0.0
      %2512 = vmatmul.mubr.f32.gmra.mxu0 %v2279
      %v2513 = vpop.f32.mrf.mxu0
      %v2514 = vadd.f32 0.0, %v2513
      %v2515 = vpop.f32.mrf.mxu0
      %2516 = vmatprep.mubr.f32.mxu0 0.0
      %2517 = vmatmul.mubr.f32.gmra.mxu0 %v2281
      %v2518 = vpop.f32.mrf.mxu0
      %v2519 = vadd.f32 0.0, %v2518
      %v2520 = vpop.f32.mrf.mxu0
      %2521 = vmatprep.mubr.f32.mxu0 0.0
      %2522 = vmatmul.mubr.f32.gmra.mxu0 %v2283
      %v2523 = vpop.f32.mrf.mxu0
      %v2524 = vadd.f32 0.0, %v2523
      %v2525 = vpop.f32.mrf.mxu0
      %2526 = vmatprep.mubr.f32.mxu0 0.0
      %2527 = vmatmul.mubr.f32.gmra.mxu0 %v2285
      %v2528 = vpop.f32.mrf.mxu0
      %v2529 = vadd.f32 0.0, %v2528
      %v2530 = vpop.f32.mrf.mxu0
      %2531 = vdwg.mxu0
      %v2532 = vadd.f32 %v2103, %v2354
      %v2533 = vadd.f32 %v2104, %v2359
      %v2534 = vadd.f32 %v2105, %v2364
      %v2535 = vadd.f32 %v2106, %v2369
      %v2536 = vadd.f32 %v2107, %v2374
      %v2537 = vadd.f32 %v2108, %v2379
      %v2538 = vadd.f32 %v2109, %v2384
      %v2539 = vadd.f32 %v2110, %v2389
      %v2540 = vadd.f32 %v2111, %v2394
      %v2541 = vadd.f32 %v2112, %v2399
      %v2542 = vadd.f32 %v2113, %v2404
      %v2543 = vadd.f32 %v2114, %v2409
      %v2544 = vadd.f32 %v2115, %v2414
      %v2545 = vadd.f32 %v2116, %v2419
      %v2546 = vadd.f32 %v2117, %v2424
      %v2547 = vadd.f32 %v2118, %v2429
      %v2548 = vadd.f32 %v2119, %v2434
      %v2549 = vadd.f32 %v2120, %v2439
      %v2550 = vadd.f32 %v2121, %v2444
      %v2551 = vadd.f32 %v2122, %v2449
      %v2552 = vadd.f32 %v2123, %v2454
      %v2553 = vadd.f32 %v2124, %v2459
      %v2554 = vadd.f32 %v2125, %v2464
      %v2555 = vadd.f32 %v2126, %v2469
      %v2556 = vadd.f32 %v2127, %v2474
      %v2557 = vadd.f32 %v2128, %v2479
      %v2558 = vadd.f32 %v2129, %v2484
      %v2559 = vadd.f32 %v2130, %v2489
      %v2560 = vadd.f32 %v2131, %v2494
      %v2561 = vadd.f32 %v2132, %v2499
      %v2562 = vadd.f32 %v2133, %v2504
      %v2563 = vadd.f32 %v2134, %v2509
      %v2564 = vadd.f32 %v2135, %v2514
      %v2565 = vadd.f32 %v2136, %v2519
      %v2566 = vadd.f32 %v2137, %v2524
      %v2567 = vadd.f32 %v2138, %v2529
      %s2568 = scalar_lea.vmem %s1, 48
      %v2569 = vld [vmem:[%s2568] sm:$0xff]
      %v2572 = vrot.slane %v237, 4
      %v2573 = vsel %vm2141, %v2213, %v2572
      %v2574 = vrot.slane %v238, 4
      %v2575 = vsel %vm2141, %v2572, %v2574
      %v2576 = vsel %vm353, %v2573, 0
      %v2578 = vsel %vm353, %v2575, 0
      %2580 = vmatprep.subr.mxu0 0.0
      %2581 = vmatpush1.msra.mxu0 0.0
      %2582 = vmatprep.subr.mxu0 0.0
      %2583 = vmatpush1.msra.mxu0 0.0
      %2584 = vmatprep.subr.mxu0 0.0
      %2585 = vmatpush1.msra.mxu0 0.0
      %2586 = vmatprep.subr.mxu0 0.0
      %2587 = vmatpush1.msra.mxu0 0.0
      %2588 = vmatprep.subr.mxu0 0.0
      %2589 = vmatpush1.msra.mxu0 0.0
      %2590 = vmatprep.subr.mxu0 0.0
      %2591 = vmatpush1.msra.mxu0 0.0
      %2592 = vmatprep.subr.mxu0 0.0
      %2593 = vmatpush1.msra.mxu0 0.0
      %2594 = vmatprep.subr.mxu0 0.0
      %2595 = vmatpush1.msra.mxu0 0.0
      %2596 = vmatprep.subr.mxu0 0.0
      %2597 = vmatpush1.msra.mxu0 0.0
      %2598 = vmatprep.subr.mxu0 0.0
      %2599 = vmatpush1.msra.mxu0 0.0
      %2600 = vmatprep.subr.mxu0 0.0
      %2601 = vmatpush1.msra.mxu0 0.0
      %2602 = vmatprep.subr.mxu0 0.0
      %2603 = vmatpush1.msra.mxu0 0.0
      %2604 = vmatprep.subr.mxu0 0.0
      %2605 = vmatpush1.msra.mxu0 0.0
      %2606 = vmatprep.subr.mxu0 0.0
      %2607 = vmatpush1.msra.mxu0 0.0
      %2608 = vmatprep.subr.mxu0 0.0
      %2609 = vmatpush1.msra.mxu0 0.0
      %2610 = vmatprep.subr.mxu0 0.0
      %2611 = vmatpush1.msra.mxu0 %v2569
      %2612 = vmatprep.subr.mxu0 0.0
      %2613 = vmatpush2.msra.mxu0 0.0
      %2614 = vmatprep.subr.mxu0 0.0
      %2615 = vmatpush2.msra.mxu0 0.0
      %2616 = vmatprep.subr.mxu0 0.0
      %2617 = vmatpush2.msra.mxu0 0.0
      %2618 = vmatprep.subr.mxu0 0.0
      %2619 = vmatpush2.msra.mxu0 0.0
      %2620 = vmatprep.subr.mxu0 0.0
      %2621 = vmatpush2.msra.mxu0 0.0
      %2622 = vmatprep.subr.mxu0 0.0
      %2623 = vmatpush2.msra.mxu0 0.0
      %2624 = vmatprep.subr.mxu0 0.0
      %2625 = vmatpush2.msra.mxu0 0.0
      %2626 = vmatprep.subr.mxu0 0.0
      %2627 = vmatpush2.msra.mxu0 0.0
      %2628 = vmatprep.subr.mxu0 0.0
      %2629 = vmatpush2.msra.mxu0 0.0
      %2630 = vmatprep.subr.mxu0 0.0
      %2631 = vmatpush2.msra.mxu0 0.0
      %2632 = vmatprep.subr.mxu0 0.0
      %2633 = vmatpush2.msra.mxu0 0.0
      %2634 = vmatprep.subr.mxu0 0.0
      %2635 = vmatpush2.msra.mxu0 0.0
      %2636 = vmatprep.subr.mxu0 0.0
      %2637 = vmatpush2.msra.mxu0 0.0
      %2638 = vmatprep.subr.mxu0 0.0
      %2639 = vmatpush2.msra.mxu0 0.0
      %2640 = vmatprep.subr.mxu0 0.0
      %2641 = vmatpush2.msra.mxu0 0.0
      %2642 = vmatprep.subr.mxu0 0.0
      %2643 = vmatpush2.msra.mxu0 0.0
      %2644 = vmatprep.mubr.f32.mxu0 0.0
      %2645 = vmatmul.mubr.f32.gmra.mxu0 %v2219
      %v2646 = vpop.f32.mrf.mxu0
      %v2647 = vadd.f32 0.0, %v2646
      %v2648 = vpop.f32.mrf.mxu0
      %2649 = vmatprep.mubr.f32.mxu0 0.0
      %2650 = vmatmul.mubr.f32.gmra.mxu0 %v2221
      %v2651 = vpop.f32.mrf.mxu0
      %v2652 = vadd.f32 0.0, %v2651
      %v2653 = vpop.f32.mrf.mxu0
      %2654 = vmatprep.mubr.f32.mxu0 0.0
      %2655 = vmatmul.mubr.f32.gmra.mxu0 %v2223
      %v2656 = vpop.f32.mrf.mxu0
      %v2657 = vadd.f32 0.0, %v2656
      %v2658 = vpop.f32.mrf.mxu0
      %2659 = vmatprep.mubr.f32.mxu0 0.0
      %2660 = vmatmul.mubr.f32.gmra.mxu0 %v2225
      %v2661 = vpop.f32.mrf.mxu0
      %v2662 = vadd.f32 0.0, %v2661
      %v2663 = vpop.f32.mrf.mxu0
      %2664 = vmatprep.mubr.f32.mxu0 0.0
      %2665 = vmatmul.mubr.f32.gmra.mxu0 %v2227
      %v2666 = vpop.f32.mrf.mxu0
      %v2667 = vadd.f32 0.0, %v2666
      %v2668 = vpop.f32.mrf.mxu0
      %2669 = vmatprep.mubr.f32.mxu0 0.0
      %2670 = vmatmul.mubr.f32.gmra.mxu0 %v2229
      %v2671 = vpop.f32.mrf.mxu0
      %v2672 = vadd.f32 0.0, %v2671
      %v2673 = vpop.f32.mrf.mxu0
      %2674 = vmatprep.mubr.f32.mxu0 0.0
      %2675 = vmatmul.mubr.f32.gmra.mxu0 %v2231
      %v2676 = vpop.f32.mrf.mxu0
      %v2677 = vadd.f32 0.0, %v2676
      %v2678 = vpop.f32.mrf.mxu0
      %2679 = vmatprep.mubr.f32.mxu0 0.0
      %2680 = vmatmul.mubr.f32.gmra.mxu0 %v2233
      %v2681 = vpop.f32.mrf.mxu0
      %v2682 = vadd.f32 0.0, %v2681
      %v2683 = vpop.f32.mrf.mxu0
      %2684 = vmatprep.mubr.f32.mxu0 0.0
      %2685 = vmatmul.mubr.f32.gmra.mxu0 %v2235
      %v2686 = vpop.f32.mrf.mxu0
      %v2687 = vadd.f32 0.0, %v2686
      %v2688 = vpop.f32.mrf.mxu0
      %2689 = vmatprep.mubr.f32.mxu0 0.0
      %2690 = vmatmul.mubr.f32.gmra.mxu0 %v2237
      %v2691 = vpop.f32.mrf.mxu0
      %v2692 = vadd.f32 0.0, %v2691
      %v2693 = vpop.f32.mrf.mxu0
      %2694 = vmatprep.mubr.f32.mxu0 0.0
      %2695 = vmatmul.mubr.f32.gmra.mxu0 %v2239
      %v2696 = vpop.f32.mrf.mxu0
      %v2697 = vadd.f32 0.0, %v2696
      %v2698 = vpop.f32.mrf.mxu0
      %2699 = vmatprep.mubr.f32.mxu0 0.0
      %2700 = vmatmul.mubr.f32.gmra.mxu0 %v2241
      %v2701 = vpop.f32.mrf.mxu0
      %v2702 = vadd.f32 0.0, %v2701
      %v2703 = vpop.f32.mrf.mxu0
      %2704 = vmatprep.mubr.f32.mxu0 0.0
      %2705 = vmatmul.mubr.f32.gmra.mxu0 %v2243
      %v2706 = vpop.f32.mrf.mxu0
      %v2707 = vadd.f32 0.0, %v2706
      %v2708 = vpop.f32.mrf.mxu0
      %2709 = vmatprep.mubr.f32.mxu0 0.0
      %2710 = vmatmul.mubr.f32.gmra.mxu0 %v2245
      %v2711 = vpop.f32.mrf.mxu0
      %v2712 = vadd.f32 0.0, %v2711
      %v2713 = vpop.f32.mrf.mxu0
      %2714 = vmatprep.mubr.f32.mxu0 0.0
      %2715 = vmatmul.mubr.f32.gmra.mxu0 %v2247
      %v2716 = vpop.f32.mrf.mxu0
      %v2717 = vadd.f32 0.0, %v2716
      %v2718 = vpop.f32.mrf.mxu0
      %2719 = vmatprep.mubr.f32.mxu0 0.0
      %2720 = vmatmul.mubr.f32.gmra.mxu0 %v2249
      %v2721 = vpop.f32.mrf.mxu0
      %v2722 = vadd.f32 0.0, %v2721
      %v2723 = vpop.f32.mrf.mxu0
      %2724 = vmatprep.mubr.f32.mxu0 0.0
      %2725 = vmatmul.mubr.f32.gmra.mxu0 %v2251
      %v2726 = vpop.f32.mrf.mxu0
      %v2727 = vadd.f32 0.0, %v2726
      %v2728 = vpop.f32.mrf.mxu0
      %2729 = vmatprep.mubr.f32.mxu0 0.0
      %2730 = vmatmul.mubr.f32.gmra.mxu0 %v2253
      %v2731 = vpop.f32.mrf.mxu0
      %v2732 = vadd.f32 0.0, %v2731
      %v2733 = vpop.f32.mrf.mxu0
      %2734 = vmatprep.mubr.f32.mxu0 0.0
      %2735 = vmatmul.mubr.f32.gmra.mxu0 %v2255
      %v2736 = vpop.f32.mrf.mxu0
      %v2737 = vadd.f32 0.0, %v2736
      %v2738 = vpop.f32.mrf.mxu0
      %2739 = vmatprep.mubr.f32.mxu0 0.0
      %2740 = vmatmul.mubr.f32.gmra.mxu0 %v2257
      %v2741 = vpop.f32.mrf.mxu0
      %v2742 = vadd.f32 0.0, %v2741
      %v2743 = vpop.f32.mrf.mxu0
      %2744 = vmatprep.mubr.f32.mxu0 0.0
      %2745 = vmatmul.mubr.f32.gmra.mxu0 %v2259
      %v2746 = vpop.f32.mrf.mxu0
      %v2747 = vadd.f32 0.0, %v2746
      %v2748 = vpop.f32.mrf.mxu0
      %2749 = vmatprep.mubr.f32.mxu0 0.0
      %2750 = vmatmul.mubr.f32.gmra.mxu0 %v2261
      %v2751 = vpop.f32.mrf.mxu0
      %v2752 = vadd.f32 0.0, %v2751
      %v2753 = vpop.f32.mrf.mxu0
      %2754 = vmatprep.mubr.f32.mxu0 0.0
      %2755 = vmatmul.mubr.f32.gmra.mxu0 %v2263
      %v2756 = vpop.f32.mrf.mxu0
      %v2757 = vadd.f32 0.0, %v2756
      %v2758 = vpop.f32.mrf.mxu0
      %2759 = vmatprep.mubr.f32.mxu0 0.0
      %2760 = vmatmul.mubr.f32.gmra.mxu0 %v2265
      %v2761 = vpop.f32.mrf.mxu0
      %v2762 = vadd.f32 0.0, %v2761
      %v2763 = vpop.f32.mrf.mxu0
      %2764 = vmatprep.mubr.f32.mxu0 0.0
      %2765 = vmatmul.mubr.f32.gmra.mxu0 %v2267
      %v2766 = vpop.f32.mrf.mxu0
      %v2767 = vadd.f32 0.0, %v2766
      %v2768 = vpop.f32.mrf.mxu0
      %2769 = vmatprep.mubr.f32.mxu0 0.0
      %2770 = vmatmul.mubr.f32.gmra.mxu0 %v2269
      %v2771 = vpop.f32.mrf.mxu0
      %v2772 = vadd.f32 0.0, %v2771
      %v2773 = vpop.f32.mrf.mxu0
      %2774 = vmatprep.mubr.f32.mxu0 0.0
      %2775 = vmatmul.mubr.f32.gmra.mxu0 %v2271
      %v2776 = vpop.f32.mrf.mxu0
      %v2777 = vadd.f32 0.0, %v2776
      %v2778 = vpop.f32.mrf.mxu0
      %2779 = vmatprep.mubr.f32.mxu0 0.0
      %2780 = vmatmul.mubr.f32.gmra.mxu0 %v2273
      %v2781 = vpop.f32.mrf.mxu0
      %v2782 = vadd.f32 0.0, %v2781
      %v2783 = vpop.f32.mrf.mxu0
      %2784 = vmatprep.mubr.f32.mxu0 0.0
      %2785 = vmatmul.mubr.f32.gmra.mxu0 %v2275
      %v2786 = vpop.f32.mrf.mxu0
      %v2787 = vadd.f32 0.0, %v2786
      %v2788 = vpop.f32.mrf.mxu0
      %2789 = vmatprep.mubr.f32.mxu0 0.0
      %2790 = vmatmul.mubr.f32.gmra.mxu0 %v2277
      %v2791 = vpop.f32.mrf.mxu0
      %v2792 = vadd.f32 0.0, %v2791
      %v2793 = vpop.f32.mrf.mxu0
      %2794 = vmatprep.mubr.f32.mxu0 0.0
      %2795 = vmatmul.mubr.f32.gmra.mxu0 %v2279
      %v2796 = vpop.f32.mrf.mxu0
      %v2797 = vadd.f32 0.0, %v2796
      %v2798 = vpop.f32.mrf.mxu0
      %2799 = vmatprep.mubr.f32.mxu0 0.0
      %2800 = vmatmul.mubr.f32.gmra.mxu0 %v2281
      %v2801 = vpop.f32.mrf.mxu0
      %v2802 = vadd.f32 0.0, %v2801
      %v2803 = vpop.f32.mrf.mxu0
      %2804 = vmatprep.mubr.f32.mxu0 0.0
      %2805 = vmatmul.mubr.f32.gmra.mxu0 %v2283
      %v2806 = vpop.f32.mrf.mxu0
      %v2807 = vadd.f32 0.0, %v2806
      %v2808 = vpop.f32.mrf.mxu0
      %2809 = vmatprep.mubr.f32.mxu0 0.0
      %2810 = vmatmul.mubr.f32.gmra.mxu0 %v2285
      %v2811 = vpop.f32.mrf.mxu0
      %v2812 = vadd.f32 0.0, %v2811
      %v2813 = vpop.f32.mrf.mxu0
      %2814 = vmatprep.mubr.f32.mxu0 0.0
      %2815 = vmatmul.mubr.f32.gmra.mxu0 %v2576
      %v2816 = vpop.f32.mrf.mxu0
      %v2817 = vadd.f32 0.0, %v2816
      %v2818 = vpop.f32.mrf.mxu0
      %2819 = vmatprep.mubr.f32.mxu0 0.0
      %2820 = vmatmul.mubr.f32.gmra.mxu0 %v2578
      %v2821 = vpop.f32.mrf.mxu0
      %v2822 = vadd.f32 0.0, %v2821
      %v2823 = vpop.f32.mrf.mxu0
      %2824 = vdwg.mxu0
      %v2825 = vadd.f32 %v2532, %v2647
      %v2826 = vadd.f32 %v2533, %v2652
      %v2827 = vadd.f32 %v2534, %v2657
      %v2828 = vadd.f32 %v2535, %v2662
      %v2829 = vadd.f32 %v2536, %v2667
      %v2830 = vadd.f32 %v2537, %v2672
      %v2831 = vadd.f32 %v2538, %v2677
      %v2832 = vadd.f32 %v2539, %v2682
      %v2833 = vadd.f32 %v2540, %v2687
      %v2834 = vadd.f32 %v2541, %v2692
      %v2835 = vadd.f32 %v2542, %v2697
      %v2836 = vadd.f32 %v2543, %v2702
      %v2837 = vadd.f32 %v2544, %v2707
      %v2838 = vadd.f32 %v2545, %v2712
      %v2839 = vadd.f32 %v2546, %v2717
      %v2840 = vadd.f32 %v2547, %v2722
      %v2841 = vadd.f32 %v2548, %v2727
      %v2842 = vadd.f32 %v2549, %v2732
      %v2843 = vadd.f32 %v2550, %v2737
      %v2844 = vadd.f32 %v2551, %v2742
      %v2845 = vadd.f32 %v2552, %v2747
      %v2846 = vadd.f32 %v2553, %v2752
      %v2847 = vadd.f32 %v2554, %v2757
      %v2848 = vadd.f32 %v2555, %v2762
      %v2849 = vadd.f32 %v2556, %v2767
      %v2850 = vadd.f32 %v2557, %v2772
      %v2851 = vadd.f32 %v2558, %v2777
      %v2852 = vadd.f32 %v2559, %v2782
      %v2853 = vadd.f32 %v2560, %v2787
      %v2854 = vadd.f32 %v2561, %v2792
      %v2855 = vadd.f32 %v2562, %v2797
      %v2856 = vadd.f32 %v2563, %v2802
      %v2857 = vadd.f32 %v2564, %v2807
      %v2858 = vadd.f32 %v2565, %v2812
      %v2859 = vadd.f32 %v2566, %v2817
      %v2860 = vadd.f32 %v2567, %v2822
      %s2861 = scalar_lea.vmem %s1, 56
      %v2862 = vld [vmem:[%s2861] sm:$0xff]
      %vm2863 = vcmask 1042432
      %v2864 = vrot.slane %v202, 5
      %v2865 = vrot.slane %v203, 5
      %v2866 = vsel %vm2863, %v2864, %v2865
      %v2867 = vrot.slane %v204, 5
      %v2868 = vsel %vm2863, %v2865, %v2867
      %v2869 = vrot.slane %v205, 5
      %v2870 = vsel %vm2863, %v2867, %v2869
      %v2871 = vrot.slane %v206, 5
      %v2872 = vsel %vm2863, %v2869, %v2871
      %v2873 = vrot.slane %v207, 5
      %v2874 = vsel %vm2863, %v2871, %v2873
      %v2875 = vrot.slane %v208, 5
      %v2876 = vsel %vm2863, %v2873, %v2875
      %v2877 = vrot.slane %v209, 5
      %v2878 = vsel %vm2863, %v2875, %v2877
      %v2879 = vrot.slane %v210, 5
      %v2880 = vsel %vm2863, %v2877, %v2879
      %v2881 = vrot.slane %v211, 5
      %v2882 = vsel %vm2863, %v2879, %v2881
      %v2883 = vrot.slane %v212, 5
      %v2884 = vsel %vm2863, %v2881, %v2883
      %v2885 = vrot.slane %v213, 5
      %v2886 = vsel %vm2863, %v2883, %v2885
      %v2887 = vrot.slane %v214, 5
      %v2888 = vsel %vm2863, %v2885, %v2887
      %v2889 = vrot.slane %v215, 5
      %v2890 = vsel %vm2863, %v2887, %v2889
      %v2891 = vrot.slane %v216, 5
      %v2892 = vsel %vm2863, %v2889, %v2891
      %v2893 = vrot.slane %v217, 5
      %v2894 = vsel %vm2863, %v2891, %v2893
      %v2895 = vrot.slane %v218, 5
      %v2896 = vsel %vm2863, %v2893, %v2895
      %v2897 = vrot.slane %v219, 5
      %v2898 = vsel %vm2863, %v2895, %v2897
      %v2899 = vrot.slane %v220, 5
      %v2900 = vsel %vm2863, %v2897, %v2899
      %v2901 = vrot.slane %v221, 5
      %v2902 = vsel %vm2863, %v2899, %v2901
      %v2903 = vrot.slane %v222, 5
      %v2904 = vsel %vm2863, %v2901, %v2903
      %v2905 = vrot.slane %v223, 5
      %v2906 = vsel %vm2863, %v2903, %v2905
      %v2907 = vrot.slane %v224, 5
      %v2908 = vsel %vm2863, %v2905, %v2907
      %v2909 = vrot.slane %v225, 5
      %v2910 = vsel %vm2863, %v2907, %v2909
      %v2911 = vrot.slane %v226, 5
      %v2912 = vsel %vm2863, %v2909, %v2911
      %v2913 = vrot.slane %v227, 5
      %v2914 = vsel %vm2863, %v2911, %v2913
      %v2915 = vrot.slane %v228, 5
      %v2916 = vsel %vm2863, %v2913, %v2915
      %v2917 = vrot.slane %v229, 5
      %v2918 = vsel %vm2863, %v2915, %v2917
      %v2919 = vrot.slane %v230, 5
      %v2920 = vsel %vm2863, %v2917, %v2919
      %v2921 = vrot.slane %v231, 5
      %v2922 = vsel %vm2863, %v2919, %v2921
      %v2923 = vrot.slane %v232, 5
      %v2924 = vsel %vm2863, %v2921, %v2923
      %v2925 = vrot.slane %v233, 5
      %v2926 = vsel %vm2863, %v2923, %v2925
      %v2927 = vrot.slane %v234, 5
      %v2928 = vsel %vm2863, %v2925, %v2927
      %v2929 = vrot.slane %v235, 5
      %v2930 = vsel %vm2863, %v2927, %v2929
      %v2931 = vrot.slane %v236, 5
      %v2932 = vsel %vm2863, %v2929, %v2931
      %v2933 = vrot.slane %v237, 5
      %v2934 = vsel %vm2863, %v2931, %v2933
      %v2935 = vrot.slane %v238, 5
      %v2936 = vsel %vm2863, %v2933, %v2935
      %v2937 = vsel %vm353, %v2866, 0
      %v2939 = vsel %vm353, %v2868, 0
      %v2941 = vsel %vm353, %v2870, 0
      %v2943 = vsel %vm353, %v2872, 0
      %v2945 = vsel %vm353, %v2874, 0
      %v2947 = vsel %vm353, %v2876, 0
      %v2949 = vsel %vm353, %v2878, 0
      %v2951 = vsel %vm353, %v2880, 0
      %v2953 = vsel %vm353, %v2882, 0
      %v2955 = vsel %vm353, %v2884, 0
      %v2957 = vsel %vm353, %v2886, 0
      %v2959 = vsel %vm353, %v2888, 0
      %v2961 = vsel %vm353, %v2890, 0
      %v2963 = vsel %vm353, %v2892, 0
      %v2965 = vsel %vm353, %v2894, 0
      %v2967 = vsel %vm353, %v2896, 0
      %v2969 = vsel %vm353, %v2898, 0
      %v2971 = vsel %vm353, %v2900, 0
      %v2973 = vsel %vm353, %v2902, 0
      %v2975 = vsel %vm353, %v2904, 0
      %v2977 = vsel %vm353, %v2906, 0
      %v2979 = vsel %vm353, %v2908, 0
      %v2981 = vsel %vm353, %v2910, 0
      %v2983 = vsel %vm353, %v2912, 0
      %v2985 = vsel %vm353, %v2914, 0
      %v2987 = vsel %vm353, %v2916, 0
      %v2989 = vsel %vm353, %v2918, 0
      %v2991 = vsel %vm353, %v2920, 0
      %v2993 = vsel %vm353, %v2922, 0
      %v2995 = vsel %vm353, %v2924, 0
      %v2997 = vsel %vm353, %v2926, 0
      %v2999 = vsel %vm353, %v2928, 0
      %v3001 = vsel %vm353, %v2930, 0
      %v3003 = vsel %vm353, %v2932, 0
      %v3005 = vsel %vm353, %v2934, 0
      %v3007 = vsel %vm353, %v2936, 0
      %3009 = vmatprep.subr.mxu0 0.0
      %3010 = vmatpush1.msra.mxu0 0.0
      %3011 = vmatprep.subr.mxu0 0.0
      %3012 = vmatpush1.msra.mxu0 0.0
      %3013 = vmatprep.subr.mxu0 0.0
      %3014 = vmatpush1.msra.mxu0 0.0
      %3015 = vmatprep.subr.mxu0 0.0
      %3016 = vmatpush1.msra.mxu0 0.0
      %3017 = vmatprep.subr.mxu0 0.0
      %3018 = vmatpush1.msra.mxu0 0.0
      %3019 = vmatprep.subr.mxu0 0.0
      %3020 = vmatpush1.msra.mxu0 0.0
      %3021 = vmatprep.subr.mxu0 0.0
      %3022 = vmatpush1.msra.mxu0 0.0
      %3023 = vmatprep.subr.mxu0 0.0
      %3024 = vmatpush1.msra.mxu0 0.0
      %3025 = vmatprep.subr.mxu0 0.0
      %3026 = vmatpush1.msra.mxu0 0.0
      %3027 = vmatprep.subr.mxu0 0.0
      %3028 = vmatpush1.msra.mxu0 0.0
      %3029 = vmatprep.subr.mxu0 0.0
      %3030 = vmatpush1.msra.mxu0 0.0
      %3031 = vmatprep.subr.mxu0 0.0
      %3032 = vmatpush1.msra.mxu0 0.0
      %3033 = vmatprep.subr.mxu0 0.0
      %3034 = vmatpush1.msra.mxu0 0.0
      %3035 = vmatprep.subr.mxu0 0.0
      %3036 = vmatpush1.msra.mxu0 0.0
      %3037 = vmatprep.subr.mxu0 0.0
      %3038 = vmatpush1.msra.mxu0 0.0
      %3039 = vmatprep.subr.mxu0 0.0
      %3040 = vmatpush1.msra.mxu0 %v2862
      %3041 = vmatprep.subr.mxu0 0.0
      %3042 = vmatpush2.msra.mxu0 0.0
      %3043 = vmatprep.subr.mxu0 0.0
      %3044 = vmatpush2.msra.mxu0 0.0
      %3045 = vmatprep.subr.mxu0 0.0
      %3046 = vmatpush2.msra.mxu0 0.0
      %3047 = vmatprep.subr.mxu0 0.0
      %3048 = vmatpush2.msra.mxu0 0.0
      %3049 = vmatprep.subr.mxu0 0.0
      %3050 = vmatpush2.msra.mxu0 0.0
      %3051 = vmatprep.subr.mxu0 0.0
      %3052 = vmatpush2.msra.mxu0 0.0
      %3053 = vmatprep.subr.mxu0 0.0
      %3054 = vmatpush2.msra.mxu0 0.0
      %3055 = vmatprep.subr.mxu0 0.0
      %3056 = vmatpush2.msra.mxu0 0.0
      %3057 = vmatprep.subr.mxu0 0.0
      %3058 = vmatpush2.msra.mxu0 0.0
      %3059 = vmatprep.subr.mxu0 0.0
      %3060 = vmatpush2.msra.mxu0 0.0
      %3061 = vmatprep.subr.mxu0 0.0
      %3062 = vmatpush2.msra.mxu0 0.0
      %3063 = vmatprep.subr.mxu0 0.0
      %3064 = vmatpush2.msra.mxu0 0.0
      %3065 = vmatprep.subr.mxu0 0.0
      %3066 = vmatpush2.msra.mxu0 0.0
      %3067 = vmatprep.subr.mxu0 0.0
      %3068 = vmatpush2.msra.mxu0 0.0
      %3069 = vmatprep.subr.mxu0 0.0
      %3070 = vmatpush2.msra.mxu0 0.0
      %3071 = vmatprep.subr.mxu0 0.0
      %3072 = vmatpush2.msra.mxu0 0.0
      %3073 = vmatprep.mubr.f32.mxu0 0.0
      %3074 = vmatmul.mubr.f32.gmra.mxu0 %v2937
      %v3075 = vpop.f32.mrf.mxu0
      %v3076 = vadd.f32 0.0, %v3075
      %v3077 = vpop.f32.mrf.mxu0
      %3078 = vmatprep.mubr.f32.mxu0 0.0
      %3079 = vmatmul.mubr.f32.gmra.mxu0 %v2939
      %v3080 = vpop.f32.mrf.mxu0
      %v3081 = vadd.f32 0.0, %v3080
      %v3082 = vpop.f32.mrf.mxu0
      %3083 = vmatprep.mubr.f32.mxu0 0.0
      %3084 = vmatmul.mubr.f32.gmra.mxu0 %v2941
      %v3085 = vpop.f32.mrf.mxu0
      %v3086 = vadd.f32 0.0, %v3085
      %v3087 = vpop.f32.mrf.mxu0
      %3088 = vmatprep.mubr.f32.mxu0 0.0
      %3089 = vmatmul.mubr.f32.gmra.mxu0 %v2943
      %v3090 = vpop.f32.mrf.mxu0
      %v3091 = vadd.f32 0.0, %v3090
      %v3092 = vpop.f32.mrf.mxu0
      %3093 = vmatprep.mubr.f32.mxu0 0.0
      %3094 = vmatmul.mubr.f32.gmra.mxu0 %v2945
      %v3095 = vpop.f32.mrf.mxu0
      %v3096 = vadd.f32 0.0, %v3095
      %v3097 = vpop.f32.mrf.mxu0
      %3098 = vmatprep.mubr.f32.mxu0 0.0
      %3099 = vmatmul.mubr.f32.gmra.mxu0 %v2947
      %v3100 = vpop.f32.mrf.mxu0
      %v3101 = vadd.f32 0.0, %v3100
      %v3102 = vpop.f32.mrf.mxu0
      %3103 = vmatprep.mubr.f32.mxu0 0.0
      %3104 = vmatmul.mubr.f32.gmra.mxu0 %v2949
      %v3105 = vpop.f32.mrf.mxu0
      %v3106 = vadd.f32 0.0, %v3105
      %v3107 = vpop.f32.mrf.mxu0
      %3108 = vmatprep.mubr.f32.mxu0 0.0
      %3109 = vmatmul.mubr.f32.gmra.mxu0 %v2951
      %v3110 = vpop.f32.mrf.mxu0
      %v3111 = vadd.f32 0.0, %v3110
      %v3112 = vpop.f32.mrf.mxu0
      %3113 = vmatprep.mubr.f32.mxu0 0.0
      %3114 = vmatmul.mubr.f32.gmra.mxu0 %v2953
      %v3115 = vpop.f32.mrf.mxu0
      %v3116 = vadd.f32 0.0, %v3115
      %v3117 = vpop.f32.mrf.mxu0
      %3118 = vmatprep.mubr.f32.mxu0 0.0
      %3119 = vmatmul.mubr.f32.gmra.mxu0 %v2955
      %v3120 = vpop.f32.mrf.mxu0
      %v3121 = vadd.f32 0.0, %v3120
      %v3122 = vpop.f32.mrf.mxu0
      %3123 = vmatprep.mubr.f32.mxu0 0.0
      %3124 = vmatmul.mubr.f32.gmra.mxu0 %v2957
      %v3125 = vpop.f32.mrf.mxu0
      %v3126 = vadd.f32 0.0, %v3125
      %v3127 = vpop.f32.mrf.mxu0
      %3128 = vmatprep.mubr.f32.mxu0 0.0
      %3129 = vmatmul.mubr.f32.gmra.mxu0 %v2959
      %v3130 = vpop.f32.mrf.mxu0
      %v3131 = vadd.f32 0.0, %v3130
      %v3132 = vpop.f32.mrf.mxu0
      %3133 = vmatprep.mubr.f32.mxu0 0.0
      %3134 = vmatmul.mubr.f32.gmra.mxu0 %v2961
      %v3135 = vpop.f32.mrf.mxu0
      %v3136 = vadd.f32 0.0, %v3135
      %v3137 = vpop.f32.mrf.mxu0
      %3138 = vmatprep.mubr.f32.mxu0 0.0
      %3139 = vmatmul.mubr.f32.gmra.mxu0 %v2963
      %v3140 = vpop.f32.mrf.mxu0
      %v3141 = vadd.f32 0.0, %v3140
      %v3142 = vpop.f32.mrf.mxu0
      %3143 = vmatprep.mubr.f32.mxu0 0.0
      %3144 = vmatmul.mubr.f32.gmra.mxu0 %v2965
      %v3145 = vpop.f32.mrf.mxu0
      %v3146 = vadd.f32 0.0, %v3145
      %v3147 = vpop.f32.mrf.mxu0
      %3148 = vmatprep.mubr.f32.mxu0 0.0
      %3149 = vmatmul.mubr.f32.gmra.mxu0 %v2967
      %v3150 = vpop.f32.mrf.mxu0
      %v3151 = vadd.f32 0.0, %v3150
      %v3152 = vpop.f32.mrf.mxu0
      %3153 = vmatprep.mubr.f32.mxu0 0.0
      %3154 = vmatmul.mubr.f32.gmra.mxu0 %v2969
      %v3155 = vpop.f32.mrf.mxu0
      %v3156 = vadd.f32 0.0, %v3155
      %v3157 = vpop.f32.mrf.mxu0
      %3158 = vmatprep.mubr.f32.mxu0 0.0
      %3159 = vmatmul.mubr.f32.gmra.mxu0 %v2971
      %v3160 = vpop.f32.mrf.mxu0
      %v3161 = vadd.f32 0.0, %v3160
      %v3162 = vpop.f32.mrf.mxu0
      %3163 = vmatprep.mubr.f32.mxu0 0.0
      %3164 = vmatmul.mubr.f32.gmra.mxu0 %v2973
      %v3165 = vpop.f32.mrf.mxu0
      %v3166 = vadd.f32 0.0, %v3165
      %v3167 = vpop.f32.mrf.mxu0
      %3168 = vmatprep.mubr.f32.mxu0 0.0
      %3169 = vmatmul.mubr.f32.gmra.mxu0 %v2975
      %v3170 = vpop.f32.mrf.mxu0
      %v3171 = vadd.f32 0.0, %v3170
      %v3172 = vpop.f32.mrf.mxu0
      %3173 = vmatprep.mubr.f32.mxu0 0.0
      %3174 = vmatmul.mubr.f32.gmra.mxu0 %v2977
      %v3175 = vpop.f32.mrf.mxu0
      %v3176 = vadd.f32 0.0, %v3175
      %v3177 = vpop.f32.mrf.mxu0
      %3178 = vmatprep.mubr.f32.mxu0 0.0
      %3179 = vmatmul.mubr.f32.gmra.mxu0 %v2979
      %v3180 = vpop.f32.mrf.mxu0
      %v3181 = vadd.f32 0.0, %v3180
      %v3182 = vpop.f32.mrf.mxu0
      %3183 = vmatprep.mubr.f32.mxu0 0.0
      %3184 = vmatmul.mubr.f32.gmra.mxu0 %v2981
      %v3185 = vpop.f32.mrf.mxu0
      %v3186 = vadd.f32 0.0, %v3185
      %v3187 = vpop.f32.mrf.mxu0
      %3188 = vmatprep.mubr.f32.mxu0 0.0
      %3189 = vmatmul.mubr.f32.gmra.mxu0 %v2983
      %v3190 = vpop.f32.mrf.mxu0
      %v3191 = vadd.f32 0.0, %v3190
      %v3192 = vpop.f32.mrf.mxu0
      %3193 = vmatprep.mubr.f32.mxu0 0.0
      %3194 = vmatmul.mubr.f32.gmra.mxu0 %v2985
      %v3195 = vpop.f32.mrf.mxu0
      %v3196 = vadd.f32 0.0, %v3195
      %v3197 = vpop.f32.mrf.mxu0
      %3198 = vmatprep.mubr.f32.mxu0 0.0
      %3199 = vmatmul.mubr.f32.gmra.mxu0 %v2987
      %v3200 = vpop.f32.mrf.mxu0
      %v3201 = vadd.f32 0.0, %v3200
      %v3202 = vpop.f32.mrf.mxu0
      %3203 = vmatprep.mubr.f32.mxu0 0.0
      %3204 = vmatmul.mubr.f32.gmra.mxu0 %v2989
      %v3205 = vpop.f32.mrf.mxu0
      %v3206 = vadd.f32 0.0, %v3205
      %v3207 = vpop.f32.mrf.mxu0
      %3208 = vmatprep.mubr.f32.mxu0 0.0
      %3209 = vmatmul.mubr.f32.gmra.mxu0 %v2991
      %v3210 = vpop.f32.mrf.mxu0
      %v3211 = vadd.f32 0.0, %v3210
      %v3212 = vpop.f32.mrf.mxu0
      %3213 = vmatprep.mubr.f32.mxu0 0.0
      %3214 = vmatmul.mubr.f32.gmra.mxu0 %v2993
      %v3215 = vpop.f32.mrf.mxu0
      %v3216 = vadd.f32 0.0, %v3215
      %v3217 = vpop.f32.mrf.mxu0
      %3218 = vmatprep.mubr.f32.mxu0 0.0
      %3219 = vmatmul.mubr.f32.gmra.mxu0 %v2995
      %v3220 = vpop.f32.mrf.mxu0
      %v3221 = vadd.f32 0.0, %v3220
      %v3222 = vpop.f32.mrf.mxu0
      %3223 = vmatprep.mubr.f32.mxu0 0.0
      %3224 = vmatmul.mubr.f32.gmra.mxu0 %v2997
      %v3225 = vpop.f32.mrf.mxu0
      %v3226 = vadd.f32 0.0, %v3225
      %v3227 = vpop.f32.mrf.mxu0
      %3228 = vmatprep.mubr.f32.mxu0 0.0
      %3229 = vmatmul.mubr.f32.gmra.mxu0 %v2999
      %v3230 = vpop.f32.mrf.mxu0
      %v3231 = vadd.f32 0.0, %v3230
      %v3232 = vpop.f32.mrf.mxu0
      %3233 = vmatprep.mubr.f32.mxu0 0.0
      %3234 = vmatmul.mubr.f32.gmra.mxu0 %v3001
      %v3235 = vpop.f32.mrf.mxu0
      %v3236 = vadd.f32 0.0, %v3235
      %v3237 = vpop.f32.mrf.mxu0
      %3238 = vmatprep.mubr.f32.mxu0 0.0
      %3239 = vmatmul.mubr.f32.gmra.mxu0 %v3003
      %v3240 = vpop.f32.mrf.mxu0
      %v3241 = vadd.f32 0.0, %v3240
      %v3242 = vpop.f32.mrf.mxu0
      %3243 = vmatprep.mubr.f32.mxu0 0.0
      %3244 = vmatmul.mubr.f32.gmra.mxu0 %v3005
      %v3245 = vpop.f32.mrf.mxu0
      %v3246 = vadd.f32 0.0, %v3245
      %v3247 = vpop.f32.mrf.mxu0
      %3248 = vmatprep.mubr.f32.mxu0 0.0
      %3249 = vmatmul.mubr.f32.gmra.mxu0 %v3007
      %v3250 = vpop.f32.mrf.mxu0
      %v3251 = vadd.f32 0.0, %v3250
      %v3252 = vpop.f32.mrf.mxu0
      %3253 = vdwg.mxu0
      %v3254 = vadd.f32 %v2825, %v3076
      %v3255 = vadd.f32 %v2826, %v3081
      %v3256 = vadd.f32 %v2827, %v3086
      %v3257 = vadd.f32 %v2828, %v3091
      %v3258 = vadd.f32 %v2829, %v3096
      %v3259 = vadd.f32 %v2830, %v3101
      %v3260 = vadd.f32 %v2831, %v3106
      %v3261 = vadd.f32 %v2832, %v3111
      %v3262 = vadd.f32 %v2833, %v3116
      %v3263 = vadd.f32 %v2834, %v3121
      %v3264 = vadd.f32 %v2835, %v3126
      %v3265 = vadd.f32 %v2836, %v3131
      %v3266 = vadd.f32 %v2837, %v3136
      %v3267 = vadd.f32 %v2838, %v3141
      %v3268 = vadd.f32 %v2839, %v3146
      %v3269 = vadd.f32 %v2840, %v3151
      %v3270 = vadd.f32 %v2841, %v3156
      %v3271 = vadd.f32 %v2842, %v3161
      %v3272 = vadd.f32 %v2843, %v3166
      %v3273 = vadd.f32 %v2844, %v3171
      %v3274 = vadd.f32 %v2845, %v3176
      %v3275 = vadd.f32 %v2846, %v3181
      %v3276 = vadd.f32 %v2847, %v3186
      %v3277 = vadd.f32 %v2848, %v3191
      %v3278 = vadd.f32 %v2849, %v3196
      %v3279 = vadd.f32 %v2850, %v3201
      %v3280 = vadd.f32 %v2851, %v3206
      %v3281 = vadd.f32 %v2852, %v3211
      %v3282 = vadd.f32 %v2853, %v3216
      %v3283 = vadd.f32 %v2854, %v3221
      %v3284 = vadd.f32 %v2855, %v3226
      %v3285 = vadd.f32 %v2856, %v3231
      %v3286 = vadd.f32 %v2857, %v3236
      %v3287 = vadd.f32 %v2858, %v3241
      %v3288 = vadd.f32 %v2859, %v3246
      %v3289 = vadd.f32 %v2860, %v3251
      %s3290 = scalar_lea.vmem %s1, 64
      %v3291 = vld [vmem:[%s3290] sm:$0xff]
      %vm3292 = vcmask 1041408
      %v3293 = vrot.slane %v202, 6
      %v3294 = vrot.slane %v203, 6
      %v3295 = vsel %vm3292, %v3293, %v3294
      %v3296 = vrot.slane %v204, 6
      %v3297 = vsel %vm3292, %v3294, %v3296
      %v3298 = vrot.slane %v205, 6
      %v3299 = vsel %vm3292, %v3296, %v3298
      %v3300 = vrot.slane %v206, 6
      %v3301 = vsel %vm3292, %v3298, %v3300
      %v3302 = vrot.slane %v207, 6
      %v3303 = vsel %vm3292, %v3300, %v3302
      %v3304 = vrot.slane %v208, 6
      %v3305 = vsel %vm3292, %v3302, %v3304
      %v3306 = vrot.slane %v209, 6
      %v3307 = vsel %vm3292, %v3304, %v3306
      %v3308 = vrot.slane %v210, 6
      %v3309 = vsel %vm3292, %v3306, %v3308
      %v3310 = vrot.slane %v211, 6
      %v3311 = vsel %vm3292, %v3308, %v3310
      %v3312 = vrot.slane %v212, 6
      %v3313 = vsel %vm3292, %v3310, %v3312
      %v3314 = vrot.slane %v213, 6
      %v3315 = vsel %vm3292, %v3312, %v3314
      %v3316 = vrot.slane %v214, 6
      %v3317 = vsel %vm3292, %v3314, %v3316
      %v3318 = vrot.slane %v215, 6
      %v3319 = vsel %vm3292, %v3316, %v3318
      %v3320 = vrot.slane %v216, 6
      %v3321 = vsel %vm3292, %v3318, %v3320
      %v3322 = vrot.slane %v217, 6
      %v3323 = vsel %vm3292, %v3320, %v3322
      %v3324 = vrot.slane %v218, 6
      %v3325 = vsel %vm3292, %v3322, %v3324
      %v3326 = vrot.slane %v219, 6
      %v3327 = vsel %vm3292, %v3324, %v3326
      %v3328 = vrot.slane %v220, 6
      %v3329 = vsel %vm3292, %v3326, %v3328
      %v3330 = vrot.slane %v221, 6
      %v3331 = vsel %vm3292, %v3328, %v3330
      %v3332 = vrot.slane %v222, 6
      %v3333 = vsel %vm3292, %v3330, %v3332
      %v3334 = vrot.slane %v223, 6
      %v3335 = vsel %vm3292, %v3332, %v3334
      %v3336 = vrot.slane %v224, 6
      %v3337 = vsel %vm3292, %v3334, %v3336
      %v3338 = vrot.slane %v225, 6
      %v3339 = vsel %vm3292, %v3336, %v3338
      %v3340 = vrot.slane %v226, 6
      %v3341 = vsel %vm3292, %v3338, %v3340
      %v3342 = vrot.slane %v227, 6
      %v3343 = vsel %vm3292, %v3340, %v3342
      %v3344 = vrot.slane %v228, 6
      %v3345 = vsel %vm3292, %v3342, %v3344
      %v3346 = vrot.slane %v229, 6
      %v3347 = vsel %vm3292, %v3344, %v3346
      %v3348 = vrot.slane %v230, 6
      %v3349 = vsel %vm3292, %v3346, %v3348
      %v3350 = vrot.slane %v231, 6
      %v3351 = vsel %vm3292, %v3348, %v3350
      %v3352 = vrot.slane %v232, 6
      %v3353 = vsel %vm3292, %v3350, %v3352
      %v3354 = vrot.slane %v233, 6
      %v3355 = vsel %vm3292, %v3352, %v3354
      %v3356 = vrot.slane %v234, 6
      %v3357 = vsel %vm3292, %v3354, %v3356
      %v3358 = vrot.slane %v235, 6
      %v3359 = vsel %vm3292, %v3356, %v3358
      %v3360 = vrot.slane %v236, 6
      %v3361 = vsel %vm3292, %v3358, %v3360
      %v3362 = vrot.slane %v237, 6
      %v3363 = vsel %vm3292, %v3360, %v3362
      %v3364 = vrot.slane %v238, 6
      %v3365 = vsel %vm3292, %v3362, %v3364
      %v3366 = vsel %vm353, %v3295, 0
      %v3368 = vsel %vm353, %v3297, 0
      %v3370 = vsel %vm353, %v3299, 0
      %v3372 = vsel %vm353, %v3301, 0
      %v3374 = vsel %vm353, %v3303, 0
      %v3376 = vsel %vm353, %v3305, 0
      %v3378 = vsel %vm353, %v3307, 0
      %v3380 = vsel %vm353, %v3309, 0
      %v3382 = vsel %vm353, %v3311, 0
      %v3384 = vsel %vm353, %v3313, 0
      %v3386 = vsel %vm353, %v3315, 0
      %v3388 = vsel %vm353, %v3317, 0
      %v3390 = vsel %vm353, %v3319, 0
      %v3392 = vsel %vm353, %v3321, 0
      %v3394 = vsel %vm353, %v3323, 0
      %v3396 = vsel %vm353, %v3325, 0
      %v3398 = vsel %vm353, %v3327, 0
      %v3400 = vsel %vm353, %v3329, 0
      %v3402 = vsel %vm353, %v3331, 0
      %v3404 = vsel %vm353, %v3333, 0
      %v3406 = vsel %vm353, %v3335, 0
      %v3408 = vsel %vm353, %v3337, 0
      %v3410 = vsel %vm353, %v3339, 0
      %v3412 = vsel %vm353, %v3341, 0
      %v3414 = vsel %vm353, %v3343, 0
      %v3416 = vsel %vm353, %v3345, 0
      %v3418 = vsel %vm353, %v3347, 0
      %v3420 = vsel %vm353, %v3349, 0
      %v3422 = vsel %vm353, %v3351, 0
      %v3424 = vsel %vm353, %v3353, 0
      %v3426 = vsel %vm353, %v3355, 0
      %v3428 = vsel %vm353, %v3357, 0
      %v3430 = vsel %vm353, %v3359, 0
      %v3432 = vsel %vm353, %v3361, 0
      %v3434 = vsel %vm353, %v3363, 0
      %v3436 = vsel %vm353, %v3365, 0
      %3438 = vmatprep.subr.mxu0 0.0
      %3439 = vmatpush1.msra.mxu0 0.0
      %3440 = vmatprep.subr.mxu0 0.0
      %3441 = vmatpush1.msra.mxu0 0.0
      %3442 = vmatprep.subr.mxu0 0.0
      %3443 = vmatpush1.msra.mxu0 0.0
      %3444 = vmatprep.subr.mxu0 0.0
      %3445 = vmatpush1.msra.mxu0 0.0
      %3446 = vmatprep.subr.mxu0 0.0
      %3447 = vmatpush1.msra.mxu0 0.0
      %3448 = vmatprep.subr.mxu0 0.0
      %3449 = vmatpush1.msra.mxu0 0.0
      %3450 = vmatprep.subr.mxu0 0.0
      %3451 = vmatpush1.msra.mxu0 0.0
      %3452 = vmatprep.subr.mxu0 0.0
      %3453 = vmatpush1.msra.mxu0 0.0
      %3454 = vmatprep.subr.mxu0 0.0
      %3455 = vmatpush1.msra.mxu0 0.0
      %3456 = vmatprep.subr.mxu0 0.0
      %3457 = vmatpush1.msra.mxu0 0.0
      %3458 = vmatprep.subr.mxu0 0.0
      %3459 = vmatpush1.msra.mxu0 0.0
      %3460 = vmatprep.subr.mxu0 0.0
      %3461 = vmatpush1.msra.mxu0 0.0
      %3462 = vmatprep.subr.mxu0 0.0
      %3463 = vmatpush1.msra.mxu0 0.0
      %3464 = vmatprep.subr.mxu0 0.0
      %3465 = vmatpush1.msra.mxu0 0.0
      %3466 = vmatprep.subr.mxu0 0.0
      %3467 = vmatpush1.msra.mxu0 0.0
      %3468 = vmatprep.subr.mxu0 0.0
      %3469 = vmatpush1.msra.mxu0 %v3291
      %3470 = vmatprep.subr.mxu0 0.0
      %3471 = vmatpush2.msra.mxu0 0.0
      %3472 = vmatprep.subr.mxu0 0.0
      %3473 = vmatpush2.msra.mxu0 0.0
      %3474 = vmatprep.subr.mxu0 0.0
      %3475 = vmatpush2.msra.mxu0 0.0
      %3476 = vmatprep.subr.mxu0 0.0
      %3477 = vmatpush2.msra.mxu0 0.0
      %3478 = vmatprep.subr.mxu0 0.0
      %3479 = vmatpush2.msra.mxu0 0.0
      %3480 = vmatprep.subr.mxu0 0.0
      %3481 = vmatpush2.msra.mxu0 0.0
      %3482 = vmatprep.subr.mxu0 0.0
      %3483 = vmatpush2.msra.mxu0 0.0
      %3484 = vmatprep.subr.mxu0 0.0
      %3485 = vmatpush2.msra.mxu0 0.0
      %3486 = vmatprep.subr.mxu0 0.0
      %3487 = vmatpush2.msra.mxu0 0.0
      %3488 = vmatprep.subr.mxu0 0.0
      %3489 = vmatpush2.msra.mxu0 0.0
      %3490 = vmatprep.subr.mxu0 0.0
      %3491 = vmatpush2.msra.mxu0 0.0
      %3492 = vmatprep.subr.mxu0 0.0
      %3493 = vmatpush2.msra.mxu0 0.0
      %3494 = vmatprep.subr.mxu0 0.0
      %3495 = vmatpush2.msra.mxu0 0.0
      %3496 = vmatprep.subr.mxu0 0.0
      %3497 = vmatpush2.msra.mxu0 0.0
      %3498 = vmatprep.subr.mxu0 0.0
      %3499 = vmatpush2.msra.mxu0 0.0
      %3500 = vmatprep.subr.mxu0 0.0
      %3501 = vmatpush2.msra.mxu0 0.0
      %3502 = vmatprep.mubr.f32.mxu0 0.0
      %3503 = vmatmul.mubr.f32.gmra.mxu0 %v3366
      %v3504 = vpop.f32.mrf.mxu0
      %v3505 = vadd.f32 0.0, %v3504
      %v3506 = vpop.f32.mrf.mxu0
      %3507 = vmatprep.mubr.f32.mxu0 0.0
      %3508 = vmatmul.mubr.f32.gmra.mxu0 %v3368
      %v3509 = vpop.f32.mrf.mxu0
      %v3510 = vadd.f32 0.0, %v3509
      %v3511 = vpop.f32.mrf.mxu0
      %3512 = vmatprep.mubr.f32.mxu0 0.0
      %3513 = vmatmul.mubr.f32.gmra.mxu0 %v3370
      %v3514 = vpop.f32.mrf.mxu0
      %v3515 = vadd.f32 0.0, %v3514
      %v3516 = vpop.f32.mrf.mxu0
      %3517 = vmatprep.mubr.f32.mxu0 0.0
      %3518 = vmatmul.mubr.f32.gmra.mxu0 %v3372
      %v3519 = vpop.f32.mrf.mxu0
      %v3520 = vadd.f32 0.0, %v3519
      %v3521 = vpop.f32.mrf.mxu0
      %3522 = vmatprep.mubr.f32.mxu0 0.0
      %3523 = vmatmul.mubr.f32.gmra.mxu0 %v3374
      %v3524 = vpop.f32.mrf.mxu0
      %v3525 = vadd.f32 0.0, %v3524
      %v3526 = vpop.f32.mrf.mxu0
      %3527 = vmatprep.mubr.f32.mxu0 0.0
      %3528 = vmatmul.mubr.f32.gmra.mxu0 %v3376
      %v3529 = vpop.f32.mrf.mxu0
      %v3530 = vadd.f32 0.0, %v3529
      %v3531 = vpop.f32.mrf.mxu0
      %3532 = vmatprep.mubr.f32.mxu0 0.0
      %3533 = vmatmul.mubr.f32.gmra.mxu0 %v3378
      %v3534 = vpop.f32.mrf.mxu0
      %v3535 = vadd.f32 0.0, %v3534
      %v3536 = vpop.f32.mrf.mxu0
      %3537 = vmatprep.mubr.f32.mxu0 0.0
      %3538 = vmatmul.mubr.f32.gmra.mxu0 %v3380
      %v3539 = vpop.f32.mrf.mxu0
      %v3540 = vadd.f32 0.0, %v3539
      %v3541 = vpop.f32.mrf.mxu0
      %3542 = vmatprep.mubr.f32.mxu0 0.0
      %3543 = vmatmul.mubr.f32.gmra.mxu0 %v3382
      %v3544 = vpop.f32.mrf.mxu0
      %v3545 = vadd.f32 0.0, %v3544
      %v3546 = vpop.f32.mrf.mxu0
      %3547 = vmatprep.mubr.f32.mxu0 0.0
      %3548 = vmatmul.mubr.f32.gmra.mxu0 %v3384
      %v3549 = vpop.f32.mrf.mxu0
      %v3550 = vadd.f32 0.0, %v3549
      %v3551 = vpop.f32.mrf.mxu0
      %3552 = vmatprep.mubr.f32.mxu0 0.0
      %3553 = vmatmul.mubr.f32.gmra.mxu0 %v3386
      %v3554 = vpop.f32.mrf.mxu0
      %v3555 = vadd.f32 0.0, %v3554
      %v3556 = vpop.f32.mrf.mxu0
      %3557 = vmatprep.mubr.f32.mxu0 0.0
      %3558 = vmatmul.mubr.f32.gmra.mxu0 %v3388
      %v3559 = vpop.f32.mrf.mxu0
      %v3560 = vadd.f32 0.0, %v3559
      %v3561 = vpop.f32.mrf.mxu0
      %3562 = vmatprep.mubr.f32.mxu0 0.0
      %3563 = vmatmul.mubr.f32.gmra.mxu0 %v3390
      %v3564 = vpop.f32.mrf.mxu0
      %v3565 = vadd.f32 0.0, %v3564
      %v3566 = vpop.f32.mrf.mxu0
      %3567 = vmatprep.mubr.f32.mxu0 0.0
      %3568 = vmatmul.mubr.f32.gmra.mxu0 %v3392
      %v3569 = vpop.f32.mrf.mxu0
      %v3570 = vadd.f32 0.0, %v3569
      %v3571 = vpop.f32.mrf.mxu0
      %3572 = vmatprep.mubr.f32.mxu0 0.0
      %3573 = vmatmul.mubr.f32.gmra.mxu0 %v3394
      %v3574 = vpop.f32.mrf.mxu0
      %v3575 = vadd.f32 0.0, %v3574
      %v3576 = vpop.f32.mrf.mxu0
      %3577 = vmatprep.mubr.f32.mxu0 0.0
      %3578 = vmatmul.mubr.f32.gmra.mxu0 %v3396
      %v3579 = vpop.f32.mrf.mxu0
      %v3580 = vadd.f32 0.0, %v3579
      %v3581 = vpop.f32.mrf.mxu0
      %3582 = vmatprep.mubr.f32.mxu0 0.0
      %3583 = vmatmul.mubr.f32.gmra.mxu0 %v3398
      %v3584 = vpop.f32.mrf.mxu0
      %v3585 = vadd.f32 0.0, %v3584
      %v3586 = vpop.f32.mrf.mxu0
      %3587 = vmatprep.mubr.f32.mxu0 0.0
      %3588 = vmatmul.mubr.f32.gmra.mxu0 %v3400
      %v3589 = vpop.f32.mrf.mxu0
      %v3590 = vadd.f32 0.0, %v3589
      %v3591 = vpop.f32.mrf.mxu0
      %3592 = vmatprep.mubr.f32.mxu0 0.0
      %3593 = vmatmul.mubr.f32.gmra.mxu0 %v3402
      %v3594 = vpop.f32.mrf.mxu0
      %v3595 = vadd.f32 0.0, %v3594
      %v3596 = vpop.f32.mrf.mxu0
      %3597 = vmatprep.mubr.f32.mxu0 0.0
      %3598 = vmatmul.mubr.f32.gmra.mxu0 %v3404
      %v3599 = vpop.f32.mrf.mxu0
      %v3600 = vadd.f32 0.0, %v3599
      %v3601 = vpop.f32.mrf.mxu0
      %3602 = vmatprep.mubr.f32.mxu0 0.0
      %3603 = vmatmul.mubr.f32.gmra.mxu0 %v3406
      %v3604 = vpop.f32.mrf.mxu0
      %v3605 = vadd.f32 0.0, %v3604
      %v3606 = vpop.f32.mrf.mxu0
      %3607 = vmatprep.mubr.f32.mxu0 0.0
      %3608 = vmatmul.mubr.f32.gmra.mxu0 %v3408
      %v3609 = vpop.f32.mrf.mxu0
      %v3610 = vadd.f32 0.0, %v3609
      %v3611 = vpop.f32.mrf.mxu0
      %3612 = vmatprep.mubr.f32.mxu0 0.0
      %3613 = vmatmul.mubr.f32.gmra.mxu0 %v3410
      %v3614 = vpop.f32.mrf.mxu0
      %v3615 = vadd.f32 0.0, %v3614
      %v3616 = vpop.f32.mrf.mxu0
      %3617 = vmatprep.mubr.f32.mxu0 0.0
      %3618 = vmatmul.mubr.f32.gmra.mxu0 %v3412
      %v3619 = vpop.f32.mrf.mxu0
      %v3620 = vadd.f32 0.0, %v3619
      %v3621 = vpop.f32.mrf.mxu0
      %3622 = vmatprep.mubr.f32.mxu0 0.0
      %3623 = vmatmul.mubr.f32.gmra.mxu0 %v3414
      %v3624 = vpop.f32.mrf.mxu0
      %v3625 = vadd.f32 0.0, %v3624
      %v3626 = vpop.f32.mrf.mxu0
      %3627 = vmatprep.mubr.f32.mxu0 0.0
      %3628 = vmatmul.mubr.f32.gmra.mxu0 %v3416
      %v3629 = vpop.f32.mrf.mxu0
      %v3630 = vadd.f32 0.0, %v3629
      %v3631 = vpop.f32.mrf.mxu0
      %3632 = vmatprep.mubr.f32.mxu0 0.0
      %3633 = vmatmul.mubr.f32.gmra.mxu0 %v3418
      %v3634 = vpop.f32.mrf.mxu0
      %v3635 = vadd.f32 0.0, %v3634
      %v3636 = vpop.f32.mrf.mxu0
      %3637 = vmatprep.mubr.f32.mxu0 0.0
      %3638 = vmatmul.mubr.f32.gmra.mxu0 %v3420
      %v3639 = vpop.f32.mrf.mxu0
      %v3640 = vadd.f32 0.0, %v3639
      %v3641 = vpop.f32.mrf.mxu0
      %3642 = vmatprep.mubr.f32.mxu0 0.0
      %3643 = vmatmul.mubr.f32.gmra.mxu0 %v3422
      %v3644 = vpop.f32.mrf.mxu0
      %v3645 = vadd.f32 0.0, %v3644
      %v3646 = vpop.f32.mrf.mxu0
      %3647 = vmatprep.mubr.f32.mxu0 0.0
      %3648 = vmatmul.mubr.f32.gmra.mxu0 %v3424
      %v3649 = vpop.f32.mrf.mxu0
      %v3650 = vadd.f32 0.0, %v3649
      %v3651 = vpop.f32.mrf.mxu0
      %3652 = vmatprep.mubr.f32.mxu0 0.0
      %3653 = vmatmul.mubr.f32.gmra.mxu0 %v3426
      %v3654 = vpop.f32.mrf.mxu0
      %v3655 = vadd.f32 0.0, %v3654
      %v3656 = vpop.f32.mrf.mxu0
      %3657 = vmatprep.mubr.f32.mxu0 0.0
      %3658 = vmatmul.mubr.f32.gmra.mxu0 %v3428
      %v3659 = vpop.f32.mrf.mxu0
      %v3660 = vadd.f32 0.0, %v3659
      %v3661 = vpop.f32.mrf.mxu0
      %3662 = vmatprep.mubr.f32.mxu0 0.0
      %3663 = vmatmul.mubr.f32.gmra.mxu0 %v3430
      %v3664 = vpop.f32.mrf.mxu0
      %v3665 = vadd.f32 0.0, %v3664
      %v3666 = vpop.f32.mrf.mxu0
      %3667 = vmatprep.mubr.f32.mxu0 0.0
      %3668 = vmatmul.mubr.f32.gmra.mxu0 %v3432
      %v3669 = vpop.f32.mrf.mxu0
      %v3670 = vadd.f32 0.0, %v3669
      %v3671 = vpop.f32.mrf.mxu0
      %3672 = vmatprep.mubr.f32.mxu0 0.0
      %3673 = vmatmul.mubr.f32.gmra.mxu0 %v3434
      %v3674 = vpop.f32.mrf.mxu0
      %v3675 = vadd.f32 0.0, %v3674
      %v3676 = vpop.f32.mrf.mxu0
      %3677 = vmatprep.mubr.f32.mxu0 0.0
      %3678 = vmatmul.mubr.f32.gmra.mxu0 %v3436
      %v3679 = vpop.f32.mrf.mxu0
      %v3680 = vadd.f32 0.0, %v3679
      %v3681 = vpop.f32.mrf.mxu0
      %3682 = vdwg.mxu0
      %v3683 = vadd.f32 %v3254, %v3505
      %v3684 = vadd.f32 %v3255, %v3510
      %v3685 = vadd.f32 %v3256, %v3515
      %v3686 = vadd.f32 %v3257, %v3520
      %v3687 = vadd.f32 %v3258, %v3525
      %v3688 = vadd.f32 %v3259, %v3530
      %v3689 = vadd.f32 %v3260, %v3535
      %v3690 = vadd.f32 %v3261, %v3540
      %v3691 = vadd.f32 %v3262, %v3545
      %v3692 = vadd.f32 %v3263, %v3550
      %v3693 = vadd.f32 %v3264, %v3555
      %v3694 = vadd.f32 %v3265, %v3560
      %v3695 = vadd.f32 %v3266, %v3565
      %v3696 = vadd.f32 %v3267, %v3570
      %v3697 = vadd.f32 %v3268, %v3575
      %v3698 = vadd.f32 %v3269, %v3580
      %v3699 = vadd.f32 %v3270, %v3585
      %v3700 = vadd.f32 %v3271, %v3590
      %v3701 = vadd.f32 %v3272, %v3595
      %v3702 = vadd.f32 %v3273, %v3600
      %v3703 = vadd.f32 %v3274, %v3605
      %v3704 = vadd.f32 %v3275, %v3610
      %v3705 = vadd.f32 %v3276, %v3615
      %v3706 = vadd.f32 %v3277, %v3620
      %v3707 = vadd.f32 %v3278, %v3625
      %v3708 = vadd.f32 %v3279, %v3630
      %v3709 = vadd.f32 %v3280, %v3635
      %v3710 = vadd.f32 %v3281, %v3640
      %v3711 = vadd.f32 %v3282, %v3645
      %v3712 = vadd.f32 %v3283, %v3650
      %v3713 = vadd.f32 %v3284, %v3655
      %v3714 = vadd.f32 %v3285, %v3660
      %v3715 = vadd.f32 %v3286, %v3665
      %v3716 = vadd.f32 %v3287, %v3670
      %v3717 = vadd.f32 %v3288, %v3675
      %v3718 = vadd.f32 %v3289, %v3680
      %v3719 = vld [vmem:[%s2] sm:$0x1]
      %v3721 = vlaneseq
      %v3722 = vshrl.u32 %v3721, 7
      %v3723 = vsub.s32 0, %v3722
      %v3724 = vrot.slane %v3719, %v3723
      %v3726 = vmul.f32 %v3683, %v3724
      %v3727 = vmul.f32 %v3684, %v3724
      %v3728 = vmul.f32 %v3685, %v3724
      %v3729 = vmul.f32 %v3686, %v3724
      %v3730 = vmul.f32 %v3687, %v3724
      %v3731 = vmul.f32 %v3688, %v3724
      %v3732 = vmul.f32 %v3689, %v3724
      %v3733 = vmul.f32 %v3690, %v3724
      %v3734 = vmul.f32 %v3691, %v3724
      %v3735 = vmul.f32 %v3692, %v3724
      %v3736 = vmul.f32 %v3693, %v3724
      %v3737 = vmul.f32 %v3694, %v3724
      %v3738 = vmul.f32 %v3695, %v3724
      %v3739 = vmul.f32 %v3696, %v3724
      %v3740 = vmul.f32 %v3697, %v3724
      %v3741 = vmul.f32 %v3698, %v3724
      %v3742 = vmul.f32 %v3699, %v3724
      %v3743 = vmul.f32 %v3700, %v3724
      %v3744 = vmul.f32 %v3701, %v3724
      %v3745 = vmul.f32 %v3702, %v3724
      %v3746 = vmul.f32 %v3703, %v3724
      %v3747 = vmul.f32 %v3704, %v3724
      %v3748 = vmul.f32 %v3705, %v3724
      %v3749 = vmul.f32 %v3706, %v3724
      %v3750 = vmul.f32 %v3707, %v3724
      %v3751 = vmul.f32 %v3708, %v3724
      %v3752 = vmul.f32 %v3709, %v3724
      %v3753 = vmul.f32 %v3710, %v3724
      %v3754 = vmul.f32 %v3711, %v3724
      %v3755 = vmul.f32 %v3712, %v3724
      %v3756 = vmul.f32 %v3713, %v3724
      %v3757 = vmul.f32 %v3714, %v3724
      %v3758 = vmul.f32 %v3715, %v3724
      %v3759 = vmul.f32 %v3716, %v3724
      %v3760 = vmul.f32 %v3717, %v3724
      %v3761 = vmul.f32 %v3718, %v3724
      %v3762 = vld [vmem:[%s3] sm:$0x1]
      %v3764 = vlaneseq
      %v3765 = vshrl.u32 %v3764, 7
      %v3766 = vsub.s32 0, %v3765
      %v3767 = vrot.slane %v3762, %v3766
      %v3769 = vadd.f32 %v3726, %v3767
      %v3770 = vadd.f32 %v3727, %v3767
      %v3771 = vadd.f32 %v3728, %v3767
      %v3772 = vadd.f32 %v3729, %v3767
      %v3773 = vadd.f32 %v3730, %v3767
      %v3774 = vadd.f32 %v3731, %v3767
      %v3775 = vadd.f32 %v3732, %v3767
      %v3776 = vadd.f32 %v3733, %v3767
      %v3777 = vadd.f32 %v3734, %v3767
      %v3778 = vadd.f32 %v3735, %v3767
      %v3779 = vadd.f32 %v3736, %v3767
      %v3780 = vadd.f32 %v3737, %v3767
      %v3781 = vadd.f32 %v3738, %v3767
      %v3782 = vadd.f32 %v3739, %v3767
      %v3783 = vadd.f32 %v3740, %v3767
      %v3784 = vadd.f32 %v3741, %v3767
      %v3785 = vadd.f32 %v3742, %v3767
      %v3786 = vadd.f32 %v3743, %v3767
      %v3787 = vadd.f32 %v3744, %v3767
      %v3788 = vadd.f32 %v3745, %v3767
      %v3789 = vadd.f32 %v3746, %v3767
      %v3790 = vadd.f32 %v3747, %v3767
      %v3791 = vadd.f32 %v3748, %v3767
      %v3792 = vadd.f32 %v3749, %v3767
      %v3793 = vadd.f32 %v3750, %v3767
      %v3794 = vadd.f32 %v3751, %v3767
      %v3795 = vadd.f32 %v3752, %v3767
      %v3796 = vadd.f32 %v3753, %v3767
      %v3797 = vadd.f32 %v3754, %v3767
      %v3798 = vadd.f32 %v3755, %v3767
      %v3799 = vadd.f32 %v3756, %v3767
      %v3800 = vadd.f32 %v3757, %v3767
      %v3801 = vadd.f32 %v3758, %v3767
      %v3802 = vadd.f32 %v3759, %v3767
      %v3803 = vadd.f32 %v3760, %v3767
      %v3804 = vadd.f32 %v3761, %v3767
      %v3805 = vmax.f32 %v3769, 0.0
      %v3806 = vmax.f32 %v3770, 0.0
      %v3807 = vmax.f32 %v3771, 0.0
      %v3808 = vmax.f32 %v3772, 0.0
      %v3809 = vmax.f32 %v3773, 0.0
      %v3810 = vmax.f32 %v3774, 0.0
      %v3811 = vmax.f32 %v3775, 0.0
      %v3812 = vmax.f32 %v3776, 0.0
      %v3813 = vmax.f32 %v3777, 0.0
      %v3814 = vmax.f32 %v3778, 0.0
      %v3815 = vmax.f32 %v3779, 0.0
      %v3816 = vmax.f32 %v3780, 0.0
      %v3817 = vmax.f32 %v3781, 0.0
      %v3818 = vmax.f32 %v3782, 0.0
      %v3819 = vmax.f32 %v3783, 0.0
      %v3820 = vmax.f32 %v3784, 0.0
      %v3821 = vmax.f32 %v3785, 0.0
      %v3822 = vmax.f32 %v3786, 0.0
      %v3823 = vmax.f32 %v3787, 0.0
      %v3824 = vmax.f32 %v3788, 0.0
      %v3825 = vmax.f32 %v3789, 0.0
      %v3826 = vmax.f32 %v3790, 0.0
      %v3827 = vmax.f32 %v3791, 0.0
      %v3828 = vmax.f32 %v3792, 0.0
      %v3829 = vmax.f32 %v3793, 0.0
      %v3830 = vmax.f32 %v3794, 0.0
      %v3831 = vmax.f32 %v3795, 0.0
      %v3832 = vmax.f32 %v3796, 0.0
      %v3833 = vmax.f32 %v3797, 0.0
      %v3834 = vmax.f32 %v3798, 0.0
      %v3835 = vmax.f32 %v3799, 0.0
      %v3836 = vmax.f32 %v3800, 0.0
      %v3837 = vmax.f32 %v3801, 0.0
      %v3838 = vmax.f32 %v3802, 0.0
      %v3839 = vmax.f32 %v3803, 0.0
      %v3840 = vmax.f32 %v3804, 0.0
      %3841 = vst.msk [vmem:[%s197] sm:$0xff] %vm353, %v3805
      %3842 = vst.msk [vmem:[%s197 + $0x8] sm:$0xff] %vm353, %v3806
      %3843 = vst.msk [vmem:[%s197 + $0x10] sm:$0xff] %vm353, %v3807
      %3844 = vst.msk [vmem:[%s197 + $0x18] sm:$0xff] %vm353, %v3808
      %3845 = vst.msk [vmem:[%s197 + $0x20] sm:$0xff] %vm353, %v3809
      %3846 = vst.msk [vmem:[%s197 + $0x28] sm:$0xff] %vm353, %v3810
      %3847 = vst.msk [vmem:[%s197 + $0x30] sm:$0xff] %vm353, %v3811
      %3848 = vst.msk [vmem:[%s197 + $0x38] sm:$0xff] %vm353, %v3812
      %3849 = vst.msk [vmem:[%s197 + $0x40] sm:$0xff] %vm353, %v3813
      %3850 = vst.msk [vmem:[%s197 + $0x48] sm:$0xff] %vm353, %v3814
      %3851 = vst.msk [vmem:[%s197 + $0x50] sm:$0xff] %vm353, %v3815
      %3852 = vst.msk [vmem:[%s197 + $0x58] sm:$0xff] %vm353, %v3816
      %3853 = vst.msk [vmem:[%s197 + $0x60] sm:$0xff] %vm353, %v3817
      %3854 = vst.msk [vmem:[%s197 + $0x68] sm:$0xff] %vm353, %v3818
      %3855 = vst.msk [vmem:[%s197 + $0x70] sm:$0xff] %vm353, %v3819
      %3856 = vst.msk [vmem:[%s197 + $0x78] sm:$0xff] %vm353, %v3820
      %3857 = vst.msk [vmem:[%s197 + $0x80] sm:$0xff] %vm353, %v3821
      %3858 = vst.msk [vmem:[%s197 + $0x88] sm:$0xff] %vm353, %v3822
      %3859 = vst.msk [vmem:[%s197 + $0x90] sm:$0xff] %vm353, %v3823
      %3860 = vst.msk [vmem:[%s197 + $0x98] sm:$0xff] %vm353, %v3824
      %3861 = vst.msk [vmem:[%s197 + $0xa0] sm:$0xff] %vm353, %v3825
      %3862 = vst.msk [vmem:[%s197 + $0xa8] sm:$0xff] %vm353, %v3826
      %3863 = vst.msk [vmem:[%s197 + $0xb0] sm:$0xff] %vm353, %v3827
      %3864 = vst.msk [vmem:[%s197 + $0xb8] sm:$0xff] %vm353, %v3828
      %3865 = vst.msk [vmem:[%s197 + $0xc0] sm:$0xff] %vm353, %v3829
      %3866 = vst.msk [vmem:[%s197 + $0xc8] sm:$0xff] %vm353, %v3830
      %3867 = vst.msk [vmem:[%s197 + $0xd0] sm:$0xff] %vm353, %v3831
      %3868 = vst.msk [vmem:[%s197 + $0xd8] sm:$0xff] %vm353, %v3832
      %3869 = vst.msk [vmem:[%s197 + $0xe0] sm:$0xff] %vm353, %v3833
      %3870 = vst.msk [vmem:[%s197 + $0xe8] sm:$0xff] %vm353, %v3834
      %3871 = vst.msk [vmem:[%s197 + $0xf0] sm:$0xff] %vm353, %v3835
      %3872 = vst.msk [vmem:[%s197 + $0xf8] sm:$0xff] %vm353, %v3836
      %3873 = vst.msk [vmem:[%s197 + $0x100] sm:$0xff] %vm353, %v3837
      %3874 = vst.msk [vmem:[%s197 + $0x108] sm:$0xff] %vm353, %v3838
      %3875 = vst.msk [vmem:[%s197 + $0x110] sm:$0xff] %vm353, %v3839
      %3876 = vst.msk [vmem:[%s197 + $0x118] sm:$0xff] %vm353, %v3840
      %p3877 = scmp.lt.s32.totalorder %s15, 1
      %s3878 = scalar_select %p3877, %s15, 1
      %s3879 = smul.addr %s3878, 36
      %s3880 = smul.addr %s3879, 8
      %s3881 = scalar_lea.vmem %s4, %s3880
      // Predicated region
      $region37: #{bottleneck_forward.4} parent=35 // pred_check
        %p3882 = pneg %p122
      $region38: #{bottleneck_forward.4} parent=35 // pred_check_branch
        %3884 = sbr.rel (%p3882) target = $region40
      $region39: #{bottleneck_forward.4} parent=35 // pred_region
        _
      $region40: #{bottleneck_forward.4} parent=35 // pred_fallthru
        _
    $region36: #{bottleneck_forward.4} parent=5 // pred_fallthru
      _
    %p3885 = scmp.le.s32.totalorder 2, %s10
    // Predicated region
    $region41: #{bottleneck_forward.4} parent=5 // pred_check
      %p3886 = pneg %p3885
    $region42: #{bottleneck_forward.4} parent=5 // pred_check_branch
      %3888 = sbr.rel (%p3886) target = $region44
    $region43: #{bottleneck_forward.4} parent=5 // pred_region
      %s3889 = ssub.s32 %s10, 2
      // Predicated region
      $region45: #{bottleneck_forward.4} parent=43 // pred_check
        %p3890 = pneg %p128
      $region46: #{bottleneck_forward.4} parent=43 // pred_check_branch
        %3892 = sbr.rel (%p3890) target = $region48
      $region47: #{bottleneck_forward.4} parent=43 // pred_region
        %p3893 = scmp.lt.s32.totalorder %s16, 1
        %s3894 = scalar_select %p3893, %s16, 1
        %s3895 = smul.addr %s3894, 36
        %s3896 = smul.addr %s3895, 8
        %s3897 = scalar_lea.vmem %s4, %s3896
      $region48: #{bottleneck_forward.4} parent=43 // pred_fallthru
        _
    $region44: #{bottleneck_forward.4} parent=5 // pred_fallthru
      _
  $region6: #{bottleneck_forward.4} parent=0 // loop_footer
    %s14 = sadd.s32 1, %s10
  $region7: #{bottleneck_forward.4} parent=0 // loop_footer_branch
    %9 = sbr.rel target = $region3
  $region8: #{bottleneck_forward.4} parent=0 // loop_exit
    _

</llo_original>
